<compile_context>
chip_gen: v5e
topology: v5e:2x2
jax: 0.10.0
libtpu: 0.0.40
codegen_flags: <defaults>
</compile_context>

<pallas_src>
import functools

import numpy as np
import jax
import jax.numpy as jnp
from jax import lax
from jax.experimental import pallas as pl
from jax.experimental.pallas import tpu as pltpu

BN_EPS = 1e-5      # torch.nn.BatchNorm1d default eps
NORM_EPS = 1e-12   # torch.nn.functional.normalize default eps


def _relu(v):
    return jnp.maximum(v, 0.0)


def _icl_fused_kernel(x_ref,
                      wg0_ref, wg1_ref, wg2_ref,
                      wf0_ref, wf1_ref, wf2_ref,
                      out_ref, *, K, N, ks):
    nf = x_ref.shape[1]
    x = x_ref[...]                                                    # (N, nf)

    # ---- positive_matrix_builder, folded k-major: row index = k*N + n ----
    xg = jnp.concatenate([x[:, k:k + ks] for k in range(K)], axis=0)  # (K*N, ks)

    def _complement(k):
        if k == 0:
            return x[:, ks:]
        if k + ks >= nf:
            return x[:, :k]
        return jnp.concatenate([x[:, :k], x[:, k + ks:]], axis=1)

    xf = jnp.concatenate([_complement(k) for k in range(K)], axis=0)  # (K*N, nf-ks)

    # ---- per-sub-vector train-mode BatchNorm1d(K, affine=False) ------------
    # One-pass (sum / sum-of-squares) biased stats per sub-vector k over
    # (batch, out_features).  N == 8 keeps the reshape layout-free.
    def bn_per_k(y):                      # y: (K*N, C) k-major  ->  (K, N, C)
        C = y.shape[-1]
        yb = y.reshape(K, N, C)
        inv_cnt = 1.0 / float(N * C)
        s = jnp.sum(jnp.sum(yb, axis=2, keepdims=True), axis=1, keepdims=True)
        ss = jnp.sum(jnp.sum(yb * yb, axis=2, keepdims=True), axis=1, keepdims=True)
        mu = s * inv_cnt
        var = ss * inv_cnt - mu * mu
        return (yb - mu) * lax.rsqrt(var + BN_EPS)

    def layer(h, w_ref, act):             # Linear(no bias) -> act -> BN, folded over K
        y = act(jnp.dot(h, w_ref[...], preferred_element_type=jnp.float32))
        return bn_per_k(y)                 # (K, N, Cout)

    # enc_g_net: ks -> 50 -> 25 -> rep, activations [ReLU, ReLU, ReLU]
    hg = layer(xg, wg0_ref, _relu).reshape(K * N, -1)
    hg = layer(hg, wg1_ref, _relu).reshape(K * N, -1)
    zg = layer(hg, wg2_ref, _relu)                                    # (K, N, rep)

    # enc_f_net: nf-ks -> 100 -> 50 -> rep, activations [Tanh, ReLU, ReLU]
    hf = layer(xf, wf0_ref, jnp.tanh).reshape(K * N, -1)
    hf = layer(hf, wf1_ref, _relu).reshape(K * N, -1)
    zf = layer(hf, wf2_ref, _relu)                                    # (K, N, rep)

    # Join g/f reps into one 128-lane slab -> single lane-dense store.
    z = jnp.concatenate([zg, zf], axis=-1)                            # (K, N, 2*rep)

    # F.normalize(p=2, dim=1): L2 over K (column-wise independent, so the joint
    # slab is fine).  rsqrt(max(ss, eps^2)) == 1 / max(sqrt(ss), eps) exactly,
    # and runs on the EUP instead of sqrt + divide.
    ss = jnp.sum(z * z, axis=0, keepdims=True)
    out_ref[...] = z * lax.rsqrt(jnp.maximum(ss, NORM_EPS * NORM_EPS))


def icl_net_forward(x, params, *, n_features, kernel_size, rep_dim=64):
    """Pallas implementation of ICLNet.forward. x: (N, n_features) float32.
    Returns (x1, x2) of shape (N, K, rep_dim) each, matching PyTorch."""
    N = x.shape[0]
    K = n_features - kernel_size + 1

    w_names = ("wg0", "wg1", "wg2", "wf0", "wf1", "wf2")
    w_elems = sum(int(np.prod(params[n].shape)) for n in w_names)
    cost = pl.CostEstimate(
        flops=2 * K * N * w_elems,
        transcendentals=K * N * int(params["wf0"].shape[1]),          # tanh layer
        bytes_accessed=4 * (int(x.size) + w_elems + K * N * 2 * rep_dim),
    )

    kern = functools.partial(_icl_fused_kernel, K=K, N=N, ks=kernel_size)
    out = pl.pallas_call(
        kern,
        in_specs=[pl.BlockSpec(memory_space=pltpu.MemorySpace.VMEM)] * 7,
        out_specs=pl.BlockSpec(memory_space=pltpu.MemorySpace.VMEM),
        out_shape=jax.ShapeDtypeStruct((K, N, 2 * rep_dim), jnp.float32),
        cost_estimate=cost,
    )(x, params["wg0"], params["wg1"], params["wg2"],
      params["wf0"], params["wf1"], params["wf2"])

    # Wrapper-side layout glue back to PyTorch's (N, K, rep) and the g/f split.
    out = jnp.transpose(out, (1, 0, 2))                               # (N, K, 2*rep)
    return out[..., :rep_dim], out[..., rep_dim:]


# ----------------------------- host-side helpers -----------------------------

def build_indices(n_features, kernel_size):
    start_idx = np.arange(n_features)[:-kernel_size + 1]
    all_idx = start_idx[:, None] + np.arange(kernel_size)
    all_idx_complement = np.array(
        [np.setdiff1d(np.arange(n_features), row) for row in all_idx])
    return all_idx, all_idx_complement


def init_params(key, n_features, kernel_size, hidden_dims=(100, 50), rep_dim=64):
    """Deterministic synthetic weights (torch.nn.Linear-style uniform init),
    stored as (in_dim, out_dim) so the kernel computes x @ W."""
    nc = n_features - kernel_size
    h0, h1 = hidden_dims
    g0, g1 = int(0.5 * h0), int(0.5 * h1)
    dims = [
        ("wg0", kernel_size, g0), ("wg1", g0, g1), ("wg2", g1, rep_dim),   # enc_g_net
        ("wf0", nc, h0), ("wf1", h0, h1), ("wf2", h1, rep_dim),            # enc_f_net
    ]
    keys = jax.random.split(key, len(dims))
    params = {}
    for (name, din, dout), k in zip(dims, keys):
        bound = 1.0 / np.sqrt(din)
        params[name] = jax.random.uniform(k, (din, dout), jnp.float32, -bound, bound)
    return params


def icl_net_reference(x, params, all_idx, all_idx_c):
    """Pure-JAX reference replicating the PyTorch forward (train-mode BN)."""
    x1 = x[:, all_idx]       # (N, K, ks)
    x2 = x[:, all_idx_c]     # (N, K, nc)

    def mlp(h, ws, acts):
        for w, act in zip(ws, acts):
            y = jnp.einsum("nkc,co->nko", h, w, precision=lax.Precision.HIGHEST)
            y = act(y)
            mu = jnp.mean(y, axis=(0, 2), keepdims=True)
            var = jnp.mean(jnp.square(y - mu), axis=(0, 2), keepdims=True)
            h = (y - mu) / jnp.sqrt(var + BN_EPS)
        return h

    zg = mlp(x1, [params["wg0"], params["wg1"], params["wg2"]],
             [_relu, _relu, _relu])
    zf = mlp(x2, [params["wf0"], params["wf1"], params["wf2"]],
             [jnp.tanh, _relu, _relu])

    def normalize_dim1(z):
        denom = jnp.sqrt(jnp.sum(z * z, axis=1, keepdims=True))
        return z / jnp.maximum(denom, NORM_EPS)

    return normalize_dim1(zg), normalize_dim1(zf)


if __name__ == "__main__":
    n_features, kernel_size, batch = 16, 4, 8   # K = 13, complement dim = 12
    all_idx, all_idx_c = build_indices(n_features, kernel_size)

    key = jax.random.PRNGKey(0)
    kx, kp = jax.random.split(key)
    x = jax.random.normal(kx, (batch, n_features), jnp.float32)
    params = init_params(kp, n_features, kernel_size, hidden_dims=(100, 50), rep_dim=64)

    fwd = jax.jit(functools.partial(icl_net_forward,
                                    n_features=n_features,
                                    kernel_size=kernel_size,
                                    rep_dim=64))
    x1_out, x2_out = fwd(x, params)
    jax.block_until_ready((x1_out, x2_out))

    r1, r2 = icl_net_reference(x, params, all_idx, all_idx_c)
    np.testing.assert_allclose(np.asarray(x1_out), np.asarray(r1), atol=2e-3, rtol=2e-3)
    np.testing.assert_allclose(np.asarray(x2_out), np.asarray(r2), atol=2e-3, rtol=2e-3)

    print("KERNEL_OK")
</pallas_src>

<mosaic_0001>
module attributes {stable_mosaic.version = 11 : i64} {
  func.func @_icl_fused_kernel(%arg0: memref<8x16xf32, #tpu.memory_space<vmem>>, %arg1: memref<4x50xf32, #tpu.memory_space<vmem>>, %arg2: memref<50x25xf32, #tpu.memory_space<vmem>>, %arg3: memref<25x64xf32, #tpu.memory_space<vmem>>, %arg4: memref<12x100xf32, #tpu.memory_space<vmem>>, %arg5: memref<100x50xf32, #tpu.memory_space<vmem>>, %arg6: memref<50x64xf32, #tpu.memory_space<vmem>>, %arg7: memref<13x8x128xf32, #tpu.memory_space<vmem>>) attributes {dimension_semantics = [], scalar_prefetch = 0 : i64, scratch_operands = 0 : i64, tpu.core_type = #tpu.core_type<tc>} {
    %c0 = arith.constant 0 : index
    %c0_0 = arith.constant 0 : index
    %0 = vector.load %arg0[%c0, %c0_0] : memref<8x16xf32, #tpu.memory_space<vmem>>, vector<8x16xf32>
    %1 = vector.extract_strided_slice %0 {offsets = [0, 0], sizes = [8, 4], strides = [1, 1]} : vector<8x16xf32> to vector<8x4xf32>
    %2 = vector.extract_strided_slice %0 {offsets = [0, 1], sizes = [8, 4], strides = [1, 1]} : vector<8x16xf32> to vector<8x4xf32>
    %3 = vector.extract_strided_slice %0 {offsets = [0, 2], sizes = [8, 4], strides = [1, 1]} : vector<8x16xf32> to vector<8x4xf32>
    %4 = vector.extract_strided_slice %0 {offsets = [0, 3], sizes = [8, 4], strides = [1, 1]} : vector<8x16xf32> to vector<8x4xf32>
    %5 = vector.extract_strided_slice %0 {offsets = [0, 4], sizes = [8, 4], strides = [1, 1]} : vector<8x16xf32> to vector<8x4xf32>
    %6 = vector.extract_strided_slice %0 {offsets = [0, 5], sizes = [8, 4], strides = [1, 1]} : vector<8x16xf32> to vector<8x4xf32>
    %7 = vector.extract_strided_slice %0 {offsets = [0, 6], sizes = [8, 4], strides = [1, 1]} : vector<8x16xf32> to vector<8x4xf32>
    %8 = vector.extract_strided_slice %0 {offsets = [0, 7], sizes = [8, 4], strides = [1, 1]} : vector<8x16xf32> to vector<8x4xf32>
    %9 = vector.extract_strided_slice %0 {offsets = [0, 8], sizes = [8, 4], strides = [1, 1]} : vector<8x16xf32> to vector<8x4xf32>
    %10 = vector.extract_strided_slice %0 {offsets = [0, 9], sizes = [8, 4], strides = [1, 1]} : vector<8x16xf32> to vector<8x4xf32>
    %11 = vector.extract_strided_slice %0 {offsets = [0, 10], sizes = [8, 4], strides = [1, 1]} : vector<8x16xf32> to vector<8x4xf32>
    %12 = vector.extract_strided_slice %0 {offsets = [0, 11], sizes = [8, 4], strides = [1, 1]} : vector<8x16xf32> to vector<8x4xf32>
    %13 = vector.extract_strided_slice %0 {offsets = [0, 12], sizes = [8, 4], strides = [1, 1]} : vector<8x16xf32> to vector<8x4xf32>
    %14 = tpu.concatenate %1, %2, %3, %4, %5, %6, %7, %8, %9, %10, %11, %12, %13 in 0 : vector<8x4xf32>, vector<8x4xf32>, vector<8x4xf32>, vector<8x4xf32>, vector<8x4xf32>, vector<8x4xf32>, vector<8x4xf32>, vector<8x4xf32>, vector<8x4xf32>, vector<8x4xf32>, vector<8x4xf32>, vector<8x4xf32>, vector<8x4xf32> -> vector<104x4xf32>
    %15 = vector.extract_strided_slice %0 {offsets = [0, 4], sizes = [8, 12], strides = [1, 1]} : vector<8x16xf32> to vector<8x12xf32>
    %16 = vector.extract_strided_slice %0 {offsets = [0, 0], sizes = [8, 1], strides = [1, 1]} : vector<8x16xf32> to vector<8x1xf32>
    %17 = vector.extract_strided_slice %0 {offsets = [0, 5], sizes = [8, 11], strides = [1, 1]} : vector<8x16xf32> to vector<8x11xf32>
    %18 = tpu.concatenate %16, %17 in 1 : vector<8x1xf32>, vector<8x11xf32> -> vector<8x12xf32>
    %19 = vector.extract_strided_slice %0 {offsets = [0, 0], sizes = [8, 2], strides = [1, 1]} : vector<8x16xf32> to vector<8x2xf32>
    %20 = vector.extract_strided_slice %0 {offsets = [0, 6], sizes = [8, 10], strides = [1, 1]} : vector<8x16xf32> to vector<8x10xf32>
    %21 = tpu.concatenate %19, %20 in 1 : vector<8x2xf32>, vector<8x10xf32> -> vector<8x12xf32>
    %22 = vector.extract_strided_slice %0 {offsets = [0, 0], sizes = [8, 3], strides = [1, 1]} : vector<8x16xf32> to vector<8x3xf32>
    %23 = vector.extract_strided_slice %0 {offsets = [0, 7], sizes = [8, 9], strides = [1, 1]} : vector<8x16xf32> to vector<8x9xf32>
    %24 = tpu.concatenate %22, %23 in 1 : vector<8x3xf32>, vector<8x9xf32> -> vector<8x12xf32>
    %25 = vector.extract_strided_slice %0 {offsets = [0, 0], sizes = [8, 4], strides = [1, 1]} : vector<8x16xf32> to vector<8x4xf32>
    %26 = vector.extract_strided_slice %0 {offsets = [0, 8], sizes = [8, 8], strides = [1, 1]} : vector<8x16xf32> to vector<8x8xf32>
    %27 = tpu.concatenate %25, %26 in 1 : vector<8x4xf32>, vector<8x8xf32> -> vector<8x12xf32>
    %28 = vector.extract_strided_slice %0 {offsets = [0, 0], sizes = [8, 5], strides = [1, 1]} : vector<8x16xf32> to vector<8x5xf32>
    %29 = vector.extract_strided_slice %0 {offsets = [0, 9], sizes = [8, 7], strides = [1, 1]} : vector<8x16xf32> to vector<8x7xf32>
    %30 = tpu.concatenate %28, %29 in 1 : vector<8x5xf32>, vector<8x7xf32> -> vector<8x12xf32>
    %31 = vector.extract_strided_slice %0 {offsets = [0, 0], sizes = [8, 6], strides = [1, 1]} : vector<8x16xf32> to vector<8x6xf32>
    %32 = vector.extract_strided_slice %0 {offsets = [0, 10], sizes = [8, 6], strides = [1, 1]} : vector<8x16xf32> to vector<8x6xf32>
    %33 = tpu.concatenate %31, %32 in 1 : vector<8x6xf32>, vector<8x6xf32> -> vector<8x12xf32>
    %34 = vector.extract_strided_slice %0 {offsets = [0, 0], sizes = [8, 7], strides = [1, 1]} : vector<8x16xf32> to vector<8x7xf32>
    %35 = vector.extract_strided_slice %0 {offsets = [0, 11], sizes = [8, 5], strides = [1, 1]} : vector<8x16xf32> to vector<8x5xf32>
    %36 = tpu.concatenate %34, %35 in 1 : vector<8x7xf32>, vector<8x5xf32> -> vector<8x12xf32>
    %37 = vector.extract_strided_slice %0 {offsets = [0, 0], sizes = [8, 8], strides = [1, 1]} : vector<8x16xf32> to vector<8x8xf32>
    %38 = vector.extract_strided_slice %0 {offsets = [0, 12], sizes = [8, 4], strides = [1, 1]} : vector<8x16xf32> to vector<8x4xf32>
    %39 = tpu.concatenate %37, %38 in 1 : vector<8x8xf32>, vector<8x4xf32> -> vector<8x12xf32>
    %40 = vector.extract_strided_slice %0 {offsets = [0, 0], sizes = [8, 9], strides = [1, 1]} : vector<8x16xf32> to vector<8x9xf32>
    %41 = vector.extract_strided_slice %0 {offsets = [0, 13], sizes = [8, 3], strides = [1, 1]} : vector<8x16xf32> to vector<8x3xf32>
    %42 = tpu.concatenate %40, %41 in 1 : vector<8x9xf32>, vector<8x3xf32> -> vector<8x12xf32>
    %43 = vector.extract_strided_slice %0 {offsets = [0, 0], sizes = [8, 10], strides = [1, 1]} : vector<8x16xf32> to vector<8x10xf32>
    %44 = vector.extract_strided_slice %0 {offsets = [0, 14], sizes = [8, 2], strides = [1, 1]} : vector<8x16xf32> to vector<8x2xf32>
    %45 = tpu.concatenate %43, %44 in 1 : vector<8x10xf32>, vector<8x2xf32> -> vector<8x12xf32>
    %46 = vector.extract_strided_slice %0 {offsets = [0, 0], sizes = [8, 11], strides = [1, 1]} : vector<8x16xf32> to vector<8x11xf32>
    %47 = vector.extract_strided_slice %0 {offsets = [0, 15], sizes = [8, 1], strides = [1, 1]} : vector<8x16xf32> to vector<8x1xf32>
    %48 = tpu.concatenate %46, %47 in 1 : vector<8x11xf32>, vector<8x1xf32> -> vector<8x12xf32>
    %49 = vector.extract_strided_slice %0 {offsets = [0, 0], sizes = [8, 12], strides = [1, 1]} : vector<8x16xf32> to vector<8x12xf32>
    %50 = tpu.concatenate %15, %18, %21, %24, %27, %30, %33, %36, %39, %42, %45, %48, %49 in 0 : vector<8x12xf32>, vector<8x12xf32>, vector<8x12xf32>, vector<8x12xf32>, vector<8x12xf32>, vector<8x12xf32>, vector<8x12xf32>, vector<8x12xf32>, vector<8x12xf32>, vector<8x12xf32>, vector<8x12xf32>, vector<8x12xf32>, vector<8x12xf32> -> vector<104x12xf32>
    %c0_1 = arith.constant 0 : index
    %c0_2 = arith.constant 0 : index
    %51 = vector.load %arg1[%c0_1, %c0_2] : memref<4x50xf32, #tpu.memory_space<vmem>>, vector<4x50xf32>
    %cst = arith.constant dense<0.000000e+00> : vector<104x50xf32>
    %52 = tpu.matmul %14, %51, %cst {dimension_numbers = #tpu.dot_dimension_numbers<[1], [0], [0], [1], [0, 0, 1, 1], [], []>} : vector<104x4xf32>, vector<4x50xf32>, vector<104x50xf32> -> vector<104x50xf32>
    %cst_3 = arith.constant 0.000000e+00 : f32
    %53 = vector.broadcast %cst_3 : f32 to vector<104x50xf32>
    %54 = arith.maximumf %52, %53 : vector<104x50xf32>
    %55 = vector.shape_cast %54 : vector<104x50xf32> to vector<13x8x50xf32>
    %cst_4 = arith.constant dense<0.000000e+00> : vector<13x8xf32>
    %56 = vector.multi_reduction <add>, %55, %cst_4 [2] : vector<13x8x50xf32> to vector<13x8xf32>
    %57 = vector.shape_cast %56 : vector<13x8xf32> to vector<13x8x1xf32>
    %cst_5 = arith.constant dense<0.000000e+00> : vector<13x1xf32>
    %58 = vector.multi_reduction <add>, %57, %cst_5 [1] : vector<13x8x1xf32> to vector<13x1xf32>
    %59 = vector.shape_cast %58 : vector<13x1xf32> to vector<13x1x1xf32>
    %60 = arith.mulf %55, %55 : vector<13x8x50xf32>
    %cst_6 = arith.constant dense<0.000000e+00> : vector<13x8xf32>
    %61 = vector.multi_reduction <add>, %60, %cst_6 [2] : vector<13x8x50xf32> to vector<13x8xf32>
    %62 = vector.shape_cast %61 : vector<13x8xf32> to vector<13x8x1xf32>
    %cst_7 = arith.constant dense<0.000000e+00> : vector<13x1xf32>
    %63 = vector.multi_reduction <add>, %62, %cst_7 [1] : vector<13x8x1xf32> to vector<13x1xf32>
    %64 = vector.shape_cast %63 : vector<13x1xf32> to vector<13x1x1xf32>
    %cst_8 = arith.constant 2.500000e-03 : f32
    %65 = vector.broadcast %cst_8 : f32 to vector<13x1x1xf32>
    %66 = arith.mulf %59, %65 : vector<13x1x1xf32>
    %cst_9 = arith.constant 2.500000e-03 : f32
    %67 = vector.broadcast %cst_9 : f32 to vector<13x1x1xf32>
    %68 = arith.mulf %64, %67 : vector<13x1x1xf32>
    %69 = arith.mulf %66, %66 : vector<13x1x1xf32>
    %70 = arith.subf %68, %69 : vector<13x1x1xf32>
    %71 = vector.broadcast %66 : vector<13x1x1xf32> to vector<13x8x50xf32>
    %72 = arith.subf %55, %71 : vector<13x8x50xf32>
    %cst_10 = arith.constant 9.99999974E-6 : f32
    %73 = vector.broadcast %cst_10 : f32 to vector<13x1x1xf32>
    %74 = arith.addf %70, %73 : vector<13x1x1xf32>
    %75 = math.rsqrt %74 : vector<13x1x1xf32>
    %76 = vector.broadcast %75 : vector<13x1x1xf32> to vector<13x8x50xf32>
    %77 = arith.mulf %72, %76 : vector<13x8x50xf32>
    %78 = vector.shape_cast %77 : vector<13x8x50xf32> to vector<104x50xf32>
    %c0_11 = arith.constant 0 : index
    %c0_12 = arith.constant 0 : index
    %79 = vector.load %arg2[%c0_11, %c0_12] : memref<50x25xf32, #tpu.memory_space<vmem>>, vector<50x25xf32>
    %cst_13 = arith.constant dense<0.000000e+00> : vector<104x25xf32>
    %80 = tpu.matmul %78, %79, %cst_13 {dimension_numbers = #tpu.dot_dimension_numbers<[1], [0], [0], [1], [0, 0, 1, 1], [], []>} : vector<104x50xf32>, vector<50x25xf32>, vector<104x25xf32> -> vector<104x25xf32>
    %cst_14 = arith.constant 0.000000e+00 : f32
    %81 = vector.broadcast %cst_14 : f32 to vector<104x25xf32>
    %82 = arith.maximumf %80, %81 : vector<104x25xf32>
    %83 = vector.shape_cast %82 : vector<104x25xf32> to vector<13x8x25xf32>
    %cst_15 = arith.constant dense<0.000000e+00> : vector<13x8xf32>
    %84 = vector.multi_reduction <add>, %83, %cst_15 [2] : vector<13x8x25xf32> to vector<13x8xf32>
    %85 = vector.shape_cast %84 : vector<13x8xf32> to vector<13x8x1xf32>
    %cst_16 = arith.constant dense<0.000000e+00> : vector<13x1xf32>
    %86 = vector.multi_reduction <add>, %85, %cst_16 [1] : vector<13x8x1xf32> to vector<13x1xf32>
    %87 = vector.shape_cast %86 : vector<13x1xf32> to vector<13x1x1xf32>
    %88 = arith.mulf %83, %83 : vector<13x8x25xf32>
    %cst_17 = arith.constant dense<0.000000e+00> : vector<13x8xf32>
    %89 = vector.multi_reduction <add>, %88, %cst_17 [2] : vector<13x8x25xf32> to vector<13x8xf32>
    %90 = vector.shape_cast %89 : vector<13x8xf32> to vector<13x8x1xf32>
    %cst_18 = arith.constant dense<0.000000e+00> : vector<13x1xf32>
    %91 = vector.multi_reduction <add>, %90, %cst_18 [1] : vector<13x8x1xf32> to vector<13x1xf32>
    %92 = vector.shape_cast %91 : vector<13x1xf32> to vector<13x1x1xf32>
    %cst_19 = arith.constant 5.000000e-03 : f32
    %93 = vector.broadcast %cst_19 : f32 to vector<13x1x1xf32>
    %94 = arith.mulf %87, %93 : vector<13x1x1xf32>
    %cst_20 = arith.constant 5.000000e-03 : f32
    %95 = vector.broadcast %cst_20 : f32 to vector<13x1x1xf32>
    %96 = arith.mulf %92, %95 : vector<13x1x1xf32>
    %97 = arith.mulf %94, %94 : vector<13x1x1xf32>
    %98 = arith.subf %96, %97 : vector<13x1x1xf32>
    %99 = vector.broadcast %94 : vector<13x1x1xf32> to vector<13x8x25xf32>
    %100 = arith.subf %83, %99 : vector<13x8x25xf32>
    %cst_21 = arith.constant 9.99999974E-6 : f32
    %101 = vector.broadcast %cst_21 : f32 to vector<13x1x1xf32>
    %102 = arith.addf %98, %101 : vector<13x1x1xf32>
    %103 = math.rsqrt %102 : vector<13x1x1xf32>
    %104 = vector.broadcast %103 : vector<13x1x1xf32> to vector<13x8x25xf32>
    %105 = arith.mulf %100, %104 : vector<13x8x25xf32>
    %106 = vector.shape_cast %105 : vector<13x8x25xf32> to vector<104x25xf32>
    %c0_22 = arith.constant 0 : index
    %c0_23 = arith.constant 0 : index
    %107 = vector.load %arg3[%c0_22, %c0_23] : memref<25x64xf32, #tpu.memory_space<vmem>>, vector<25x64xf32>
    %cst_24 = arith.constant dense<0.000000e+00> : vector<104x64xf32>
    %108 = tpu.matmul %106, %107, %cst_24 {dimension_numbers = #tpu.dot_dimension_numbers<[1], [0], [0], [1], [0, 0, 1, 1], [], []>} : vector<104x25xf32>, vector<25x64xf32>, vector<104x64xf32> -> vector<104x64xf32>
    %cst_25 = arith.constant 0.000000e+00 : f32
    %109 = vector.broadcast %cst_25 : f32 to vector<104x64xf32>
    %110 = arith.maximumf %108, %109 : vector<104x64xf32>
    %111 = vector.shape_cast %110 : vector<104x64xf32> to vector<13x8x64xf32>
    %cst_26 = arith.constant dense<0.000000e+00> : vector<13x8xf32>
    %112 = vector.multi_reduction <add>, %111, %cst_26 [2] : vector<13x8x64xf32> to vector<13x8xf32>
    %113 = vector.shape_cast %112 : vector<13x8xf32> to vector<13x8x1xf32>
    %cst_27 = arith.constant dense<0.000000e+00> : vector<13x1xf32>
    %114 = vector.multi_reduction <add>, %113, %cst_27 [1] : vector<13x8x1xf32> to vector<13x1xf32>
    %115 = vector.shape_cast %114 : vector<13x1xf32> to vector<13x1x1xf32>
    %116 = arith.mulf %111, %111 : vector<13x8x64xf32>
    %cst_28 = arith.constant dense<0.000000e+00> : vector<13x8xf32>
    %117 = vector.multi_reduction <add>, %116, %cst_28 [2] : vector<13x8x64xf32> to vector<13x8xf32>
    %118 = vector.shape_cast %117 : vector<13x8xf32> to vector<13x8x1xf32>
    %cst_29 = arith.constant dense<0.000000e+00> : vector<13x1xf32>
    %119 = vector.multi_reduction <add>, %118, %cst_29 [1] : vector<13x8x1xf32> to vector<13x1xf32>
    %120 = vector.shape_cast %119 : vector<13x1xf32> to vector<13x1x1xf32>
    %cst_30 = arith.constant 0.001953125 : f32
    %121 = vector.broadcast %cst_30 : f32 to vector<13x1x1xf32>
    %122 = arith.mulf %115, %121 : vector<13x1x1xf32>
    %cst_31 = arith.constant 0.001953125 : f32
    %123 = vector.broadcast %cst_31 : f32 to vector<13x1x1xf32>
    %124 = arith.mulf %120, %123 : vector<13x1x1xf32>
    %125 = arith.mulf %122, %122 : vector<13x1x1xf32>
    %126 = arith.subf %124, %125 : vector<13x1x1xf32>
    %127 = vector.broadcast %122 : vector<13x1x1xf32> to vector<13x8x64xf32>
    %128 = arith.subf %111, %127 : vector<13x8x64xf32>
    %cst_32 = arith.constant 9.99999974E-6 : f32
    %129 = vector.broadcast %cst_32 : f32 to vector<13x1x1xf32>
    %130 = arith.addf %126, %129 : vector<13x1x1xf32>
    %131 = math.rsqrt %130 : vector<13x1x1xf32>
    %132 = vector.broadcast %131 : vector<13x1x1xf32> to vector<13x8x64xf32>
    %133 = arith.mulf %128, %132 : vector<13x8x64xf32>
    %c0_33 = arith.constant 0 : index
    %c0_34 = arith.constant 0 : index
    %134 = vector.load %arg4[%c0_33, %c0_34] : memref<12x100xf32, #tpu.memory_space<vmem>>, vector<12x100xf32>
    %cst_35 = arith.constant dense<0.000000e+00> : vector<104x100xf32>
    %135 = tpu.matmul %50, %134, %cst_35 {dimension_numbers = #tpu.dot_dimension_numbers<[1], [0], [0], [1], [0, 0, 1, 1], [], []>} : vector<104x12xf32>, vector<12x100xf32>, vector<104x100xf32> -> vector<104x100xf32>
    %136 = math.tanh %135 : vector<104x100xf32>
    %137 = vector.shape_cast %136 : vector<104x100xf32> to vector<13x8x100xf32>
    %cst_36 = arith.constant dense<0.000000e+00> : vector<13x8xf32>
    %138 = vector.multi_reduction <add>, %137, %cst_36 [2] : vector<13x8x100xf32> to vector<13x8xf32>
    %139 = vector.shape_cast %138 : vector<13x8xf32> to vector<13x8x1xf32>
    %cst_37 = arith.constant dense<0.000000e+00> : vector<13x1xf32>
    %140 = vector.multi_reduction <add>, %139, %cst_37 [1] : vector<13x8x1xf32> to vector<13x1xf32>
    %141 = vector.shape_cast %140 : vector<13x1xf32> to vector<13x1x1xf32>
    %142 = arith.mulf %137, %137 : vector<13x8x100xf32>
    %cst_38 = arith.constant dense<0.000000e+00> : vector<13x8xf32>
    %143 = vector.multi_reduction <add>, %142, %cst_38 [2] : vector<13x8x100xf32> to vector<13x8xf32>
    %144 = vector.shape_cast %143 : vector<13x8xf32> to vector<13x8x1xf32>
    %cst_39 = arith.constant dense<0.000000e+00> : vector<13x1xf32>
    %145 = vector.multi_reduction <add>, %144, %cst_39 [1] : vector<13x8x1xf32> to vector<13x1xf32>
    %146 = vector.shape_cast %145 : vector<13x1xf32> to vector<13x1x1xf32>
    %cst_40 = arith.constant 1.250000e-03 : f32
    %147 = vector.broadcast %cst_40 : f32 to vector<13x1x1xf32>
    %148 = arith.mulf %141, %147 : vector<13x1x1xf32>
    %cst_41 = arith.constant 1.250000e-03 : f32
    %149 = vector.broadcast %cst_41 : f32 to vector<13x1x1xf32>
    %150 = arith.mulf %146, %149 : vector<13x1x1xf32>
    %151 = arith.mulf %148, %148 : vector<13x1x1xf32>
    %152 = arith.subf %150, %151 : vector<13x1x1xf32>
    %153 = vector.broadcast %148 : vector<13x1x1xf32> to vector<13x8x100xf32>
    %154 = arith.subf %137, %153 : vector<13x8x100xf32>
    %cst_42 = arith.constant 9.99999974E-6 : f32
    %155 = vector.broadcast %cst_42 : f32 to vector<13x1x1xf32>
    %156 = arith.addf %152, %155 : vector<13x1x1xf32>
    %157 = math.rsqrt %156 : vector<13x1x1xf32>
    %158 = vector.broadcast %157 : vector<13x1x1xf32> to vector<13x8x100xf32>
    %159 = arith.mulf %154, %158 : vector<13x8x100xf32>
    %160 = vector.shape_cast %159 : vector<13x8x100xf32> to vector<104x100xf32>
    %c0_43 = arith.constant 0 : index
    %c0_44 = arith.constant 0 : index
    %161 = vector.load %arg5[%c0_43, %c0_44] : memref<100x50xf32, #tpu.memory_space<vmem>>, vector<100x50xf32>
    %cst_45 = arith.constant dense<0.000000e+00> : vector<104x50xf32>
    %162 = tpu.matmul %160, %161, %cst_45 {dimension_numbers = #tpu.dot_dimension_numbers<[1], [0], [0], [1], [0, 0, 1, 1], [], []>} : vector<104x100xf32>, vector<100x50xf32>, vector<104x50xf32> -> vector<104x50xf32>
    %cst_46 = arith.constant 0.000000e+00 : f32
    %163 = vector.broadcast %cst_46 : f32 to vector<104x50xf32>
    %164 = arith.maximumf %162, %163 : vector<104x50xf32>
    %165 = vector.shape_cast %164 : vector<104x50xf32> to vector<13x8x50xf32>
    %cst_47 = arith.constant dense<0.000000e+00> : vector<13x8xf32>
    %166 = vector.multi_reduction <add>, %165, %cst_47 [2] : vector<13x8x50xf32> to vector<13x8xf32>
    %167 = vector.shape_cast %166 : vector<13x8xf32> to vector<13x8x1xf32>
    %cst_48 = arith.constant dense<0.000000e+00> : vector<13x1xf32>
    %168 = vector.multi_reduction <add>, %167, %cst_48 [1] : vector<13x8x1xf32> to vector<13x1xf32>
    %169 = vector.shape_cast %168 : vector<13x1xf32> to vector<13x1x1xf32>
    %170 = arith.mulf %165, %165 : vector<13x8x50xf32>
    %cst_49 = arith.constant dense<0.000000e+00> : vector<13x8xf32>
    %171 = vector.multi_reduction <add>, %170, %cst_49 [2] : vector<13x8x50xf32> to vector<13x8xf32>
    %172 = vector.shape_cast %171 : vector<13x8xf32> to vector<13x8x1xf32>
    %cst_50 = arith.constant dense<0.000000e+00> : vector<13x1xf32>
    %173 = vector.multi_reduction <add>, %172, %cst_50 [1] : vector<13x8x1xf32> to vector<13x1xf32>
    %174 = vector.shape_cast %173 : vector<13x1xf32> to vector<13x1x1xf32>
    %cst_51 = arith.constant 2.500000e-03 : f32
    %175 = vector.broadcast %cst_51 : f32 to vector<13x1x1xf32>
    %176 = arith.mulf %169, %175 : vector<13x1x1xf32>
    %cst_52 = arith.constant 2.500000e-03 : f32
    %177 = vector.broadcast %cst_52 : f32 to vector<13x1x1xf32>
    %178 = arith.mulf %174, %177 : vector<13x1x1xf32>
    %179 = arith.mulf %176, %176 : vector<13x1x1xf32>
    %180 = arith.subf %178, %179 : vector<13x1x1xf32>
    %181 = vector.broadcast %176 : vector<13x1x1xf32> to vector<13x8x50xf32>
    %182 = arith.subf %165, %181 : vector<13x8x50xf32>
    %cst_53 = arith.constant 9.99999974E-6 : f32
    %183 = vector.broadcast %cst_53 : f32 to vector<13x1x1xf32>
    %184 = arith.addf %180, %183 : vector<13x1x1xf32>
    %185 = math.rsqrt %184 : vector<13x1x1xf32>
    %186 = vector.broadcast %185 : vector<13x1x1xf32> to vector<13x8x50xf32>
    %187 = arith.mulf %182, %186 : vector<13x8x50xf32>
    %188 = vector.shape_cast %187 : vector<13x8x50xf32> to vector<104x50xf32>
    %c0_54 = arith.constant 0 : index
    %c0_55 = arith.constant 0 : index
    %189 = vector.load %arg6[%c0_54, %c0_55] : memref<50x64xf32, #tpu.memory_space<vmem>>, vector<50x64xf32>
    %cst_56 = arith.constant dense<0.000000e+00> : vector<104x64xf32>
    %190 = tpu.matmul %188, %189, %cst_56 {dimension_numbers = #tpu.dot_dimension_numbers<[1], [0], [0], [1], [0, 0, 1, 1], [], []>} : vector<104x50xf32>, vector<50x64xf32>, vector<104x64xf32> -> vector<104x64xf32>
    %cst_57 = arith.constant 0.000000e+00 : f32
    %191 = vector.broadcast %cst_57 : f32 to vector<104x64xf32>
    %192 = arith.maximumf %190, %191 : vector<104x64xf32>
    %193 = vector.shape_cast %192 : vector<104x64xf32> to vector<13x8x64xf32>
    %cst_58 = arith.constant dense<0.000000e+00> : vector<13x8xf32>
    %194 = vector.multi_reduction <add>, %193, %cst_58 [2] : vector<13x8x64xf32> to vector<13x8xf32>
    %195 = vector.shape_cast %194 : vector<13x8xf32> to vector<13x8x1xf32>
    %cst_59 = arith.constant dense<0.000000e+00> : vector<13x1xf32>
    %196 = vector.multi_reduction <add>, %195, %cst_59 [1] : vector<13x8x1xf32> to vector<13x1xf32>
    %197 = vector.shape_cast %196 : vector<13x1xf32> to vector<13x1x1xf32>
    %198 = arith.mulf %193, %193 : vector<13x8x64xf32>
    %cst_60 = arith.constant dense<0.000000e+00> : vector<13x8xf32>
    %199 = vector.multi_reduction <add>, %198, %cst_60 [2] : vector<13x8x64xf32> to vector<13x8xf32>
    %200 = vector.shape_cast %199 : vector<13x8xf32> to vector<13x8x1xf32>
    %cst_61 = arith.constant dense<0.000000e+00> : vector<13x1xf32>
    %201 = vector.multi_reduction <add>, %200, %cst_61 [1] : vector<13x8x1xf32> to vector<13x1xf32>
    %202 = vector.shape_cast %201 : vector<13x1xf32> to vector<13x1x1xf32>
    %cst_62 = arith.constant 0.001953125 : f32
    %203 = vector.broadcast %cst_62 : f32 to vector<13x1x1xf32>
    %204 = arith.mulf %197, %203 : vector<13x1x1xf32>
    %cst_63 = arith.constant 0.001953125 : f32
    %205 = vector.broadcast %cst_63 : f32 to vector<13x1x1xf32>
    %206 = arith.mulf %202, %205 : vector<13x1x1xf32>
    %207 = arith.mulf %204, %204 : vector<13x1x1xf32>
    %208 = arith.subf %206, %207 : vector<13x1x1xf32>
    %209 = vector.broadcast %204 : vector<13x1x1xf32> to vector<13x8x64xf32>
    %210 = arith.subf %193, %209 : vector<13x8x64xf32>
    %cst_64 = arith.constant 9.99999974E-6 : f32
    %211 = vector.broadcast %cst_64 : f32 to vector<13x1x1xf32>
    %212 = arith.addf %208, %211 : vector<13x1x1xf32>
    %213 = math.rsqrt %212 : vector<13x1x1xf32>
    %214 = vector.broadcast %213 : vector<13x1x1xf32> to vector<13x8x64xf32>
    %215 = arith.mulf %210, %214 : vector<13x8x64xf32>
    %216 = tpu.concatenate %133, %215 in 2 : vector<13x8x64xf32>, vector<13x8x64xf32> -> vector<13x8x128xf32>
    %217 = arith.mulf %216, %216 : vector<13x8x128xf32>
    %cst_65 = arith.constant dense<0.000000e+00> : vector<8x128xf32>
    %218 = vector.multi_reduction <add>, %217, %cst_65 [0] : vector<13x8x128xf32> to vector<8x128xf32>
    %219 = vector.shape_cast %218 : vector<8x128xf32> to vector<1x8x128xf32>
    %cst_66 = arith.constant 1.000000e-24 : f32
    %220 = vector.broadcast %cst_66 : f32 to vector<1x8x128xf32>
    %221 = arith.maximumf %219, %220 : vector<1x8x128xf32>
    %222 = math.rsqrt %221 : vector<1x8x128xf32>
    %223 = vector.broadcast %222 : vector<1x8x128xf32> to vector<13x8x128xf32>
    %224 = arith.mulf %216, %223 : vector<13x8x128xf32>
    %c0_67 = arith.constant 0 : index
    %c0_68 = arith.constant 0 : index
    %c0_69 = arith.constant 0 : index
    %225 = vector.load %arg7[%c0_67, %c0_68, %c0_69] : memref<13x8x128xf32, #tpu.memory_space<vmem>>, vector<13x8x128xf32>
    tpu.vector_store %arg7[%c0_67, %c0_68, %c0_69], %224 {strides = array<i32>} : memref<13x8x128xf32, #tpu.memory_space<vmem>>, vector<13x8x128xf32>,
    return
  }
}

</mosaic_0001>

<llo_original>
// kernel: icl_net_forward.1
$region0: #{icl_net_forward.1}
  #allocation0 [shape = 'u32[]', space=smem, size = 0x4, offset = 0x4, fixed_abs, tag = 'smem constant byte address 0x4 - core index']
  #allocation1 [shape = 'u32[72,128]{1,0:T(1,128)}', space=vmem, size = 0x9000, scoped, tag = 'internal scratch']
  %s0 = inlined_call_operand.vmem [shape: f32[8,16], index: 0, kind: input, shape index: {}]
  %s1 = inlined_call_operand.vmem [shape: f32[4,50], index: 1, kind: input, shape index: {}]
  %s2 = inlined_call_operand.vmem [shape: f32[50,25], index: 2, kind: input, shape index: {}]
  %s3 = inlined_call_operand.vmem [shape: f32[25,64], index: 3, kind: input, shape index: {}]
  %s4 = inlined_call_operand.vmem [shape: f32[12,100], index: 4, kind: input, shape index: {}]
  %s5 = inlined_call_operand.vmem [shape: f32[100,50], index: 5, kind: input, shape index: {}]
  %s6 = inlined_call_operand.vmem [shape: f32[50,64], index: 6, kind: input, shape index: {}]
  %s7 = inlined_call_operand.vmem [shape: f32[13,8,128], index: 7, kind: output, shape index: {}]
  %s8 = sld [smem:[#allocation0]]
  $region38: #{icl_net_forward.1} parent=0
    _
  %s10 = ssub.s32 1, %s8
  %s11 = scalar_select 0, %s10, %s8
  // Predicated region
  $region2: #{icl_net_forward.1} parent=0 // pred_check
    _
  $region3: #{icl_net_forward.1} parent=0 // pred_check_branch
    %13 = sbr.rel (0) target = $region5
  $region4: #{icl_net_forward.1} parent=0 // pred_region
    _
  $region5: #{icl_net_forward.1} parent=0 // pred_fallthru
    _
  // Predicated region
  $region6: #{icl_net_forward.1} parent=0 // pred_check
    _
  $region7: #{icl_net_forward.1} parent=0 // pred_check_branch
    %15 = sbr.rel (0) target = $region9
  $region8: #{icl_net_forward.1} parent=0 // pred_region
    _
  $region9: #{icl_net_forward.1} parent=0 // pred_fallthru
    _
  // Predicated region
  $region10: #{icl_net_forward.1} parent=0 // pred_check
    _
  $region11: #{icl_net_forward.1} parent=0 // pred_check_branch
    %17 = sbr.rel (0) target = $region13
  $region12: #{icl_net_forward.1} parent=0 // pred_region
    _
  $region13: #{icl_net_forward.1} parent=0 // pred_fallthru
    _
  // Predicated region
  $region14: #{icl_net_forward.1} parent=0 // pred_check
    _
  $region15: #{icl_net_forward.1} parent=0 // pred_check_branch
    %19 = sbr.rel (0) target = $region17
  $region16: #{icl_net_forward.1} parent=0 // pred_region
    _
  $region17: #{icl_net_forward.1} parent=0 // pred_fallthru
    _
  // Predicated region
  $region18: #{icl_net_forward.1} parent=0 // pred_check
    _
  $region19: #{icl_net_forward.1} parent=0 // pred_check_branch
    %21 = sbr.rel (0) target = $region21
  $region20: #{icl_net_forward.1} parent=0 // pred_region
    _
  $region21: #{icl_net_forward.1} parent=0 // pred_fallthru
    _
  // Predicated region
  $region22: #{icl_net_forward.1} parent=0 // pred_check
    _
  $region23: #{icl_net_forward.1} parent=0 // pred_check_branch
    %23 = sbr.rel (0) target = $region25
  $region24: #{icl_net_forward.1} parent=0 // pred_region
    _
  $region25: #{icl_net_forward.1} parent=0 // pred_fallthru
    _
  // Predicated region
  $region26: #{icl_net_forward.1} parent=0 // pred_check
    _
  $region27: #{icl_net_forward.1} parent=0 // pred_check_branch
    %25 = sbr.rel (0) target = $region29
  $region28: #{icl_net_forward.1} parent=0 // pred_region
    _
  $region29: #{icl_net_forward.1} parent=0 // pred_fallthru
    _
  %v26 = vld [vmem:[%s0] sm:$0xff]
  %28 = vrot.lane.b32.xlu0 %v26, 127
  %v29 = vpop.permute.xlu0 %28
  %30 = vrot.lane.b32.xlu0 %v26, 126
  %v31 = vpop.permute.xlu0 %30
  %32 = vrot.lane.b32.xlu0 %v26, 125
  %v33 = vpop.permute.xlu0 %32
  %34 = vrot.lane.b32.xlu0 %v26, 124
  %v35 = vpop.permute.xlu0 %34
  %36 = vrot.lane.b32.xlu0 %v26, 123
  %v37 = vpop.permute.xlu0 %36
  %38 = vrot.lane.b32.xlu0 %v26, 122
  %v39 = vpop.permute.xlu0 %38
  %40 = vrot.lane.b32.xlu0 %v26, 121
  %v41 = vpop.permute.xlu0 %40
  %42 = vrot.lane.b32.xlu0 %v26, 120
  %v43 = vpop.permute.xlu0 %42
  %44 = vrot.lane.b32.xlu0 %v26, 119
  %v45 = vpop.permute.xlu0 %44
  %46 = vrot.lane.b32.xlu0 %v26, 118
  %v47 = vpop.permute.xlu0 %46
  %48 = vrot.lane.b32.xlu0 %v26, 117
  %v49 = vpop.permute.xlu0 %48
  %50 = vrot.lane.b32.xlu0 %v26, 116
  %v51 = vpop.permute.xlu0 %50
  %vm53 = vcmask 7168
  %v54 = vsel %vm53, %v26, %v35
  %vm55 = vcmask 15360
  %v56 = vsel %vm55, %v26, %v35
  %vm57 = vcmask 23552
  %v58 = vsel %vm57, %v26, %v35
  %vm59 = vcmask 31744
  %v60 = vsel %vm59, %v26, %v35
  %vm61 = vcmask 39936
  %v62 = vsel %vm61, %v26, %v35
  %vm63 = vcmask 48128
  %v64 = vsel %vm63, %v26, %v35
  %vm65 = vcmask 56320
  %v66 = vsel %vm65, %v26, %v35
  %vm67 = vcmask 64512
  %v68 = vsel %vm67, %v26, %v35
  %vm69 = vcmask 72704
  %v70 = vsel %vm69, %v26, %v35
  %vm71 = vcmask 80896
  %v72 = vsel %vm71, %v26, %v35
  %vm73 = vcmask 89088
  %v74 = vsel %vm73, %v26, %v35
  %76 = vrot.lane.b32.xlu0 %v54, 4
  %v77 = vpop.permute.xlu0 %76
  %79 = vrot.lane.b32.xlu0 %v56, 4
  %v80 = vpop.permute.xlu0 %79
  %82 = vrot.lane.b32.xlu0 %v58, 4
  %v83 = vpop.permute.xlu0 %82
  %85 = vrot.lane.b32.xlu0 %v60, 4
  %v86 = vpop.permute.xlu0 %85
  %88 = vrot.lane.b32.xlu0 %v62, 4
  %v89 = vpop.permute.xlu0 %88
  %91 = vrot.lane.b32.xlu0 %v64, 4
  %v92 = vpop.permute.xlu0 %91
  %94 = vrot.lane.b32.xlu0 %v66, 4
  %v95 = vpop.permute.xlu0 %94
  %97 = vrot.lane.b32.xlu0 %v68, 4
  %v98 = vpop.permute.xlu0 %97
  %100 = vrot.lane.b32.xlu0 %v70, 4
  %v101 = vpop.permute.xlu0 %100
  %103 = vrot.lane.b32.xlu0 %v72, 4
  %v104 = vpop.permute.xlu0 %103
  %106 = vrot.lane.b32.xlu0 %v74, 4
  %v107 = vpop.permute.xlu0 %106
  %108 = vrot.lane.b32.xlu0 %v26, 4
  %v109 = vpop.permute.xlu0 %108
  %v110 = vld [vmem:[%s1] sm:$0xf]
  %v111 = vsel %vm59, %v26, 0
  %v113 = vsel %vm59, %v29, 0
  %v115 = vsel %vm59, %v31, 0
  %v117 = vsel %vm59, %v33, 0
  %v119 = vsel %vm59, %v35, 0
  %v121 = vsel %vm59, %v37, 0
  %v123 = vsel %vm59, %v39, 0
  %v125 = vsel %vm59, %v41, 0
  %v127 = vsel %vm59, %v43, 0
  %v129 = vsel %vm59, %v45, 0
  %v131 = vsel %vm59, %v47, 0
  %v133 = vsel %vm59, %v49, 0
  %v135 = vsel %vm59, %v51, 0
  %vm137 = vcmask 1043456
  %v139 = vsel %vm137, %v110, 0
  %141 = vmatpush.msra.mxu0 0.0
  %142 = vmatpush.msra.mxu0 0.0
  %143 = vmatpush.msra.mxu0 0.0
  %144 = vmatpush.msra.mxu0 0.0
  %145 = vmatpush.msra.mxu0 0.0
  %146 = vmatpush.msra.mxu0 0.0
  %147 = vmatpush.msra.mxu0 0.0
  %148 = vmatpush.msra.mxu0 0.0
  %149 = vmatpush.msra.mxu0 0.0
  %150 = vmatpush.msra.mxu0 0.0
  %151 = vmatpush.msra.mxu0 0.0
  %152 = vmatpush.msra.mxu0 0.0
  %153 = vmatpush.msra.mxu0 0.0
  %154 = vmatpush.msra.mxu0 0.0
  %155 = vmatpush.msra.mxu0 0.0
  %156 = vmatpush.msra.mxu0 %v139
  %157 = vmatmul.f32.gmra.mxu0 %v111
  %v158 = vpop.f32.mrf.mxu0
  %v159 = vadd.f32 0.0, %v158
  %160 = vmatmul.f32.gmra.mxu0 %v113
  %v161 = vpop.f32.mrf.mxu0
  %v162 = vadd.f32 0.0, %v161
  %163 = vmatmul.f32.gmra.mxu0 %v115
  %v164 = vpop.f32.mrf.mxu0
  %v165 = vadd.f32 0.0, %v164
  %166 = vmatmul.f32.gmra.mxu0 %v117
  %v167 = vpop.f32.mrf.mxu0
  %v168 = vadd.f32 0.0, %v167
  %169 = vmatmul.f32.gmra.mxu0 %v119
  %v170 = vpop.f32.mrf.mxu0
  %v171 = vadd.f32 0.0, %v170
  %172 = vmatmul.f32.gmra.mxu0 %v121
  %v173 = vpop.f32.mrf.mxu0
  %v174 = vadd.f32 0.0, %v173
  %175 = vmatmul.f32.gmra.mxu0 %v123
  %v176 = vpop.f32.mrf.mxu0
  %v177 = vadd.f32 0.0, %v176
  %178 = vmatmul.f32.gmra.mxu0 %v125
  %v179 = vpop.f32.mrf.mxu0
  %v180 = vadd.f32 0.0, %v179
  %181 = vmatmul.f32.gmra.mxu0 %v127
  %v182 = vpop.f32.mrf.mxu0
  %v183 = vadd.f32 0.0, %v182
  %184 = vmatmul.f32.gmra.mxu0 %v129
  %v185 = vpop.f32.mrf.mxu0
  %v186 = vadd.f32 0.0, %v185
  %187 = vmatmul.f32.gmra.mxu0 %v131
  %v188 = vpop.f32.mrf.mxu0
  %v189 = vadd.f32 0.0, %v188
  %190 = vmatmul.f32.gmra.mxu0 %v133
  %v191 = vpop.f32.mrf.mxu0
  %v192 = vadd.f32 0.0, %v191
  %193 = vmatmul.f32.gmra.mxu0 %v135
  %v194 = vpop.f32.mrf.mxu0
  %v195 = vadd.f32 0.0, %v194
  %196 = vdwg.mxu0
  %v197 = vmax.f32 %v159, 0.0
  %v198 = vmax.f32 %v162, 0.0
  %v199 = vmax.f32 %v165, 0.0
  %v200 = vmax.f32 %v168, 0.0
  %v201 = vmax.f32 %v171, 0.0
  %v202 = vmax.f32 %v174, 0.0
  %v203 = vmax.f32 %v177, 0.0
  %v204 = vmax.f32 %v180, 0.0
  %v205 = vmax.f32 %v183, 0.0
  %v206 = vmax.f32 %v186, 0.0
  %v207 = vmax.f32 %v189, 0.0
  %v208 = vmax.f32 %v192, 0.0
  %v209 = vmax.f32 %v195, 0.0
  %vm210 = vcmask 408576
  %v211 = vsel %vm210, %v197, 0.0
  %212 = vadd.xlane.f32.xlu0 %v211
  %v213 = vpop.xlane.xlu0 %212
  %v214 = vsel %vm210, %v198, 0.0
  %215 = vadd.xlane.f32.xlu0 %v214
  %v216 = vpop.xlane.xlu0 %215
  %v217 = vsel %vm210, %v199, 0.0
  %218 = vadd.xlane.f32.xlu0 %v217
  %v219 = vpop.xlane.xlu0 %218
  %v220 = vsel %vm210, %v200, 0.0
  %221 = vadd.xlane.f32.xlu0 %v220
  %v222 = vpop.xlane.xlu0 %221
  %v223 = vsel %vm210, %v201, 0.0
  %224 = vadd.xlane.f32.xlu0 %v223
  %v225 = vpop.xlane.xlu0 %224
  %v226 = vsel %vm210, %v202, 0.0
  %227 = vadd.xlane.f32.xlu0 %v226
  %v228 = vpop.xlane.xlu0 %227
  %v229 = vsel %vm210, %v203, 0.0
  %230 = vadd.xlane.f32.xlu0 %v229
  %v231 = vpop.xlane.xlu0 %230
  %v232 = vsel %vm210, %v204, 0.0
  %233 = vadd.xlane.f32.xlu0 %v232
  %v234 = vpop.xlane.xlu0 %233
  %v235 = vsel %vm210, %v205, 0.0
  %236 = vadd.xlane.f32.xlu0 %v235
  %v237 = vpop.xlane.xlu0 %236
  %v238 = vsel %vm210, %v206, 0.0
  %239 = vadd.xlane.f32.xlu0 %v238
  %v240 = vpop.xlane.xlu0 %239
  %v241 = vsel %vm210, %v207, 0.0
  %242 = vadd.xlane.f32.xlu0 %v241
  %v243 = vpop.xlane.xlu0 %242
  %v244 = vsel %vm210, %v208, 0.0
  %245 = vadd.xlane.f32.xlu0 %v244
  %v246 = vpop.xlane.xlu0 %245
  %v247 = vsel %vm210, %v209, 0.0
  %248 = vadd.xlane.f32.xlu0 %v247
  %v249 = vpop.xlane.xlu0 %248
  %v250 = vrot.slane %v213, 4
  %v251 = vadd.f32 %v213, %v250
  %v252 = vrot.slane %v251, 2
  %v253 = vadd.f32 %v251, %v252
  %v254 = vrot.slane %v253, 1
  %v255 = vadd.f32 %v253, %v254
  %v256 = vrot.slane %v216, 4
  %v257 = vadd.f32 %v216, %v256
  %v258 = vrot.slane %v257, 2
  %v259 = vadd.f32 %v257, %v258
  %v260 = vrot.slane %v259, 1
  %v261 = vadd.f32 %v259, %v260
  %v262 = vrot.slane %v219, 4
  %v263 = vadd.f32 %v219, %v262
  %v264 = vrot.slane %v263, 2
  %v265 = vadd.f32 %v263, %v264
  %v266 = vrot.slane %v265, 1
  %v267 = vadd.f32 %v265, %v266
  %v268 = vrot.slane %v222, 4
  %v269 = vadd.f32 %v222, %v268
  %v270 = vrot.slane %v269, 2
  %v271 = vadd.f32 %v269, %v270
  %v272 = vrot.slane %v271, 1
  %v273 = vadd.f32 %v271, %v272
  %v274 = vrot.slane %v225, 4
  %v275 = vadd.f32 %v225, %v274
  %v276 = vrot.slane %v275, 2
  %v277 = vadd.f32 %v275, %v276
  %v278 = vrot.slane %v277, 1
  %v279 = vadd.f32 %v277, %v278
  %v280 = vrot.slane %v228, 4
  %v281 = vadd.f32 %v228, %v280
  %v282 = vrot.slane %v281, 2
  %v283 = vadd.f32 %v281, %v282
  %v284 = vrot.slane %v283, 1
  %v285 = vadd.f32 %v283, %v284
  %v286 = vrot.slane %v231, 4
  %v287 = vadd.f32 %v231, %v286
  %v288 = vrot.slane %v287, 2
  %v289 = vadd.f32 %v287, %v288
  %v290 = vrot.slane %v289, 1
  %v291 = vadd.f32 %v289, %v290
  %v292 = vrot.slane %v234, 4
  %v293 = vadd.f32 %v234, %v292
  %v294 = vrot.slane %v293, 2
  %v295 = vadd.f32 %v293, %v294
  %v296 = vrot.slane %v295, 1
  %v297 = vadd.f32 %v295, %v296
  %v298 = vrot.slane %v237, 4
  %v299 = vadd.f32 %v237, %v298
  %v300 = vrot.slane %v299, 2
  %v301 = vadd.f32 %v299, %v300
  %v302 = vrot.slane %v301, 1
  %v303 = vadd.f32 %v301, %v302
  %v304 = vrot.slane %v240, 4
  %v305 = vadd.f32 %v240, %v304
  %v306 = vrot.slane %v305, 2
  %v307 = vadd.f32 %v305, %v306
  %v308 = vrot.slane %v307, 1
  %v309 = vadd.f32 %v307, %v308
  %v310 = vrot.slane %v243, 4
  %v311 = vadd.f32 %v243, %v310
  %v312 = vrot.slane %v311, 2
  %v313 = vadd.f32 %v311, %v312
  %v314 = vrot.slane %v313, 1
  %v315 = vadd.f32 %v313, %v314
  %v316 = vrot.slane %v246, 4
  %v317 = vadd.f32 %v246, %v316
  %v318 = vrot.slane %v317, 2
  %v319 = vadd.f32 %v317, %v318
  %v320 = vrot.slane %v319, 1
  %v321 = vadd.f32 %v319, %v320
  %v322 = vrot.slane %v249, 4
  %v323 = vadd.f32 %v249, %v322
  %v324 = vrot.slane %v323, 2
  %v325 = vadd.f32 %v323, %v324
  %v326 = vrot.slane %v325, 1
  %v327 = vadd.f32 %v325, %v326
  %v328 = vmul.f32 %v197, %v197
  %v329 = vmul.f32 %v198, %v198
  %v330 = vmul.f32 %v199, %v199
  %v331 = vmul.f32 %v200, %v200
  %v332 = vmul.f32 %v201, %v201
  %v333 = vmul.f32 %v202, %v202
  %v334 = vmul.f32 %v203, %v203
  %v335 = vmul.f32 %v204, %v204
  %v336 = vmul.f32 %v205, %v205
  %v337 = vmul.f32 %v206, %v206
  %v338 = vmul.f32 %v207, %v207
  %v339 = vmul.f32 %v208, %v208
  %v340 = vmul.f32 %v209, %v209
  %v341 = vsel %vm210, %v328, 0.0
  %342 = vadd.xlane.f32.xlu0 %v341
  %v343 = vpop.xlane.xlu0 %342
  %v344 = vsel %vm210, %v329, 0.0
  %345 = vadd.xlane.f32.xlu0 %v344
  %v346 = vpop.xlane.xlu0 %345
  %v347 = vsel %vm210, %v330, 0.0
  %348 = vadd.xlane.f32.xlu0 %v347
  %v349 = vpop.xlane.xlu0 %348
  %v350 = vsel %vm210, %v331, 0.0
  %351 = vadd.xlane.f32.xlu0 %v350
  %v352 = vpop.xlane.xlu0 %351
  %v353 = vsel %vm210, %v332, 0.0
  %354 = vadd.xlane.f32.xlu0 %v353
  %v355 = vpop.xlane.xlu0 %354
  %v356 = vsel %vm210, %v333, 0.0
  %357 = vadd.xlane.f32.xlu0 %v356
  %v358 = vpop.xlane.xlu0 %357
  %v359 = vsel %vm210, %v334, 0.0
  %360 = vadd.xlane.f32.xlu0 %v359
  %v361 = vpop.xlane.xlu0 %360
  %v362 = vsel %vm210, %v335, 0.0
  %363 = vadd.xlane.f32.xlu0 %v362
  %v364 = vpop.xlane.xlu0 %363
  %v365 = vsel %vm210, %v336, 0.0
  %366 = vadd.xlane.f32.xlu0 %v365
  %v367 = vpop.xlane.xlu0 %366
  %v368 = vsel %vm210, %v337, 0.0
  %369 = vadd.xlane.f32.xlu0 %v368
  %v370 = vpop.xlane.xlu0 %369
  %v371 = vsel %vm210, %v338, 0.0
  %372 = vadd.xlane.f32.xlu0 %v371
  %v373 = vpop.xlane.xlu0 %372
  %v374 = vsel %vm210, %v339, 0.0
  %375 = vadd.xlane.f32.xlu0 %v374
  %v376 = vpop.xlane.xlu0 %375
  %v377 = vsel %vm210, %v340, 0.0
  %378 = vadd.xlane.f32.xlu0 %v377
  %v379 = vpop.xlane.xlu0 %378
  %v380 = vrot.slane %v343, 4
  %v381 = vadd.f32 %v343, %v380
  %v382 = vrot.slane %v381, 2
  %v383 = vadd.f32 %v381, %v382
  %v384 = vrot.slane %v383, 1
  %v385 = vadd.f32 %v383, %v384
  %v386 = vrot.slane %v346, 4
  %v387 = vadd.f32 %v346, %v386
  %v388 = vrot.slane %v387, 2
  %v389 = vadd.f32 %v387, %v388
  %v390 = vrot.slane %v389, 1
  %v391 = vadd.f32 %v389, %v390
  %v392 = vrot.slane %v349, 4
  %v393 = vadd.f32 %v349, %v392
  %v394 = vrot.slane %v393, 2
  %v395 = vadd.f32 %v393, %v394
  %v396 = vrot.slane %v395, 1
  %v397 = vadd.f32 %v395, %v396
  %v398 = vrot.slane %v352, 4
  %v399 = vadd.f32 %v352, %v398
  %v400 = vrot.slane %v399, 2
  %v401 = vadd.f32 %v399, %v400
  %v402 = vrot.slane %v401, 1
  %v403 = vadd.f32 %v401, %v402
  %v404 = vrot.slane %v355, 4
  %v405 = vadd.f32 %v355, %v404
  %v406 = vrot.slane %v405, 2
  %v407 = vadd.f32 %v405, %v406
  %v408 = vrot.slane %v407, 1
  %v409 = vadd.f32 %v407, %v408
  %v410 = vrot.slane %v358, 4
  %v411 = vadd.f32 %v358, %v410
  %v412 = vrot.slane %v411, 2
  %v413 = vadd.f32 %v411, %v412
  %v414 = vrot.slane %v413, 1
  %v415 = vadd.f32 %v413, %v414
  %v416 = vrot.slane %v361, 4
  %v417 = vadd.f32 %v361, %v416
  %v418 = vrot.slane %v417, 2
  %v419 = vadd.f32 %v417, %v418
  %v420 = vrot.slane %v419, 1
  %v421 = vadd.f32 %v419, %v420
  %v422 = vrot.slane %v364, 4
  %v423 = vadd.f32 %v364, %v422
  %v424 = vrot.slane %v423, 2
  %v425 = vadd.f32 %v423, %v424
  %v426 = vrot.slane %v425, 1
  %v427 = vadd.f32 %v425, %v426
  %v428 = vrot.slane %v367, 4
  %v429 = vadd.f32 %v367, %v428
  %v430 = vrot.slane %v429, 2
  %v431 = vadd.f32 %v429, %v430
  %v432 = vrot.slane %v431, 1
  %v433 = vadd.f32 %v431, %v432
  %v434 = vrot.slane %v370, 4
  %v435 = vadd.f32 %v370, %v434
  %v436 = vrot.slane %v435, 2
  %v437 = vadd.f32 %v435, %v436
  %v438 = vrot.slane %v437, 1
  %v439 = vadd.f32 %v437, %v438
  %v440 = vrot.slane %v373, 4
  %v441 = vadd.f32 %v373, %v440
  %v442 = vrot.slane %v441, 2
  %v443 = vadd.f32 %v441, %v442
  %v444 = vrot.slane %v443, 1
  %v445 = vadd.f32 %v443, %v444
  %v446 = vrot.slane %v376, 4
  %v447 = vadd.f32 %v376, %v446
  %v448 = vrot.slane %v447, 2
  %v449 = vadd.f32 %v447, %v448
  %v450 = vrot.slane %v449, 1
  %v451 = vadd.f32 %v449, %v450
  %v452 = vrot.slane %v379, 4
  %v453 = vadd.f32 %v379, %v452
  %v454 = vrot.slane %v453, 2
  %v455 = vadd.f32 %v453, %v454
  %v456 = vrot.slane %v455, 1
  %v457 = vadd.f32 %v455, %v456
  %v458 = vmul.f32 %v255, 0.0025
  %v459 = vmul.f32 %v261, 0.0025
  %v460 = vmul.f32 %v267, 0.0025
  %v461 = vmul.f32 %v273, 0.0025
  %v462 = vmul.f32 %v279, 0.0025
  %v463 = vmul.f32 %v285, 0.0025
  %v464 = vmul.f32 %v291, 0.0025
  %v465 = vmul.f32 %v297, 0.0025
  %v466 = vmul.f32 %v303, 0.0025
  %v467 = vmul.f32 %v309, 0.0025
  %v468 = vmul.f32 %v315, 0.0025
  %v469 = vmul.f32 %v321, 0.0025
  %v470 = vmul.f32 %v327, 0.0025
  %v471 = vmul.f32 %v385, 0.0025
  %v472 = vmul.f32 %v391, 0.0025
  %v473 = vmul.f32 %v397, 0.0025
  %v474 = vmul.f32 %v403, 0.0025
  %v475 = vmul.f32 %v409, 0.0025
  %v476 = vmul.f32 %v415, 0.0025
  %v477 = vmul.f32 %v421, 0.0025
  %v478 = vmul.f32 %v427, 0.0025
  %v479 = vmul.f32 %v433, 0.0025
  %v480 = vmul.f32 %v439, 0.0025
  %v481 = vmul.f32 %v445, 0.0025
  %v482 = vmul.f32 %v451, 0.0025
  %v483 = vmul.f32 %v457, 0.0025
  %v484 = vmul.f32 %v458, %v458
  %v485 = vmul.f32 %v459, %v459
  %v486 = vmul.f32 %v460, %v460
  %v487 = vmul.f32 %v461, %v461
  %v488 = vmul.f32 %v462, %v462
  %v489 = vmul.f32 %v463, %v463
  %v490 = vmul.f32 %v464, %v464
  %v491 = vmul.f32 %v465, %v465
  %v492 = vmul.f32 %v466, %v466
  %v493 = vmul.f32 %v467, %v467
  %v494 = vmul.f32 %v468, %v468
  %v495 = vmul.f32 %v469, %v469
  %v496 = vmul.f32 %v470, %v470
  %v497 = vsub.f32 %v471, %v484
  %v498 = vsub.f32 %v472, %v485
  %v499 = vsub.f32 %v473, %v486
  %v500 = vsub.f32 %v474, %v487
  %v501 = vsub.f32 %v475, %v488
  %v502 = vsub.f32 %v476, %v489
  %v503 = vsub.f32 %v477, %v490
  %v504 = vsub.f32 %v478, %v491
  %v505 = vsub.f32 %v479, %v492
  %v506 = vsub.f32 %v480, %v493
  %v507 = vsub.f32 %v481, %v494
  %v508 = vsub.f32 %v482, %v495
  %v509 = vsub.f32 %v483, %v496
  %v510 = vsub.f32 %v197, %v458
  %v511 = vsub.f32 %v198, %v459
  %v512 = vsub.f32 %v199, %v460
  %v513 = vsub.f32 %v200, %v461
  %v514 = vsub.f32 %v201, %v462
  %v515 = vsub.f32 %v202, %v463
  %v516 = vsub.f32 %v203, %v464
  %v517 = vsub.f32 %v204, %v465
  %v518 = vsub.f32 %v205, %v466
  %v519 = vsub.f32 %v206, %v467
  %v520 = vsub.f32 %v207, %v468
  %v521 = vsub.f32 %v208, %v469
  %v522 = vsub.f32 %v209, %v470
  %v523 = vadd.f32 %v497, 1e-05
  %v524 = vadd.f32 %v498, 1e-05
  %v525 = vadd.f32 %v499, 1e-05
  %v526 = vadd.f32 %v500, 1e-05
  %v527 = vadd.f32 %v501, 1e-05
  %v528 = vadd.f32 %v502, 1e-05
  %v529 = vadd.f32 %v503, 1e-05
  %v530 = vadd.f32 %v504, 1e-05
  %v531 = vadd.f32 %v505, 1e-05
  %v532 = vadd.f32 %v506, 1e-05
  %v533 = vadd.f32 %v507, 1e-05
  %v534 = vadd.f32 %v508, 1e-05
  %v535 = vadd.f32 %v509, 1e-05
  %v536 = vrsqrt.pop %v523
  %v537 = vmul.f32 %v536, %v523
  %v538 = vmul.f32 %v537, %v536
  %v539 = vmul.f32 0.5, %v538
  %v540 = vsub.f32 1.5, %v539
  %v541 = vmul.f32 %v536, %v540
  %vm542 = vweird.f32 %v523
  %vm543 = vweird.f32 %v536
  %vm544 = vmor %vm542, %vm543
  %v545 = vsel %vm544, %v536, %v541
  %v546 = vrsqrt.pop %v524
  %v547 = vmul.f32 %v546, %v524
  %v548 = vmul.f32 %v547, %v546
  %v549 = vmul.f32 0.5, %v548
  %v550 = vsub.f32 1.5, %v549
  %v551 = vmul.f32 %v546, %v550
  %vm552 = vweird.f32 %v524
  %vm553 = vweird.f32 %v546
  %vm554 = vmor %vm552, %vm553
  %v555 = vsel %vm554, %v546, %v551
  %v556 = vrsqrt.pop %v525
  %v557 = vmul.f32 %v556, %v525
  %v558 = vmul.f32 %v557, %v556
  %v559 = vmul.f32 0.5, %v558
  %v560 = vsub.f32 1.5, %v559
  %v561 = vmul.f32 %v556, %v560
  %vm562 = vweird.f32 %v525
  %vm563 = vweird.f32 %v556
  %vm564 = vmor %vm562, %vm563
  %v565 = vsel %vm564, %v556, %v561
  %v566 = vrsqrt.pop %v526
  %v567 = vmul.f32 %v566, %v526
  %v568 = vmul.f32 %v567, %v566
  %v569 = vmul.f32 0.5, %v568
  %v570 = vsub.f32 1.5, %v569
  %v571 = vmul.f32 %v566, %v570
  %vm572 = vweird.f32 %v526
  %vm573 = vweird.f32 %v566
  %vm574 = vmor %vm572, %vm573
  %v575 = vsel %vm574, %v566, %v571
  %v576 = vrsqrt.pop %v527
  %v577 = vmul.f32 %v576, %v527
  %v578 = vmul.f32 %v577, %v576
  %v579 = vmul.f32 0.5, %v578
  %v580 = vsub.f32 1.5, %v579
  %v581 = vmul.f32 %v576, %v580
  %vm582 = vweird.f32 %v527
  %vm583 = vweird.f32 %v576
  %vm584 = vmor %vm582, %vm583
  %v585 = vsel %vm584, %v576, %v581
  %v586 = vrsqrt.pop %v528
  %v587 = vmul.f32 %v586, %v528
  %v588 = vmul.f32 %v587, %v586
  %v589 = vmul.f32 0.5, %v588
  %v590 = vsub.f32 1.5, %v589
  %v591 = vmul.f32 %v586, %v590
  %vm592 = vweird.f32 %v528
  %vm593 = vweird.f32 %v586
  %vm594 = vmor %vm592, %vm593
  %v595 = vsel %vm594, %v586, %v591
  %v596 = vrsqrt.pop %v529
  %v597 = vmul.f32 %v596, %v529
  %v598 = vmul.f32 %v597, %v596
  %v599 = vmul.f32 0.5, %v598
  %v600 = vsub.f32 1.5, %v599
  %v601 = vmul.f32 %v596, %v600
  %vm602 = vweird.f32 %v529
  %vm603 = vweird.f32 %v596
  %vm604 = vmor %vm602, %vm603
  %v605 = vsel %vm604, %v596, %v601
  %v606 = vrsqrt.pop %v530
  %v607 = vmul.f32 %v606, %v530
  %v608 = vmul.f32 %v607, %v606
  %v609 = vmul.f32 0.5, %v608
  %v610 = vsub.f32 1.5, %v609
  %v611 = vmul.f32 %v606, %v610
  %vm612 = vweird.f32 %v530
  %vm613 = vweird.f32 %v606
  %vm614 = vmor %vm612, %vm613
  %v615 = vsel %vm614, %v606, %v611
  %v616 = vrsqrt.pop %v531
  %v617 = vmul.f32 %v616, %v531
  %v618 = vmul.f32 %v617, %v616
  %v619 = vmul.f32 0.5, %v618
  %v620 = vsub.f32 1.5, %v619
  %v621 = vmul.f32 %v616, %v620
  %vm622 = vweird.f32 %v531
  %vm623 = vweird.f32 %v616
  %vm624 = vmor %vm622, %vm623
  %v625 = vsel %vm624, %v616, %v621
  %v626 = vrsqrt.pop %v532
  %v627 = vmul.f32 %v626, %v532
  %v628 = vmul.f32 %v627, %v626
  %v629 = vmul.f32 0.5, %v628
  %v630 = vsub.f32 1.5, %v629
  %v631 = vmul.f32 %v626, %v630
  %vm632 = vweird.f32 %v532
  %vm633 = vweird.f32 %v626
  %vm634 = vmor %vm632, %vm633
  %v635 = vsel %vm634, %v626, %v631
  %v636 = vrsqrt.pop %v533
  %v637 = vmul.f32 %v636, %v533
  %v638 = vmul.f32 %v637, %v636
  %v639 = vmul.f32 0.5, %v638
  %v640 = vsub.f32 1.5, %v639
  %v641 = vmul.f32 %v636, %v640
  %vm642 = vweird.f32 %v533
  %vm643 = vweird.f32 %v636
  %vm644 = vmor %vm642, %vm643
  %v645 = vsel %vm644, %v636, %v641
  %v646 = vrsqrt.pop %v534
  %v647 = vmul.f32 %v646, %v534
  %v648 = vmul.f32 %v647, %v646
  %v649 = vmul.f32 0.5, %v648
  %v650 = vsub.f32 1.5, %v649
  %v651 = vmul.f32 %v646, %v650
  %vm652 = vweird.f32 %v534
  %vm653 = vweird.f32 %v646
  %vm654 = vmor %vm652, %vm653
  %v655 = vsel %vm654, %v646, %v651
  %v656 = vrsqrt.pop %v535
  %v657 = vmul.f32 %v656, %v535
  %v658 = vmul.f32 %v657, %v656
  %v659 = vmul.f32 0.5, %v658
  %v660 = vsub.f32 1.5, %v659
  %v661 = vmul.f32 %v656, %v660
  %vm662 = vweird.f32 %v535
  %vm663 = vweird.f32 %v656
  %vm664 = vmor %vm662, %vm663
  %v665 = vsel %vm664, %v656, %v661
  %v666 = vmul.f32 %v510, %v545
  %v667 = vmul.f32 %v511, %v555
  %v668 = vmul.f32 %v512, %v565
  %v669 = vmul.f32 %v513, %v575
  %v670 = vmul.f32 %v514, %v585
  %v671 = vmul.f32 %v515, %v595
  %v672 = vmul.f32 %v516, %v605
  %v673 = vmul.f32 %v517, %v615
  %v674 = vmul.f32 %v518, %v625
  %v675 = vmul.f32 %v519, %v635
  %v676 = vmul.f32 %v520, %v645
  %v677 = vmul.f32 %v521, %v655
  %v678 = vmul.f32 %v522, %v665
  %v679 = vld [vmem:[%s2] sm:$0xff]
  %v680 = vld [vmem:[%s2 + $0x8] sm:$0xff]
  %v681 = vld [vmem:[%s2 + $0x10] sm:$0xff]
  %v682 = vld [vmem:[%s2 + $0x18] sm:$0xff]
  %v683 = vld [vmem:[%s2 + $0x20] sm:$0xff]
  %v684 = vld [vmem:[%s2 + $0x28] sm:$0xff]
  %v685 = vld [vmem:[%s2 + $0x30] sm:$0x3]
  %v687 = vsel %vm210, %v666, 0
  %v690 = vsel %vm210, %v667, 0
  %v693 = vsel %vm210, %v668, 0
  %v696 = vsel %vm210, %v669, 0
  %v699 = vsel %vm210, %v670, 0
  %v702 = vsel %vm210, %v671, 0
  %v705 = vsel %vm210, %v672, 0
  %v708 = vsel %vm210, %v673, 0
  %v711 = vsel %vm210, %v674, 0
  %v714 = vsel %vm210, %v675, 0
  %v717 = vsel %vm210, %v676, 0
  %v720 = vsel %vm210, %v677, 0
  %v723 = vsel %vm210, %v678, 0
  %vm725 = vcmask 1041408
  %v727 = vsel %vm725, %v685, 0
  %729 = vmatpush.msra.mxu0 0.0
  %730 = vmatpush.msra.mxu0 0.0
  %731 = vmatpush.msra.mxu0 0.0
  %732 = vmatpush.msra.mxu0 0.0
  %733 = vmatpush.msra.mxu0 0.0
  %734 = vmatpush.msra.mxu0 0.0
  %735 = vmatpush.msra.mxu0 0.0
  %736 = vmatpush.msra.mxu0 0.0
  %737 = vmatpush.msra.mxu0 0.0
  %738 = vmatpush.msra.mxu0 %v727
  %739 = vmatpush.msra.mxu0 %v684
  %740 = vmatpush.msra.mxu0 %v683
  %741 = vmatpush.msra.mxu0 %v682
  %742 = vmatpush.msra.mxu0 %v681
  %743 = vmatpush.msra.mxu0 %v680
  %744 = vmatpush.msra.mxu0 %v679
  %745 = vmatmul.f32.gmra.mxu0 %v687
  %v746 = vpop.f32.mrf.mxu0
  %v747 = vadd.f32 0.0, %v746
  %748 = vmatmul.f32.gmra.mxu0 %v690
  %v749 = vpop.f32.mrf.mxu0
  %v750 = vadd.f32 0.0, %v749
  %751 = vmatmul.f32.gmra.mxu0 %v693
  %v752 = vpop.f32.mrf.mxu0
  %v753 = vadd.f32 0.0, %v752
  %754 = vmatmul.f32.gmra.mxu0 %v696
  %v755 = vpop.f32.mrf.mxu0
  %v756 = vadd.f32 0.0, %v755
  %757 = vmatmul.f32.gmra.mxu0 %v699
  %v758 = vpop.f32.mrf.mxu0
  %v759 = vadd.f32 0.0, %v758
  %760 = vmatmul.f32.gmra.mxu0 %v702
  %v761 = vpop.f32.mrf.mxu0
  %v762 = vadd.f32 0.0, %v761
  %763 = vmatmul.f32.gmra.mxu0 %v705
  %v764 = vpop.f32.mrf.mxu0
  %v765 = vadd.f32 0.0, %v764
  %766 = vmatmul.f32.gmra.mxu0 %v708
  %v767 = vpop.f32.mrf.mxu0
  %v768 = vadd.f32 0.0, %v767
  %769 = vmatmul.f32.gmra.mxu0 %v711
  %v770 = vpop.f32.mrf.mxu0
  %v771 = vadd.f32 0.0, %v770
  %772 = vmatmul.f32.gmra.mxu0 %v714
  %v773 = vpop.f32.mrf.mxu0
  %v774 = vadd.f32 0.0, %v773
  %775 = vmatmul.f32.gmra.mxu0 %v717
  %v776 = vpop.f32.mrf.mxu0
  %v777 = vadd.f32 0.0, %v776
  %778 = vmatmul.f32.gmra.mxu0 %v720
  %v779 = vpop.f32.mrf.mxu0
  %v780 = vadd.f32 0.0, %v779
  %781 = vmatmul.f32.gmra.mxu0 %v723
  %v782 = vpop.f32.mrf.mxu0
  %v783 = vadd.f32 0.0, %v782
  %784 = vdwg.mxu0
  %v785 = vmax.f32 %v747, 0.0
  %v786 = vmax.f32 %v750, 0.0
  %v787 = vmax.f32 %v753, 0.0
  %v788 = vmax.f32 %v756, 0.0
  %v789 = vmax.f32 %v759, 0.0
  %v790 = vmax.f32 %v762, 0.0
  %v791 = vmax.f32 %v765, 0.0
  %v792 = vmax.f32 %v768, 0.0
  %v793 = vmax.f32 %v771, 0.0
  %v794 = vmax.f32 %v774, 0.0
  %v795 = vmax.f32 %v777, 0.0
  %v796 = vmax.f32 %v780, 0.0
  %v797 = vmax.f32 %v783, 0.0
  %vm798 = vcmask 203776
  %v799 = vsel %vm798, %v785, 0.0
  %800 = vadd.xlane.f32.xlu0 %v799
  %v801 = vpop.xlane.xlu0 %800
  %v802 = vsel %vm798, %v786, 0.0
  %803 = vadd.xlane.f32.xlu0 %v802
  %v804 = vpop.xlane.xlu0 %803
  %v805 = vsel %vm798, %v787, 0.0
  %806 = vadd.xlane.f32.xlu0 %v805
  %v807 = vpop.xlane.xlu0 %806
  %v808 = vsel %vm798, %v788, 0.0
  %809 = vadd.xlane.f32.xlu0 %v808
  %v810 = vpop.xlane.xlu0 %809
  %v811 = vsel %vm798, %v789, 0.0
  %812 = vadd.xlane.f32.xlu0 %v811
  %v813 = vpop.xlane.xlu0 %812
  %v814 = vsel %vm798, %v790, 0.0
  %815 = vadd.xlane.f32.xlu0 %v814
  %v816 = vpop.xlane.xlu0 %815
  %v817 = vsel %vm798, %v791, 0.0
  %818 = vadd.xlane.f32.xlu0 %v817
  %v819 = vpop.xlane.xlu0 %818
  %v820 = vsel %vm798, %v792, 0.0
  %821 = vadd.xlane.f32.xlu0 %v820
  %v822 = vpop.xlane.xlu0 %821
  %v823 = vsel %vm798, %v793, 0.0
  %824 = vadd.xlane.f32.xlu0 %v823
  %v825 = vpop.xlane.xlu0 %824
  %v826 = vsel %vm798, %v794, 0.0
  %827 = vadd.xlane.f32.xlu0 %v826
  %v828 = vpop.xlane.xlu0 %827
  %v829 = vsel %vm798, %v795, 0.0
  %830 = vadd.xlane.f32.xlu0 %v829
  %v831 = vpop.xlane.xlu0 %830
  %v832 = vsel %vm798, %v796, 0.0
  %833 = vadd.xlane.f32.xlu0 %v832
  %v834 = vpop.xlane.xlu0 %833
  %v835 = vsel %vm798, %v797, 0.0
  %836 = vadd.xlane.f32.xlu0 %v835
  %v837 = vpop.xlane.xlu0 %836
  %v838 = vrot.slane %v801, 4
  %v839 = vadd.f32 %v801, %v838
  %v840 = vrot.slane %v839, 2
  %v841 = vadd.f32 %v839, %v840
  %v842 = vrot.slane %v841, 1
  %v843 = vadd.f32 %v841, %v842
  %v844 = vrot.slane %v804, 4
  %v845 = vadd.f32 %v804, %v844
  %v846 = vrot.slane %v845, 2
  %v847 = vadd.f32 %v845, %v846
  %v848 = vrot.slane %v847, 1
  %v849 = vadd.f32 %v847, %v848
  %v850 = vrot.slane %v807, 4
  %v851 = vadd.f32 %v807, %v850
  %v852 = vrot.slane %v851, 2
  %v853 = vadd.f32 %v851, %v852
  %v854 = vrot.slane %v853, 1
  %v855 = vadd.f32 %v853, %v854
  %v856 = vrot.slane %v810, 4
  %v857 = vadd.f32 %v810, %v856
  %v858 = vrot.slane %v857, 2
  %v859 = vadd.f32 %v857, %v858
  %v860 = vrot.slane %v859, 1
  %v861 = vadd.f32 %v859, %v860
  %v862 = vrot.slane %v813, 4
  %v863 = vadd.f32 %v813, %v862
  %v864 = vrot.slane %v863, 2
  %v865 = vadd.f32 %v863, %v864
  %v866 = vrot.slane %v865, 1
  %v867 = vadd.f32 %v865, %v866
  %v868 = vrot.slane %v816, 4
  %v869 = vadd.f32 %v816, %v868
  %v870 = vrot.slane %v869, 2
  %v871 = vadd.f32 %v869, %v870
  %v872 = vrot.slane %v871, 1
  %v873 = vadd.f32 %v871, %v872
  %v874 = vrot.slane %v819, 4
  %v875 = vadd.f32 %v819, %v874
  %v876 = vrot.slane %v875, 2
  %v877 = vadd.f32 %v875, %v876
  %v878 = vrot.slane %v877, 1
  %v879 = vadd.f32 %v877, %v878
  %v880 = vrot.slane %v822, 4
  %v881 = vadd.f32 %v822, %v880
  %v882 = vrot.slane %v881, 2
  %v883 = vadd.f32 %v881, %v882
  %v884 = vrot.slane %v883, 1
  %v885 = vadd.f32 %v883, %v884
  %v886 = vrot.slane %v825, 4
  %v887 = vadd.f32 %v825, %v886
  %v888 = vrot.slane %v887, 2
  %v889 = vadd.f32 %v887, %v888
  %v890 = vrot.slane %v889, 1
  %v891 = vadd.f32 %v889, %v890
  %v892 = vrot.slane %v828, 4
  %v893 = vadd.f32 %v828, %v892
  %v894 = vrot.slane %v893, 2
  %v895 = vadd.f32 %v893, %v894
  %v896 = vrot.slane %v895, 1
  %v897 = vadd.f32 %v895, %v896
  %v898 = vrot.slane %v831, 4
  %v899 = vadd.f32 %v831, %v898
  %v900 = vrot.slane %v899, 2
  %v901 = vadd.f32 %v899, %v900
  %v902 = vrot.slane %v901, 1
  %v903 = vadd.f32 %v901, %v902
  %v904 = vrot.slane %v834, 4
  %v905 = vadd.f32 %v834, %v904
  %v906 = vrot.slane %v905, 2
  %v907 = vadd.f32 %v905, %v906
  %v908 = vrot.slane %v907, 1
  %v909 = vadd.f32 %v907, %v908
  %v910 = vrot.slane %v837, 4
  %v911 = vadd.f32 %v837, %v910
  %v912 = vrot.slane %v911, 2
  %v913 = vadd.f32 %v911, %v912
  %v914 = vrot.slane %v913, 1
  %v915 = vadd.f32 %v913, %v914
  %v916 = vmul.f32 %v785, %v785
  %v917 = vmul.f32 %v786, %v786
  %v918 = vmul.f32 %v787, %v787
  %v919 = vmul.f32 %v788, %v788
  %v920 = vmul.f32 %v789, %v789
  %v921 = vmul.f32 %v790, %v790
  %v922 = vmul.f32 %v791, %v791
  %v923 = vmul.f32 %v792, %v792
  %v924 = vmul.f32 %v793, %v793
  %v925 = vmul.f32 %v794, %v794
  %v926 = vmul.f32 %v795, %v795
  %v927 = vmul.f32 %v796, %v796
  %v928 = vmul.f32 %v797, %v797
  %v929 = vsel %vm798, %v916, 0.0
  %930 = vadd.xlane.f32.xlu0 %v929
  %v931 = vpop.xlane.xlu0 %930
  %v932 = vsel %vm798, %v917, 0.0
  %933 = vadd.xlane.f32.xlu0 %v932
  %v934 = vpop.xlane.xlu0 %933
  %v935 = vsel %vm798, %v918, 0.0
  %936 = vadd.xlane.f32.xlu0 %v935
  %v937 = vpop.xlane.xlu0 %936
  %v938 = vsel %vm798, %v919, 0.0
  %939 = vadd.xlane.f32.xlu0 %v938
  %v940 = vpop.xlane.xlu0 %939
  %v941 = vsel %vm798, %v920, 0.0
  %942 = vadd.xlane.f32.xlu0 %v941
  %v943 = vpop.xlane.xlu0 %942
  %v944 = vsel %vm798, %v921, 0.0
  %945 = vadd.xlane.f32.xlu0 %v944
  %v946 = vpop.xlane.xlu0 %945
  %v947 = vsel %vm798, %v922, 0.0
  %948 = vadd.xlane.f32.xlu0 %v947
  %v949 = vpop.xlane.xlu0 %948
  %v950 = vsel %vm798, %v923, 0.0
  %951 = vadd.xlane.f32.xlu0 %v950
  %v952 = vpop.xlane.xlu0 %951
  %v953 = vsel %vm798, %v924, 0.0
  %954 = vadd.xlane.f32.xlu0 %v953
  %v955 = vpop.xlane.xlu0 %954
  %v956 = vsel %vm798, %v925, 0.0
  %957 = vadd.xlane.f32.xlu0 %v956
  %v958 = vpop.xlane.xlu0 %957
  %v959 = vsel %vm798, %v926, 0.0
  %960 = vadd.xlane.f32.xlu0 %v959
  %v961 = vpop.xlane.xlu0 %960
  %v962 = vsel %vm798, %v927, 0.0
  %963 = vadd.xlane.f32.xlu0 %v962
  %v964 = vpop.xlane.xlu0 %963
  %v965 = vsel %vm798, %v928, 0.0
  %966 = vadd.xlane.f32.xlu0 %v965
  %v967 = vpop.xlane.xlu0 %966
  %v968 = vrot.slane %v931, 4
  %v969 = vadd.f32 %v931, %v968
  %v970 = vrot.slane %v969, 2
  %v971 = vadd.f32 %v969, %v970
  %v972 = vrot.slane %v971, 1
  %v973 = vadd.f32 %v971, %v972
  %v974 = vrot.slane %v934, 4
  %v975 = vadd.f32 %v934, %v974
  %v976 = vrot.slane %v975, 2
  %v977 = vadd.f32 %v975, %v976
  %v978 = vrot.slane %v977, 1
  %v979 = vadd.f32 %v977, %v978
  %v980 = vrot.slane %v937, 4
  %v981 = vadd.f32 %v937, %v980
  %v982 = vrot.slane %v981, 2
  %v983 = vadd.f32 %v981, %v982
  %v984 = vrot.slane %v983, 1
  %v985 = vadd.f32 %v983, %v984
  %v986 = vrot.slane %v940, 4
  %v987 = vadd.f32 %v940, %v986
  %v988 = vrot.slane %v987, 2
  %v989 = vadd.f32 %v987, %v988
  %v990 = vrot.slane %v989, 1
  %v991 = vadd.f32 %v989, %v990
  %v992 = vrot.slane %v943, 4
  %v993 = vadd.f32 %v943, %v992
  %v994 = vrot.slane %v993, 2
  %v995 = vadd.f32 %v993, %v994
  %v996 = vrot.slane %v995, 1
  %v997 = vadd.f32 %v995, %v996
  %v998 = vrot.slane %v946, 4
  %v999 = vadd.f32 %v946, %v998
  %v1000 = vrot.slane %v999, 2
  %v1001 = vadd.f32 %v999, %v1000
  %v1002 = vrot.slane %v1001, 1
  %v1003 = vadd.f32 %v1001, %v1002
  %v1004 = vrot.slane %v949, 4
  %v1005 = vadd.f32 %v949, %v1004
  %v1006 = vrot.slane %v1005, 2
  %v1007 = vadd.f32 %v1005, %v1006
  %v1008 = vrot.slane %v1007, 1
  %v1009 = vadd.f32 %v1007, %v1008
  %v1010 = vrot.slane %v952, 4
  %v1011 = vadd.f32 %v952, %v1010
  %v1012 = vrot.slane %v1011, 2
  %v1013 = vadd.f32 %v1011, %v1012
  %v1014 = vrot.slane %v1013, 1
  %v1015 = vadd.f32 %v1013, %v1014
  %v1016 = vrot.slane %v955, 4
  %v1017 = vadd.f32 %v955, %v1016
  %v1018 = vrot.slane %v1017, 2
  %v1019 = vadd.f32 %v1017, %v1018
  %v1020 = vrot.slane %v1019, 1
  %v1021 = vadd.f32 %v1019, %v1020
  %v1022 = vrot.slane %v958, 4
  %v1023 = vadd.f32 %v958, %v1022
  %v1024 = vrot.slane %v1023, 2
  %v1025 = vadd.f32 %v1023, %v1024
  %v1026 = vrot.slane %v1025, 1
  %v1027 = vadd.f32 %v1025, %v1026
  %v1028 = vrot.slane %v961, 4
  %v1029 = vadd.f32 %v961, %v1028
  %v1030 = vrot.slane %v1029, 2
  %v1031 = vadd.f32 %v1029, %v1030
  %v1032 = vrot.slane %v1031, 1
  %v1033 = vadd.f32 %v1031, %v1032
  %v1034 = vrot.slane %v964, 4
  %v1035 = vadd.f32 %v964, %v1034
  %v1036 = vrot.slane %v1035, 2
  %v1037 = vadd.f32 %v1035, %v1036
  %v1038 = vrot.slane %v1037, 1
  %v1039 = vadd.f32 %v1037, %v1038
  %v1040 = vrot.slane %v967, 4
  %v1041 = vadd.f32 %v967, %v1040
  %v1042 = vrot.slane %v1041, 2
  %v1043 = vadd.f32 %v1041, %v1042
  %v1044 = vrot.slane %v1043, 1
  %v1045 = vadd.f32 %v1043, %v1044
  %v1046 = vmul.f32 %v843, 0.005
  %v1047 = vmul.f32 %v849, 0.005
  %v1048 = vmul.f32 %v855, 0.005
  %v1049 = vmul.f32 %v861, 0.005
  %v1050 = vmul.f32 %v867, 0.005
  %v1051 = vmul.f32 %v873, 0.005
  %v1052 = vmul.f32 %v879, 0.005
  %v1053 = vmul.f32 %v885, 0.005
  %v1054 = vmul.f32 %v891, 0.005
  %v1055 = vmul.f32 %v897, 0.005
  %v1056 = vmul.f32 %v903, 0.005
  %v1057 = vmul.f32 %v909, 0.005
  %v1058 = vmul.f32 %v915, 0.005
  %v1059 = vmul.f32 %v973, 0.005
  %v1060 = vmul.f32 %v979, 0.005
  %v1061 = vmul.f32 %v985, 0.005
  %v1062 = vmul.f32 %v991, 0.005
  %v1063 = vmul.f32 %v997, 0.005
  %v1064 = vmul.f32 %v1003, 0.005
  %v1065 = vmul.f32 %v1009, 0.005
  %v1066 = vmul.f32 %v1015, 0.005
  %v1067 = vmul.f32 %v1021, 0.005
  %v1068 = vmul.f32 %v1027, 0.005
  %v1069 = vmul.f32 %v1033, 0.005
  %v1070 = vmul.f32 %v1039, 0.005
  %v1071 = vmul.f32 %v1045, 0.005
  %v1072 = vmul.f32 %v1046, %v1046
  %v1073 = vmul.f32 %v1047, %v1047
  %v1074 = vmul.f32 %v1048, %v1048
  %v1075 = vmul.f32 %v1049, %v1049
  %v1076 = vmul.f32 %v1050, %v1050
  %v1077 = vmul.f32 %v1051, %v1051
  %v1078 = vmul.f32 %v1052, %v1052
  %v1079 = vmul.f32 %v1053, %v1053
  %v1080 = vmul.f32 %v1054, %v1054
  %v1081 = vmul.f32 %v1055, %v1055
  %v1082 = vmul.f32 %v1056, %v1056
  %v1083 = vmul.f32 %v1057, %v1057
  %v1084 = vmul.f32 %v1058, %v1058
  %v1085 = vsub.f32 %v1059, %v1072
  %v1086 = vsub.f32 %v1060, %v1073
  %v1087 = vsub.f32 %v1061, %v1074
  %v1088 = vsub.f32 %v1062, %v1075
  %v1089 = vsub.f32 %v1063, %v1076
  %v1090 = vsub.f32 %v1064, %v1077
  %v1091 = vsub.f32 %v1065, %v1078
  %v1092 = vsub.f32 %v1066, %v1079
  %v1093 = vsub.f32 %v1067, %v1080
  %v1094 = vsub.f32 %v1068, %v1081
  %v1095 = vsub.f32 %v1069, %v1082
  %v1096 = vsub.f32 %v1070, %v1083
  %v1097 = vsub.f32 %v1071, %v1084
  %v1098 = vsub.f32 %v785, %v1046
  %v1099 = vsub.f32 %v786, %v1047
  %v1100 = vsub.f32 %v787, %v1048
  %v1101 = vsub.f32 %v788, %v1049
  %v1102 = vsub.f32 %v789, %v1050
  %v1103 = vsub.f32 %v790, %v1051
  %v1104 = vsub.f32 %v791, %v1052
  %v1105 = vsub.f32 %v792, %v1053
  %v1106 = vsub.f32 %v793, %v1054
  %v1107 = vsub.f32 %v794, %v1055
  %v1108 = vsub.f32 %v795, %v1056
  %v1109 = vsub.f32 %v796, %v1057
  %v1110 = vsub.f32 %v797, %v1058
  %v1111 = vadd.f32 %v1085, 1e-05
  %v1112 = vadd.f32 %v1086, 1e-05
  %v1113 = vadd.f32 %v1087, 1e-05
  %v1114 = vadd.f32 %v1088, 1e-05
  %v1115 = vadd.f32 %v1089, 1e-05
  %v1116 = vadd.f32 %v1090, 1e-05
  %v1117 = vadd.f32 %v1091, 1e-05
  %v1118 = vadd.f32 %v1092, 1e-05
  %v1119 = vadd.f32 %v1093, 1e-05
  %v1120 = vadd.f32 %v1094, 1e-05
  %v1121 = vadd.f32 %v1095, 1e-05
  %v1122 = vadd.f32 %v1096, 1e-05
  %v1123 = vadd.f32 %v1097, 1e-05
  %v1124 = vrsqrt.pop %v1111
  %v1125 = vmul.f32 %v1124, %v1111
  %v1126 = vmul.f32 %v1125, %v1124
  %v1127 = vmul.f32 0.5, %v1126
  %v1128 = vsub.f32 1.5, %v1127
  %v1129 = vmul.f32 %v1124, %v1128
  %vm1130 = vweird.f32 %v1111
  %vm1131 = vweird.f32 %v1124
  %vm1132 = vmor %vm1130, %vm1131
  %v1133 = vsel %vm1132, %v1124, %v1129
  %v1134 = vrsqrt.pop %v1112
  %v1135 = vmul.f32 %v1134, %v1112
  %v1136 = vmul.f32 %v1135, %v1134
  %v1137 = vmul.f32 0.5, %v1136
  %v1138 = vsub.f32 1.5, %v1137
  %v1139 = vmul.f32 %v1134, %v1138
  %vm1140 = vweird.f32 %v1112
  %vm1141 = vweird.f32 %v1134
  %vm1142 = vmor %vm1140, %vm1141
  %v1143 = vsel %vm1142, %v1134, %v1139
  %v1144 = vrsqrt.pop %v1113
  %v1145 = vmul.f32 %v1144, %v1113
  %v1146 = vmul.f32 %v1145, %v1144
  %v1147 = vmul.f32 0.5, %v1146
  %v1148 = vsub.f32 1.5, %v1147
  %v1149 = vmul.f32 %v1144, %v1148
  %vm1150 = vweird.f32 %v1113
  %vm1151 = vweird.f32 %v1144
  %vm1152 = vmor %vm1150, %vm1151
  %v1153 = vsel %vm1152, %v1144, %v1149
  %v1154 = vrsqrt.pop %v1114
  %v1155 = vmul.f32 %v1154, %v1114
  %v1156 = vmul.f32 %v1155, %v1154
  %v1157 = vmul.f32 0.5, %v1156
  %v1158 = vsub.f32 1.5, %v1157
  %v1159 = vmul.f32 %v1154, %v1158
  %vm1160 = vweird.f32 %v1114
  %vm1161 = vweird.f32 %v1154
  %vm1162 = vmor %vm1160, %vm1161
  %v1163 = vsel %vm1162, %v1154, %v1159
  %v1164 = vrsqrt.pop %v1115
  %v1165 = vmul.f32 %v1164, %v1115
  %v1166 = vmul.f32 %v1165, %v1164
  %v1167 = vmul.f32 0.5, %v1166
  %v1168 = vsub.f32 1.5, %v1167
  %v1169 = vmul.f32 %v1164, %v1168
  %vm1170 = vweird.f32 %v1115
  %vm1171 = vweird.f32 %v1164
  %vm1172 = vmor %vm1170, %vm1171
  %v1173 = vsel %vm1172, %v1164, %v1169
  %v1174 = vrsqrt.pop %v1116
  %v1175 = vmul.f32 %v1174, %v1116
  %v1176 = vmul.f32 %v1175, %v1174
  %v1177 = vmul.f32 0.5, %v1176
  %v1178 = vsub.f32 1.5, %v1177
  %v1179 = vmul.f32 %v1174, %v1178
  %vm1180 = vweird.f32 %v1116
  %vm1181 = vweird.f32 %v1174
  %vm1182 = vmor %vm1180, %vm1181
  %v1183 = vsel %vm1182, %v1174, %v1179
  %v1184 = vrsqrt.pop %v1117
  %v1185 = vmul.f32 %v1184, %v1117
  %v1186 = vmul.f32 %v1185, %v1184
  %v1187 = vmul.f32 0.5, %v1186
  %v1188 = vsub.f32 1.5, %v1187
  %v1189 = vmul.f32 %v1184, %v1188
  %vm1190 = vweird.f32 %v1117
  %vm1191 = vweird.f32 %v1184
  %vm1192 = vmor %vm1190, %vm1191
  %v1193 = vsel %vm1192, %v1184, %v1189
  %v1194 = vrsqrt.pop %v1118
  %v1195 = vmul.f32 %v1194, %v1118
  %v1196 = vmul.f32 %v1195, %v1194
  %v1197 = vmul.f32 0.5, %v1196
  %v1198 = vsub.f32 1.5, %v1197
  %v1199 = vmul.f32 %v1194, %v1198
  %vm1200 = vweird.f32 %v1118
  %vm1201 = vweird.f32 %v1194
  %vm1202 = vmor %vm1200, %vm1201
  %v1203 = vsel %vm1202, %v1194, %v1199
  %v1204 = vrsqrt.pop %v1119
  %v1205 = vmul.f32 %v1204, %v1119
  %v1206 = vmul.f32 %v1205, %v1204
  %v1207 = vmul.f32 0.5, %v1206
  %v1208 = vsub.f32 1.5, %v1207
  %v1209 = vmul.f32 %v1204, %v1208
  %vm1210 = vweird.f32 %v1119
  %vm1211 = vweird.f32 %v1204
  %vm1212 = vmor %vm1210, %vm1211
  %v1213 = vsel %vm1212, %v1204, %v1209
  %v1214 = vrsqrt.pop %v1120
  %v1215 = vmul.f32 %v1214, %v1120
  %v1216 = vmul.f32 %v1215, %v1214
  %v1217 = vmul.f32 0.5, %v1216
  %v1218 = vsub.f32 1.5, %v1217
  %v1219 = vmul.f32 %v1214, %v1218
  %vm1220 = vweird.f32 %v1120
  %vm1221 = vweird.f32 %v1214
  %vm1222 = vmor %vm1220, %vm1221
  %v1223 = vsel %vm1222, %v1214, %v1219
  %v1224 = vrsqrt.pop %v1121
  %v1225 = vmul.f32 %v1224, %v1121
  %v1226 = vmul.f32 %v1225, %v1224
  %v1227 = vmul.f32 0.5, %v1226
  %v1228 = vsub.f32 1.5, %v1227
  %v1229 = vmul.f32 %v1224, %v1228
  %vm1230 = vweird.f32 %v1121
  %vm1231 = vweird.f32 %v1224
  %vm1232 = vmor %vm1230, %vm1231
  %v1233 = vsel %vm1232, %v1224, %v1229
  %v1234 = vrsqrt.pop %v1122
  %v1235 = vmul.f32 %v1234, %v1122
  %v1236 = vmul.f32 %v1235, %v1234
  %v1237 = vmul.f32 0.5, %v1236
  %v1238 = vsub.f32 1.5, %v1237
  %v1239 = vmul.f32 %v1234, %v1238
  %vm1240 = vweird.f32 %v1122
  %vm1241 = vweird.f32 %v1234
  %vm1242 = vmor %vm1240, %vm1241
  %v1243 = vsel %vm1242, %v1234, %v1239
  %v1244 = vrsqrt.pop %v1123
  %v1245 = vmul.f32 %v1244, %v1123
  %v1246 = vmul.f32 %v1245, %v1244
  %v1247 = vmul.f32 0.5, %v1246
  %v1248 = vsub.f32 1.5, %v1247
  %v1249 = vmul.f32 %v1244, %v1248
  %vm1250 = vweird.f32 %v1123
  %vm1251 = vweird.f32 %v1244
  %vm1252 = vmor %vm1250, %vm1251
  %v1253 = vsel %vm1252, %v1244, %v1249
  %v1254 = vmul.f32 %v1098, %v1133
  %v1255 = vmul.f32 %v1099, %v1143
  %v1256 = vmul.f32 %v1100, %v1153
  %v1257 = vmul.f32 %v1101, %v1163
  %v1258 = vmul.f32 %v1102, %v1173
  %v1259 = vmul.f32 %v1103, %v1183
  %v1260 = vmul.f32 %v1104, %v1193
  %v1261 = vmul.f32 %v1105, %v1203
  %v1262 = vmul.f32 %v1106, %v1213
  %v1263 = vmul.f32 %v1107, %v1223
  %v1264 = vmul.f32 %v1108, %v1233
  %v1265 = vmul.f32 %v1109, %v1243
  %v1266 = vmul.f32 %v1110, %v1253
  %v1267 = vld [vmem:[%s3] sm:$0xff]
  %v1268 = vld [vmem:[%s3 + $0x8] sm:$0xff]
  %v1269 = vld [vmem:[%s3 + $0x10] sm:$0xff]
  %v1270 = vld [vmem:[%s3 + $0x18] sm:$0x1]
  %v1272 = vsel %vm798, %v1254, 0
  %v1275 = vsel %vm798, %v1255, 0
  %v1278 = vsel %vm798, %v1256, 0
  %v1281 = vsel %vm798, %v1257, 0
  %v1284 = vsel %vm798, %v1258, 0
  %v1287 = vsel %vm798, %v1259, 0
  %v1290 = vsel %vm798, %v1260, 0
  %v1293 = vsel %vm798, %v1261, 0
  %v1296 = vsel %vm798, %v1262, 0
  %v1299 = vsel %vm798, %v1263, 0
  %v1302 = vsel %vm798, %v1264, 0
  %v1305 = vsel %vm798, %v1265, 0
  %v1308 = vsel %vm798, %v1266, 0
  %vm1310 = vcmask 1040384
  %v1312 = vsel %vm1310, %v1270, 0
  %1314 = vmatpush.msra.mxu0 0.0
  %1315 = vmatpush.msra.mxu0 0.0
  %1316 = vmatpush.msra.mxu0 0.0
  %1317 = vmatpush.msra.mxu0 0.0
  %1318 = vmatpush.msra.mxu0 0.0
  %1319 = vmatpush.msra.mxu0 0.0
  %1320 = vmatpush.msra.mxu0 0.0
  %1321 = vmatpush.msra.mxu0 0.0
  %1322 = vmatpush.msra.mxu0 0.0
  %1323 = vmatpush.msra.mxu0 0.0
  %1324 = vmatpush.msra.mxu0 0.0
  %1325 = vmatpush.msra.mxu0 0.0
  %1326 = vmatpush.msra.mxu0 %v1312
  %1327 = vmatpush.msra.mxu0 %v1269
  %1328 = vmatpush.msra.mxu0 %v1268
  %1329 = vmatpush.msra.mxu0 %v1267
  %1330 = vmatmul.f32.gmra.mxu0 %v1272
  %v1331 = vpop.f32.mrf.mxu0
  %v1332 = vadd.f32 0.0, %v1331
  %1333 = vmatmul.f32.gmra.mxu0 %v1275
  %v1334 = vpop.f32.mrf.mxu0
  %v1335 = vadd.f32 0.0, %v1334
  %1336 = vmatmul.f32.gmra.mxu0 %v1278
  %v1337 = vpop.f32.mrf.mxu0
  %v1338 = vadd.f32 0.0, %v1337
  %1339 = vmatmul.f32.gmra.mxu0 %v1281
  %v1340 = vpop.f32.mrf.mxu0
  %v1341 = vadd.f32 0.0, %v1340
  %1342 = vmatmul.f32.gmra.mxu0 %v1284
  %v1343 = vpop.f32.mrf.mxu0
  %v1344 = vadd.f32 0.0, %v1343
  %1345 = vmatmul.f32.gmra.mxu0 %v1287
  %v1346 = vpop.f32.mrf.mxu0
  %v1347 = vadd.f32 0.0, %v1346
  %1348 = vmatmul.f32.gmra.mxu0 %v1290
  %v1349 = vpop.f32.mrf.mxu0
  %v1350 = vadd.f32 0.0, %v1349
  %1351 = vmatmul.f32.gmra.mxu0 %v1293
  %v1352 = vpop.f32.mrf.mxu0
  %v1353 = vadd.f32 0.0, %v1352
  %1354 = vmatmul.f32.gmra.mxu0 %v1296
  %v1355 = vpop.f32.mrf.mxu0
  %v1356 = vadd.f32 0.0, %v1355
  %1357 = vmatmul.f32.gmra.mxu0 %v1299
  %v1358 = vpop.f32.mrf.mxu0
  %v1359 = vadd.f32 0.0, %v1358
  %1360 = vmatmul.f32.gmra.mxu0 %v1302
  %v1361 = vpop.f32.mrf.mxu0
  %v1362 = vadd.f32 0.0, %v1361
  %1363 = vmatmul.f32.gmra.mxu0 %v1305
  %v1364 = vpop.f32.mrf.mxu0
  %v1365 = vadd.f32 0.0, %v1364
  %1366 = vmatmul.f32.gmra.mxu0 %v1308
  %v1367 = vpop.f32.mrf.mxu0
  %v1368 = vadd.f32 0.0, %v1367
  %1369 = vdwg.mxu0
  %v1370 = vmax.f32 %v1332, 0.0
  %v1371 = vmax.f32 %v1335, 0.0
  %v1372 = vmax.f32 %v1338, 0.0
  %v1373 = vmax.f32 %v1341, 0.0
  %v1374 = vmax.f32 %v1344, 0.0
  %v1375 = vmax.f32 %v1347, 0.0
  %v1376 = vmax.f32 %v1350, 0.0
  %v1377 = vmax.f32 %v1353, 0.0
  %v1378 = vmax.f32 %v1356, 0.0
  %v1379 = vmax.f32 %v1359, 0.0
  %v1380 = vmax.f32 %v1362, 0.0
  %v1381 = vmax.f32 %v1365, 0.0
  %v1382 = vmax.f32 %v1368, 0.0
  %vm1383 = vcmask 523264
  %v1384 = vsel %vm1383, %v1370, 0.0
  %1385 = vadd.xlane.f32.xlu0 %v1384
  %v1386 = vpop.xlane.xlu0 %1385
  %v1387 = vsel %vm1383, %v1371, 0.0
  %1388 = vadd.xlane.f32.xlu0 %v1387
  %v1389 = vpop.xlane.xlu0 %1388
  %v1390 = vsel %vm1383, %v1372, 0.0
  %1391 = vadd.xlane.f32.xlu0 %v1390
  %v1392 = vpop.xlane.xlu0 %1391
  %v1393 = vsel %vm1383, %v1373, 0.0
  %1394 = vadd.xlane.f32.xlu0 %v1393
  %v1395 = vpop.xlane.xlu0 %1394
  %v1396 = vsel %vm1383, %v1374, 0.0
  %1397 = vadd.xlane.f32.xlu0 %v1396
  %v1398 = vpop.xlane.xlu0 %1397
  %v1399 = vsel %vm1383, %v1375, 0.0
  %1400 = vadd.xlane.f32.xlu0 %v1399
  %v1401 = vpop.xlane.xlu0 %1400
  %v1402 = vsel %vm1383, %v1376, 0.0
  %1403 = vadd.xlane.f32.xlu0 %v1402
  %v1404 = vpop.xlane.xlu0 %1403
  %v1405 = vsel %vm1383, %v1377, 0.0
  %1406 = vadd.xlane.f32.xlu0 %v1405
  %v1407 = vpop.xlane.xlu0 %1406
  %v1408 = vsel %vm1383, %v1378, 0.0
  %1409 = vadd.xlane.f32.xlu0 %v1408
  %v1410 = vpop.xlane.xlu0 %1409
  %v1411 = vsel %vm1383, %v1379, 0.0
  %1412 = vadd.xlane.f32.xlu0 %v1411
  %v1413 = vpop.xlane.xlu0 %1412
  %v1414 = vsel %vm1383, %v1380, 0.0
  %1415 = vadd.xlane.f32.xlu0 %v1414
  %v1416 = vpop.xlane.xlu0 %1415
  %v1417 = vsel %vm1383, %v1381, 0.0
  %1418 = vadd.xlane.f32.xlu0 %v1417
  %v1419 = vpop.xlane.xlu0 %1418
  %v1420 = vsel %vm1383, %v1382, 0.0
  %1421 = vadd.xlane.f32.xlu0 %v1420
  %v1422 = vpop.xlane.xlu0 %1421
  %v1423 = vrot.slane %v1386, 4
  %v1424 = vadd.f32 %v1386, %v1423
  %v1425 = vrot.slane %v1424, 2
  %v1426 = vadd.f32 %v1424, %v1425
  %v1427 = vrot.slane %v1426, 1
  %v1428 = vadd.f32 %v1426, %v1427
  %v1429 = vrot.slane %v1389, 4
  %v1430 = vadd.f32 %v1389, %v1429
  %v1431 = vrot.slane %v1430, 2
  %v1432 = vadd.f32 %v1430, %v1431
  %v1433 = vrot.slane %v1432, 1
  %v1434 = vadd.f32 %v1432, %v1433
  %v1435 = vrot.slane %v1392, 4
  %v1436 = vadd.f32 %v1392, %v1435
  %v1437 = vrot.slane %v1436, 2
  %v1438 = vadd.f32 %v1436, %v1437
  %v1439 = vrot.slane %v1438, 1
  %v1440 = vadd.f32 %v1438, %v1439
  %v1441 = vrot.slane %v1395, 4
  %v1442 = vadd.f32 %v1395, %v1441
  %v1443 = vrot.slane %v1442, 2
  %v1444 = vadd.f32 %v1442, %v1443
  %v1445 = vrot.slane %v1444, 1
  %v1446 = vadd.f32 %v1444, %v1445
  %v1447 = vrot.slane %v1398, 4
  %v1448 = vadd.f32 %v1398, %v1447
  %v1449 = vrot.slane %v1448, 2
  %v1450 = vadd.f32 %v1448, %v1449
  %v1451 = vrot.slane %v1450, 1
  %v1452 = vadd.f32 %v1450, %v1451
  %v1453 = vrot.slane %v1401, 4
  %v1454 = vadd.f32 %v1401, %v1453
  %v1455 = vrot.slane %v1454, 2
  %v1456 = vadd.f32 %v1454, %v1455
  %v1457 = vrot.slane %v1456, 1
  %v1458 = vadd.f32 %v1456, %v1457
  %v1459 = vrot.slane %v1404, 4
  %v1460 = vadd.f32 %v1404, %v1459
  %v1461 = vrot.slane %v1460, 2
  %v1462 = vadd.f32 %v1460, %v1461
  %v1463 = vrot.slane %v1462, 1
  %v1464 = vadd.f32 %v1462, %v1463
  %v1465 = vrot.slane %v1407, 4
  %v1466 = vadd.f32 %v1407, %v1465
  %v1467 = vrot.slane %v1466, 2
  %v1468 = vadd.f32 %v1466, %v1467
  %v1469 = vrot.slane %v1468, 1
  %v1470 = vadd.f32 %v1468, %v1469
  %v1471 = vrot.slane %v1410, 4
  %v1472 = vadd.f32 %v1410, %v1471
  %v1473 = vrot.slane %v1472, 2
  %v1474 = vadd.f32 %v1472, %v1473
  %v1475 = vrot.slane %v1474, 1
  %v1476 = vadd.f32 %v1474, %v1475
  %v1477 = vrot.slane %v1413, 4
  %v1478 = vadd.f32 %v1413, %v1477
  %v1479 = vrot.slane %v1478, 2
  %v1480 = vadd.f32 %v1478, %v1479
  %v1481 = vrot.slane %v1480, 1
  %v1482 = vadd.f32 %v1480, %v1481
  %v1483 = vrot.slane %v1416, 4
  %v1484 = vadd.f32 %v1416, %v1483
  %v1485 = vrot.slane %v1484, 2
  %v1486 = vadd.f32 %v1484, %v1485
  %v1487 = vrot.slane %v1486, 1
  %v1488 = vadd.f32 %v1486, %v1487
  %v1489 = vrot.slane %v1419, 4
  %v1490 = vadd.f32 %v1419, %v1489
  %v1491 = vrot.slane %v1490, 2
  %v1492 = vadd.f32 %v1490, %v1491
  %v1493 = vrot.slane %v1492, 1
  %v1494 = vadd.f32 %v1492, %v1493
  %v1495 = vrot.slane %v1422, 4
  %v1496 = vadd.f32 %v1422, %v1495
  %v1497 = vrot.slane %v1496, 2
  %v1498 = vadd.f32 %v1496, %v1497
  %v1499 = vrot.slane %v1498, 1
  %v1500 = vadd.f32 %v1498, %v1499
  %v1501 = vmul.f32 %v1370, %v1370
  %v1502 = vmul.f32 %v1371, %v1371
  %v1503 = vmul.f32 %v1372, %v1372
  %v1504 = vmul.f32 %v1373, %v1373
  %v1505 = vmul.f32 %v1374, %v1374
  %v1506 = vmul.f32 %v1375, %v1375
  %v1507 = vmul.f32 %v1376, %v1376
  %v1508 = vmul.f32 %v1377, %v1377
  %v1509 = vmul.f32 %v1378, %v1378
  %v1510 = vmul.f32 %v1379, %v1379
  %v1511 = vmul.f32 %v1380, %v1380
  %v1512 = vmul.f32 %v1381, %v1381
  %v1513 = vmul.f32 %v1382, %v1382
  %v1514 = vsel %vm1383, %v1501, 0.0
  %1515 = vadd.xlane.f32.xlu0 %v1514
  %v1516 = vpop.xlane.xlu0 %1515
  %v1517 = vsel %vm1383, %v1502, 0.0
  %1518 = vadd.xlane.f32.xlu0 %v1517
  %v1519 = vpop.xlane.xlu0 %1518
  %v1520 = vsel %vm1383, %v1503, 0.0
  %1521 = vadd.xlane.f32.xlu0 %v1520
  %v1522 = vpop.xlane.xlu0 %1521
  %v1523 = vsel %vm1383, %v1504, 0.0
  %1524 = vadd.xlane.f32.xlu0 %v1523
  %v1525 = vpop.xlane.xlu0 %1524
  %v1526 = vsel %vm1383, %v1505, 0.0
  %1527 = vadd.xlane.f32.xlu0 %v1526
  %v1528 = vpop.xlane.xlu0 %1527
  %v1529 = vsel %vm1383, %v1506, 0.0
  %1530 = vadd.xlane.f32.xlu0 %v1529
  %v1531 = vpop.xlane.xlu0 %1530
  %v1532 = vsel %vm1383, %v1507, 0.0
  %1533 = vadd.xlane.f32.xlu0 %v1532
  %v1534 = vpop.xlane.xlu0 %1533
  %v1535 = vsel %vm1383, %v1508, 0.0
  %1536 = vadd.xlane.f32.xlu0 %v1535
  %v1537 = vpop.xlane.xlu0 %1536
  %v1538 = vsel %vm1383, %v1509, 0.0
  %1539 = vadd.xlane.f32.xlu0 %v1538
  %v1540 = vpop.xlane.xlu0 %1539
  %v1541 = vsel %vm1383, %v1510, 0.0
  %1542 = vadd.xlane.f32.xlu0 %v1541
  %v1543 = vpop.xlane.xlu0 %1542
  %v1544 = vsel %vm1383, %v1511, 0.0
  %1545 = vadd.xlane.f32.xlu0 %v1544
  %v1546 = vpop.xlane.xlu0 %1545
  %v1547 = vsel %vm1383, %v1512, 0.0
  %1548 = vadd.xlane.f32.xlu0 %v1547
  %v1549 = vpop.xlane.xlu0 %1548
  %v1550 = vsel %vm1383, %v1513, 0.0
  %1551 = vadd.xlane.f32.xlu0 %v1550
  %v1552 = vpop.xlane.xlu0 %1551
  %v1553 = vrot.slane %v1516, 4
  %v1554 = vadd.f32 %v1516, %v1553
  %v1555 = vrot.slane %v1554, 2
  %v1556 = vadd.f32 %v1554, %v1555
  %v1557 = vrot.slane %v1556, 1
  %v1558 = vadd.f32 %v1556, %v1557
  %v1559 = vrot.slane %v1519, 4
  %v1560 = vadd.f32 %v1519, %v1559
  %v1561 = vrot.slane %v1560, 2
  %v1562 = vadd.f32 %v1560, %v1561
  %v1563 = vrot.slane %v1562, 1
  %v1564 = vadd.f32 %v1562, %v1563
  %v1565 = vrot.slane %v1522, 4
  %v1566 = vadd.f32 %v1522, %v1565
  %v1567 = vrot.slane %v1566, 2
  %v1568 = vadd.f32 %v1566, %v1567
  %v1569 = vrot.slane %v1568, 1
  %v1570 = vadd.f32 %v1568, %v1569
  %v1571 = vrot.slane %v1525, 4
  %v1572 = vadd.f32 %v1525, %v1571
  %v1573 = vrot.slane %v1572, 2
  %v1574 = vadd.f32 %v1572, %v1573
  %v1575 = vrot.slane %v1574, 1
  %v1576 = vadd.f32 %v1574, %v1575
  %v1577 = vrot.slane %v1528, 4
  %v1578 = vadd.f32 %v1528, %v1577
  %v1579 = vrot.slane %v1578, 2
  %v1580 = vadd.f32 %v1578, %v1579
  %v1581 = vrot.slane %v1580, 1
  %v1582 = vadd.f32 %v1580, %v1581
  %v1583 = vrot.slane %v1531, 4
  %v1584 = vadd.f32 %v1531, %v1583
  %v1585 = vrot.slane %v1584, 2
  %v1586 = vadd.f32 %v1584, %v1585
  %v1587 = vrot.slane %v1586, 1
  %v1588 = vadd.f32 %v1586, %v1587
  %v1589 = vrot.slane %v1534, 4
  %v1590 = vadd.f32 %v1534, %v1589
  %v1591 = vrot.slane %v1590, 2
  %v1592 = vadd.f32 %v1590, %v1591
  %v1593 = vrot.slane %v1592, 1
  %v1594 = vadd.f32 %v1592, %v1593
  %v1595 = vrot.slane %v1537, 4
  %v1596 = vadd.f32 %v1537, %v1595
  %v1597 = vrot.slane %v1596, 2
  %v1598 = vadd.f32 %v1596, %v1597
  %v1599 = vrot.slane %v1598, 1
  %v1600 = vadd.f32 %v1598, %v1599
  %v1601 = vrot.slane %v1540, 4
  %v1602 = vadd.f32 %v1540, %v1601
  %v1603 = vrot.slane %v1602, 2
  %v1604 = vadd.f32 %v1602, %v1603
  %v1605 = vrot.slane %v1604, 1
  %v1606 = vadd.f32 %v1604, %v1605
  %v1607 = vrot.slane %v1543, 4
  %v1608 = vadd.f32 %v1543, %v1607
  %v1609 = vrot.slane %v1608, 2
  %v1610 = vadd.f32 %v1608, %v1609
  %v1611 = vrot.slane %v1610, 1
  %v1612 = vadd.f32 %v1610, %v1611
  %v1613 = vrot.slane %v1546, 4
  %v1614 = vadd.f32 %v1546, %v1613
  %v1615 = vrot.slane %v1614, 2
  %v1616 = vadd.f32 %v1614, %v1615
  %v1617 = vrot.slane %v1616, 1
  %v1618 = vadd.f32 %v1616, %v1617
  %v1619 = vrot.slane %v1549, 4
  %v1620 = vadd.f32 %v1549, %v1619
  %v1621 = vrot.slane %v1620, 2
  %v1622 = vadd.f32 %v1620, %v1621
  %v1623 = vrot.slane %v1622, 1
  %v1624 = vadd.f32 %v1622, %v1623
  %v1625 = vrot.slane %v1552, 4
  %v1626 = vadd.f32 %v1552, %v1625
  %v1627 = vrot.slane %v1626, 2
  %v1628 = vadd.f32 %v1626, %v1627
  %v1629 = vrot.slane %v1628, 1
  %v1630 = vadd.f32 %v1628, %v1629
  %v1631 = vmul.f32 %v1428, 0.001953125
  %v1632 = vmul.f32 %v1434, 0.001953125
  %v1633 = vmul.f32 %v1440, 0.001953125
  %v1634 = vmul.f32 %v1446, 0.001953125
  %v1635 = vmul.f32 %v1452, 0.001953125
  %v1636 = vmul.f32 %v1458, 0.001953125
  %v1637 = vmul.f32 %v1464, 0.001953125
  %v1638 = vmul.f32 %v1470, 0.001953125
  %v1639 = vmul.f32 %v1476, 0.001953125
  %v1640 = vmul.f32 %v1482, 0.001953125
  %v1641 = vmul.f32 %v1488, 0.001953125
  %v1642 = vmul.f32 %v1494, 0.001953125
  %v1643 = vmul.f32 %v1500, 0.001953125
  %v1644 = vmul.f32 %v1558, 0.001953125
  %v1645 = vmul.f32 %v1564, 0.001953125
  %v1646 = vmul.f32 %v1570, 0.001953125
  %v1647 = vmul.f32 %v1576, 0.001953125
  %v1648 = vmul.f32 %v1582, 0.001953125
  %v1649 = vmul.f32 %v1588, 0.001953125
  %v1650 = vmul.f32 %v1594, 0.001953125
  %v1651 = vmul.f32 %v1600, 0.001953125
  %v1652 = vmul.f32 %v1606, 0.001953125
  %v1653 = vmul.f32 %v1612, 0.001953125
  %v1654 = vmul.f32 %v1618, 0.001953125
  %v1655 = vmul.f32 %v1624, 0.001953125
  %v1656 = vmul.f32 %v1630, 0.001953125
  %v1657 = vmul.f32 %v1631, %v1631
  %v1658 = vmul.f32 %v1632, %v1632
  %v1659 = vmul.f32 %v1633, %v1633
  %v1660 = vmul.f32 %v1634, %v1634
  %v1661 = vmul.f32 %v1635, %v1635
  %v1662 = vmul.f32 %v1636, %v1636
  %v1663 = vmul.f32 %v1637, %v1637
  %v1664 = vmul.f32 %v1638, %v1638
  %v1665 = vmul.f32 %v1639, %v1639
  %v1666 = vmul.f32 %v1640, %v1640
  %v1667 = vmul.f32 %v1641, %v1641
  %v1668 = vmul.f32 %v1642, %v1642
  %v1669 = vmul.f32 %v1643, %v1643
  %v1670 = vsub.f32 %v1644, %v1657
  %v1671 = vsub.f32 %v1645, %v1658
  %v1672 = vsub.f32 %v1646, %v1659
  %v1673 = vsub.f32 %v1647, %v1660
  %v1674 = vsub.f32 %v1648, %v1661
  %v1675 = vsub.f32 %v1649, %v1662
  %v1676 = vsub.f32 %v1650, %v1663
  %v1677 = vsub.f32 %v1651, %v1664
  %v1678 = vsub.f32 %v1652, %v1665
  %v1679 = vsub.f32 %v1653, %v1666
  %v1680 = vsub.f32 %v1654, %v1667
  %v1681 = vsub.f32 %v1655, %v1668
  %v1682 = vsub.f32 %v1656, %v1669
  %v1683 = vsub.f32 %v1370, %v1631
  %v1684 = vsub.f32 %v1371, %v1632
  %v1685 = vsub.f32 %v1372, %v1633
  %v1686 = vsub.f32 %v1373, %v1634
  %v1687 = vsub.f32 %v1374, %v1635
  %v1688 = vsub.f32 %v1375, %v1636
  %v1689 = vsub.f32 %v1376, %v1637
  %v1690 = vsub.f32 %v1377, %v1638
  %v1691 = vsub.f32 %v1378, %v1639
  %v1692 = vsub.f32 %v1379, %v1640
  %v1693 = vsub.f32 %v1380, %v1641
  %v1694 = vsub.f32 %v1381, %v1642
  %v1695 = vsub.f32 %v1382, %v1643
  %v1696 = vadd.f32 %v1670, 1e-05
  %v1697 = vadd.f32 %v1671, 1e-05
  %v1698 = vadd.f32 %v1672, 1e-05
  %v1699 = vadd.f32 %v1673, 1e-05
  %v1700 = vadd.f32 %v1674, 1e-05
  %v1701 = vadd.f32 %v1675, 1e-05
  %v1702 = vadd.f32 %v1676, 1e-05
  %v1703 = vadd.f32 %v1677, 1e-05
  %v1704 = vadd.f32 %v1678, 1e-05
  %v1705 = vadd.f32 %v1679, 1e-05
  %v1706 = vadd.f32 %v1680, 1e-05
  %v1707 = vadd.f32 %v1681, 1e-05
  %v1708 = vadd.f32 %v1682, 1e-05
  %v1709 = vrsqrt.pop %v1696
  %v1710 = vmul.f32 %v1709, %v1696
  %v1711 = vmul.f32 %v1710, %v1709
  %v1712 = vmul.f32 0.5, %v1711
  %v1713 = vsub.f32 1.5, %v1712
  %v1714 = vmul.f32 %v1709, %v1713
  %vm1715 = vweird.f32 %v1696
  %vm1716 = vweird.f32 %v1709
  %vm1717 = vmor %vm1715, %vm1716
  %v1718 = vsel %vm1717, %v1709, %v1714
  %v1719 = vrsqrt.pop %v1697
  %v1720 = vmul.f32 %v1719, %v1697
  %v1721 = vmul.f32 %v1720, %v1719
  %v1722 = vmul.f32 0.5, %v1721
  %v1723 = vsub.f32 1.5, %v1722
  %v1724 = vmul.f32 %v1719, %v1723
  %vm1725 = vweird.f32 %v1697
  %vm1726 = vweird.f32 %v1719
  %vm1727 = vmor %vm1725, %vm1726
  %v1728 = vsel %vm1727, %v1719, %v1724
  %v1729 = vrsqrt.pop %v1698
  %v1730 = vmul.f32 %v1729, %v1698
  %v1731 = vmul.f32 %v1730, %v1729
  %v1732 = vmul.f32 0.5, %v1731
  %v1733 = vsub.f32 1.5, %v1732
  %v1734 = vmul.f32 %v1729, %v1733
  %vm1735 = vweird.f32 %v1698
  %vm1736 = vweird.f32 %v1729
  %vm1737 = vmor %vm1735, %vm1736
  %v1738 = vsel %vm1737, %v1729, %v1734
  %v1739 = vrsqrt.pop %v1699
  %v1740 = vmul.f32 %v1739, %v1699
  %v1741 = vmul.f32 %v1740, %v1739
  %v1742 = vmul.f32 0.5, %v1741
  %v1743 = vsub.f32 1.5, %v1742
  %v1744 = vmul.f32 %v1739, %v1743
  %vm1745 = vweird.f32 %v1699
  %vm1746 = vweird.f32 %v1739
  %vm1747 = vmor %vm1745, %vm1746
  %v1748 = vsel %vm1747, %v1739, %v1744
  %v1749 = vrsqrt.pop %v1700
  %v1750 = vmul.f32 %v1749, %v1700
  %v1751 = vmul.f32 %v1750, %v1749
  %v1752 = vmul.f32 0.5, %v1751
  %v1753 = vsub.f32 1.5, %v1752
  %v1754 = vmul.f32 %v1749, %v1753
  %vm1755 = vweird.f32 %v1700
  %vm1756 = vweird.f32 %v1749
  %vm1757 = vmor %vm1755, %vm1756
  %v1758 = vsel %vm1757, %v1749, %v1754
  %v1759 = vrsqrt.pop %v1701
  %v1760 = vmul.f32 %v1759, %v1701
  %v1761 = vmul.f32 %v1760, %v1759
  %v1762 = vmul.f32 0.5, %v1761
  %v1763 = vsub.f32 1.5, %v1762
  %v1764 = vmul.f32 %v1759, %v1763
  %vm1765 = vweird.f32 %v1701
  %vm1766 = vweird.f32 %v1759
  %vm1767 = vmor %vm1765, %vm1766
  %v1768 = vsel %vm1767, %v1759, %v1764
  %v1769 = vrsqrt.pop %v1702
  %v1770 = vmul.f32 %v1769, %v1702
  %v1771 = vmul.f32 %v1770, %v1769
  %v1772 = vmul.f32 0.5, %v1771
  %v1773 = vsub.f32 1.5, %v1772
  %v1774 = vmul.f32 %v1769, %v1773
  %vm1775 = vweird.f32 %v1702
  %vm1776 = vweird.f32 %v1769
  %vm1777 = vmor %vm1775, %vm1776
  %v1778 = vsel %vm1777, %v1769, %v1774
  %v1779 = vrsqrt.pop %v1703
  %v1780 = vmul.f32 %v1779, %v1703
  %v1781 = vmul.f32 %v1780, %v1779
  %v1782 = vmul.f32 0.5, %v1781
  %v1783 = vsub.f32 1.5, %v1782
  %v1784 = vmul.f32 %v1779, %v1783
  %vm1785 = vweird.f32 %v1703
  %vm1786 = vweird.f32 %v1779
  %vm1787 = vmor %vm1785, %vm1786
  %v1788 = vsel %vm1787, %v1779, %v1784
  %v1789 = vrsqrt.pop %v1704
  %v1790 = vmul.f32 %v1789, %v1704
  %v1791 = vmul.f32 %v1790, %v1789
  %v1792 = vmul.f32 0.5, %v1791
  %v1793 = vsub.f32 1.5, %v1792
  %v1794 = vmul.f32 %v1789, %v1793
  %vm1795 = vweird.f32 %v1704
  %vm1796 = vweird.f32 %v1789
  %vm1797 = vmor %vm1795, %vm1796
  %v1798 = vsel %vm1797, %v1789, %v1794
  %v1799 = vrsqrt.pop %v1705
  %v1800 = vmul.f32 %v1799, %v1705
  %v1801 = vmul.f32 %v1800, %v1799
  %v1802 = vmul.f32 0.5, %v1801
  %v1803 = vsub.f32 1.5, %v1802
  %v1804 = vmul.f32 %v1799, %v1803
  %vm1805 = vweird.f32 %v1705
  %vm1806 = vweird.f32 %v1799
  %vm1807 = vmor %vm1805, %vm1806
  %v1808 = vsel %vm1807, %v1799, %v1804
  %v1809 = vrsqrt.pop %v1706
  %v1810 = vmul.f32 %v1809, %v1706
  %v1811 = vmul.f32 %v1810, %v1809
  %v1812 = vmul.f32 0.5, %v1811
  %v1813 = vsub.f32 1.5, %v1812
  %v1814 = vmul.f32 %v1809, %v1813
  %vm1815 = vweird.f32 %v1706
  %vm1816 = vweird.f32 %v1809
  %vm1817 = vmor %vm1815, %vm1816
  %v1818 = vsel %vm1817, %v1809, %v1814
  %v1819 = vrsqrt.pop %v1707
  %v1820 = vmul.f32 %v1819, %v1707
  %v1821 = vmul.f32 %v1820, %v1819
  %v1822 = vmul.f32 0.5, %v1821
  %v1823 = vsub.f32 1.5, %v1822
  %v1824 = vmul.f32 %v1819, %v1823
  %vm1825 = vweird.f32 %v1707
  %vm1826 = vweird.f32 %v1819
  %vm1827 = vmor %vm1825, %vm1826
  %v1828 = vsel %vm1827, %v1819, %v1824
  %v1829 = vrsqrt.pop %v1708
  %v1830 = vmul.f32 %v1829, %v1708
  %v1831 = vmul.f32 %v1830, %v1829
  %v1832 = vmul.f32 0.5, %v1831
  %v1833 = vsub.f32 1.5, %v1832
  %v1834 = vmul.f32 %v1829, %v1833
  %vm1835 = vweird.f32 %v1708
  %vm1836 = vweird.f32 %v1829
  %vm1837 = vmor %vm1835, %vm1836
  %v1838 = vsel %vm1837, %v1829, %v1834
  %v1839 = vmul.f32 %v1683, %v1718
  %v1840 = vmul.f32 %v1684, %v1728
  %v1841 = vmul.f32 %v1685, %v1738
  %v1842 = vmul.f32 %v1686, %v1748
  %v1843 = vmul.f32 %v1687, %v1758
  %v1844 = vmul.f32 %v1688, %v1768
  %v1845 = vmul.f32 %v1689, %v1778
  %v1846 = vmul.f32 %v1690, %v1788
  %v1847 = vmul.f32 %v1691, %v1798
  %v1848 = vmul.f32 %v1692, %v1808
  %v1849 = vmul.f32 %v1693, %v1818
  %v1850 = vmul.f32 %v1694, %v1828
  %v1851 = vmul.f32 %v1695, %v1838
  %v1852 = vld [vmem:[%s4] sm:$0xff]
  %v1853 = vld [vmem:[%s4 + $0x8] sm:$0xf]
  %1854 = vrot.lane.b32.xlu0 %v77, 124
  %v1855 = vpop.permute.xlu0 %1854
  %1856 = vrot.lane.b32.xlu0 %v80, 124
  %v1857 = vpop.permute.xlu0 %1856
  %1858 = vrot.lane.b32.xlu0 %v83, 124
  %v1859 = vpop.permute.xlu0 %1858
  %1860 = vrot.lane.b32.xlu0 %v86, 124
  %v1861 = vpop.permute.xlu0 %1860
  %1862 = vrot.lane.b32.xlu0 %v89, 124
  %v1863 = vpop.permute.xlu0 %1862
  %1864 = vrot.lane.b32.xlu0 %v92, 124
  %v1865 = vpop.permute.xlu0 %1864
  %1866 = vrot.lane.b32.xlu0 %v95, 124
  %v1867 = vpop.permute.xlu0 %1866
  %1868 = vrot.lane.b32.xlu0 %v98, 124
  %v1869 = vpop.permute.xlu0 %1868
  %1870 = vrot.lane.b32.xlu0 %v101, 124
  %v1871 = vpop.permute.xlu0 %1870
  %1872 = vrot.lane.b32.xlu0 %v104, 124
  %v1873 = vpop.permute.xlu0 %1872
  %1874 = vrot.lane.b32.xlu0 %v107, 124
  %v1875 = vpop.permute.xlu0 %1874
  %1876 = vrot.lane.b32.xlu0 %v109, 124
  %v1877 = vpop.permute.xlu0 %1876
  %vm1878 = vcmask 97280
  %v1879 = vsel %vm1878, %v35, 0
  %v1881 = vsel %vm1878, %v1855, 0
  %v1883 = vsel %vm1878, %v1857, 0
  %v1885 = vsel %vm1878, %v1859, 0
  %v1887 = vsel %vm1878, %v1861, 0
  %v1889 = vsel %vm1878, %v1863, 0
  %v1891 = vsel %vm1878, %v1865, 0
  %v1893 = vsel %vm1878, %v1867, 0
  %v1895 = vsel %vm1878, %v1869, 0
  %v1897 = vsel %vm1878, %v1871, 0
  %v1899 = vsel %vm1878, %v1873, 0
  %v1901 = vsel %vm1878, %v1875, 0
  %v1903 = vsel %vm1878, %v1877, 0
  %v1906 = vsel %vm137, %v1853, 0
  %1908 = vmatpush.msra.mxu0 0.0
  %1909 = vmatpush.msra.mxu0 0.0
  %1910 = vmatpush.msra.mxu0 0.0
  %1911 = vmatpush.msra.mxu0 0.0
  %1912 = vmatpush.msra.mxu0 0.0
  %1913 = vmatpush.msra.mxu0 0.0
  %1914 = vmatpush.msra.mxu0 0.0
  %1915 = vmatpush.msra.mxu0 0.0
  %1916 = vmatpush.msra.mxu0 0.0
  %1917 = vmatpush.msra.mxu0 0.0
  %1918 = vmatpush.msra.mxu0 0.0
  %1919 = vmatpush.msra.mxu0 0.0
  %1920 = vmatpush.msra.mxu0 0.0
  %1921 = vmatpush.msra.mxu0 0.0
  %1922 = vmatpush.msra.mxu0 %v1906
  %1923 = vmatpush.msra.mxu0 %v1852
  %1924 = vmatmul.f32.gmra.mxu0 %v1879
  %v1925 = vpop.f32.mrf.mxu0
  %v1926 = vadd.f32 0.0, %v1925
  %1927 = vmatmul.f32.gmra.mxu0 %v1881
  %v1928 = vpop.f32.mrf.mxu0
  %v1929 = vadd.f32 0.0, %v1928
  %1930 = vmatmul.f32.gmra.mxu0 %v1883
  %v1931 = vpop.f32.mrf.mxu0
  %v1932 = vadd.f32 0.0, %v1931
  %1933 = vmatmul.f32.gmra.mxu0 %v1885
  %v1934 = vpop.f32.mrf.mxu0
  %v1935 = vadd.f32 0.0, %v1934
  %1936 = vmatmul.f32.gmra.mxu0 %v1887
  %v1937 = vpop.f32.mrf.mxu0
  %v1938 = vadd.f32 0.0, %v1937
  %1939 = vmatmul.f32.gmra.mxu0 %v1889
  %v1940 = vpop.f32.mrf.mxu0
  %v1941 = vadd.f32 0.0, %v1940
  %1942 = vmatmul.f32.gmra.mxu0 %v1891
  %v1943 = vpop.f32.mrf.mxu0
  %v1944 = vadd.f32 0.0, %v1943
  %1945 = vmatmul.f32.gmra.mxu0 %v1893
  %v1946 = vpop.f32.mrf.mxu0
  %v1947 = vadd.f32 0.0, %v1946
  %1948 = vmatmul.f32.gmra.mxu0 %v1895
  %v1949 = vpop.f32.mrf.mxu0
  %v1950 = vadd.f32 0.0, %v1949
  %1951 = vmatmul.f32.gmra.mxu0 %v1897
  %v1952 = vpop.f32.mrf.mxu0
  %v1953 = vadd.f32 0.0, %v1952
  %1954 = vmatmul.f32.gmra.mxu0 %v1899
  %v1955 = vpop.f32.mrf.mxu0
  %v1956 = vadd.f32 0.0, %v1955
  %1957 = vmatmul.f32.gmra.mxu0 %v1901
  %v1958 = vpop.f32.mrf.mxu0
  %v1959 = vadd.f32 0.0, %v1958
  %1960 = vmatmul.f32.gmra.mxu0 %v1903
  %v1961 = vpop.f32.mrf.mxu0
  %v1962 = vadd.f32 0.0, %v1961
  %1963 = vdwg.mxu0
  %v1964 = vtanh.pop %v1926
  %v1965 = vtanh.pop %v1929
  %v1966 = vtanh.pop %v1932
  %v1967 = vtanh.pop %v1935
  %v1968 = vtanh.pop %v1938
  %v1969 = vtanh.pop %v1941
  %v1970 = vtanh.pop %v1944
  %v1971 = vtanh.pop %v1947
  %v1972 = vtanh.pop %v1950
  %v1973 = vtanh.pop %v1953
  %v1974 = vtanh.pop %v1956
  %v1975 = vtanh.pop %v1959
  %v1976 = vtanh.pop %v1962
  %vm1977 = vcmask 818176
  %v1978 = vsel %vm1977, %v1964, 0.0
  %1979 = vadd.xlane.f32.xlu0 %v1978
  %v1980 = vpop.xlane.xlu0 %1979
  %v1981 = vsel %vm1977, %v1965, 0.0
  %1982 = vadd.xlane.f32.xlu0 %v1981
  %v1983 = vpop.xlane.xlu0 %1982
  %v1984 = vsel %vm1977, %v1966, 0.0
  %1985 = vadd.xlane.f32.xlu0 %v1984
  %v1986 = vpop.xlane.xlu0 %1985
  %v1987 = vsel %vm1977, %v1967, 0.0
  %1988 = vadd.xlane.f32.xlu0 %v1987
  %v1989 = vpop.xlane.xlu0 %1988
  %v1990 = vsel %vm1977, %v1968, 0.0
  %1991 = vadd.xlane.f32.xlu0 %v1990
  %v1992 = vpop.xlane.xlu0 %1991
  %v1993 = vsel %vm1977, %v1969, 0.0
  %1994 = vadd.xlane.f32.xlu0 %v1993
  %v1995 = vpop.xlane.xlu0 %1994
  %v1996 = vsel %vm1977, %v1970, 0.0
  %1997 = vadd.xlane.f32.xlu0 %v1996
  %v1998 = vpop.xlane.xlu0 %1997
  %v1999 = vsel %vm1977, %v1971, 0.0
  %2000 = vadd.xlane.f32.xlu0 %v1999
  %v2001 = vpop.xlane.xlu0 %2000
  %v2002 = vsel %vm1977, %v1972, 0.0
  %2003 = vadd.xlane.f32.xlu0 %v2002
  %v2004 = vpop.xlane.xlu0 %2003
  %v2005 = vsel %vm1977, %v1973, 0.0
  %2006 = vadd.xlane.f32.xlu0 %v2005
  %v2007 = vpop.xlane.xlu0 %2006
  %v2008 = vsel %vm1977, %v1974, 0.0
  %2009 = vadd.xlane.f32.xlu0 %v2008
  %v2010 = vpop.xlane.xlu0 %2009
  %v2011 = vsel %vm1977, %v1975, 0.0
  %2012 = vadd.xlane.f32.xlu0 %v2011
  %v2013 = vpop.xlane.xlu0 %2012
  %v2014 = vsel %vm1977, %v1976, 0.0
  %2015 = vadd.xlane.f32.xlu0 %v2014
  %v2016 = vpop.xlane.xlu0 %2015
  %v2017 = vrot.slane %v1980, 4
  %v2018 = vadd.f32 %v1980, %v2017
  %v2019 = vrot.slane %v2018, 2
  %v2020 = vadd.f32 %v2018, %v2019
  %v2021 = vrot.slane %v2020, 1
  %v2022 = vadd.f32 %v2020, %v2021
  %v2023 = vrot.slane %v1983, 4
  %v2024 = vadd.f32 %v1983, %v2023
  %v2025 = vrot.slane %v2024, 2
  %v2026 = vadd.f32 %v2024, %v2025
  %v2027 = vrot.slane %v2026, 1
  %v2028 = vadd.f32 %v2026, %v2027
  %v2029 = vrot.slane %v1986, 4
  %v2030 = vadd.f32 %v1986, %v2029
  %v2031 = vrot.slane %v2030, 2
  %v2032 = vadd.f32 %v2030, %v2031
  %v2033 = vrot.slane %v2032, 1
  %v2034 = vadd.f32 %v2032, %v2033
  %v2035 = vrot.slane %v1989, 4
  %v2036 = vadd.f32 %v1989, %v2035
  %v2037 = vrot.slane %v2036, 2
  %v2038 = vadd.f32 %v2036, %v2037
  %v2039 = vrot.slane %v2038, 1
  %v2040 = vadd.f32 %v2038, %v2039
  %v2041 = vrot.slane %v1992, 4
  %v2042 = vadd.f32 %v1992, %v2041
  %v2043 = vrot.slane %v2042, 2
  %v2044 = vadd.f32 %v2042, %v2043
  %v2045 = vrot.slane %v2044, 1
  %v2046 = vadd.f32 %v2044, %v2045
  %v2047 = vrot.slane %v1995, 4
  %v2048 = vadd.f32 %v1995, %v2047
  %v2049 = vrot.slane %v2048, 2
  %v2050 = vadd.f32 %v2048, %v2049
  %v2051 = vrot.slane %v2050, 1
  %v2052 = vadd.f32 %v2050, %v2051
  %v2053 = vrot.slane %v1998, 4
  %v2054 = vadd.f32 %v1998, %v2053
  %v2055 = vrot.slane %v2054, 2
  %v2056 = vadd.f32 %v2054, %v2055
  %v2057 = vrot.slane %v2056, 1
  %v2058 = vadd.f32 %v2056, %v2057
  %v2059 = vrot.slane %v2001, 4
  %v2060 = vadd.f32 %v2001, %v2059
  %v2061 = vrot.slane %v2060, 2
  %v2062 = vadd.f32 %v2060, %v2061
  %v2063 = vrot.slane %v2062, 1
  %v2064 = vadd.f32 %v2062, %v2063
  %v2065 = vrot.slane %v2004, 4
  %v2066 = vadd.f32 %v2004, %v2065
  %v2067 = vrot.slane %v2066, 2
  %v2068 = vadd.f32 %v2066, %v2067
  %v2069 = vrot.slane %v2068, 1
  %v2070 = vadd.f32 %v2068, %v2069
  %v2071 = vrot.slane %v2007, 4
  %v2072 = vadd.f32 %v2007, %v2071
  %v2073 = vrot.slane %v2072, 2
  %v2074 = vadd.f32 %v2072, %v2073
  %v2075 = vrot.slane %v2074, 1
  %v2076 = vadd.f32 %v2074, %v2075
  %v2077 = vrot.slane %v2010, 4
  %v2078 = vadd.f32 %v2010, %v2077
  %v2079 = vrot.slane %v2078, 2
  %v2080 = vadd.f32 %v2078, %v2079
  %v2081 = vrot.slane %v2080, 1
  %v2082 = vadd.f32 %v2080, %v2081
  %v2083 = vrot.slane %v2013, 4
  %v2084 = vadd.f32 %v2013, %v2083
  %v2085 = vrot.slane %v2084, 2
  %v2086 = vadd.f32 %v2084, %v2085
  %v2087 = vrot.slane %v2086, 1
  %v2088 = vadd.f32 %v2086, %v2087
  %v2089 = vrot.slane %v2016, 4
  %v2090 = vadd.f32 %v2016, %v2089
  %v2091 = vrot.slane %v2090, 2
  %v2092 = vadd.f32 %v2090, %v2091
  %v2093 = vrot.slane %v2092, 1
  %v2094 = vadd.f32 %v2092, %v2093
  %v2095 = vmul.f32 %v1964, %v1964
  %v2096 = vmul.f32 %v1965, %v1965
  %v2097 = vmul.f32 %v1966, %v1966
  %v2098 = vmul.f32 %v1967, %v1967
  %v2099 = vmul.f32 %v1968, %v1968
  %v2100 = vmul.f32 %v1969, %v1969
  %v2101 = vmul.f32 %v1970, %v1970
  %v2102 = vmul.f32 %v1971, %v1971
  %v2103 = vmul.f32 %v1972, %v1972
  %v2104 = vmul.f32 %v1973, %v1973
  %v2105 = vmul.f32 %v1974, %v1974
  %v2106 = vmul.f32 %v1975, %v1975
  %v2107 = vmul.f32 %v1976, %v1976
  %v2108 = vsel %vm1977, %v2095, 0.0
  %2109 = vadd.xlane.f32.xlu0 %v2108
  %v2110 = vpop.xlane.xlu0 %2109
  %v2111 = vsel %vm1977, %v2096, 0.0
  %2112 = vadd.xlane.f32.xlu0 %v2111
  %v2113 = vpop.xlane.xlu0 %2112
  %v2114 = vsel %vm1977, %v2097, 0.0
  %2115 = vadd.xlane.f32.xlu0 %v2114
  %v2116 = vpop.xlane.xlu0 %2115
  %v2117 = vsel %vm1977, %v2098, 0.0
  %2118 = vadd.xlane.f32.xlu0 %v2117
  %v2119 = vpop.xlane.xlu0 %2118
  %v2120 = vsel %vm1977, %v2099, 0.0
  %2121 = vadd.xlane.f32.xlu0 %v2120
  %v2122 = vpop.xlane.xlu0 %2121
  %v2123 = vsel %vm1977, %v2100, 0.0
  %2124 = vadd.xlane.f32.xlu0 %v2123
  %v2125 = vpop.xlane.xlu0 %2124
  %v2126 = vsel %vm1977, %v2101, 0.0
  %2127 = vadd.xlane.f32.xlu0 %v2126
  %v2128 = vpop.xlane.xlu0 %2127
  %v2129 = vsel %vm1977, %v2102, 0.0
  %2130 = vadd.xlane.f32.xlu0 %v2129
  %v2131 = vpop.xlane.xlu0 %2130
  %v2132 = vsel %vm1977, %v2103, 0.0
  %2133 = vadd.xlane.f32.xlu0 %v2132
  %v2134 = vpop.xlane.xlu0 %2133
  %v2135 = vsel %vm1977, %v2104, 0.0
  %2136 = vadd.xlane.f32.xlu0 %v2135
  %v2137 = vpop.xlane.xlu0 %2136
  %v2138 = vsel %vm1977, %v2105, 0.0
  %2139 = vadd.xlane.f32.xlu0 %v2138
  %v2140 = vpop.xlane.xlu0 %2139
  %v2141 = vsel %vm1977, %v2106, 0.0
  %2142 = vadd.xlane.f32.xlu0 %v2141
  %v2143 = vpop.xlane.xlu0 %2142
  %v2144 = vsel %vm1977, %v2107, 0.0
  %2145 = vadd.xlane.f32.xlu0 %v2144
  %v2146 = vpop.xlane.xlu0 %2145
  %v2147 = vrot.slane %v2110, 4
  %v2148 = vadd.f32 %v2110, %v2147
  %v2149 = vrot.slane %v2148, 2
  %v2150 = vadd.f32 %v2148, %v2149
  %v2151 = vrot.slane %v2150, 1
  %v2152 = vadd.f32 %v2150, %v2151
  %v2153 = vrot.slane %v2113, 4
  %v2154 = vadd.f32 %v2113, %v2153
  %v2155 = vrot.slane %v2154, 2
  %v2156 = vadd.f32 %v2154, %v2155
  %v2157 = vrot.slane %v2156, 1
  %v2158 = vadd.f32 %v2156, %v2157
  %v2159 = vrot.slane %v2116, 4
  %v2160 = vadd.f32 %v2116, %v2159
  %v2161 = vrot.slane %v2160, 2
  %v2162 = vadd.f32 %v2160, %v2161
  %v2163 = vrot.slane %v2162, 1
  %v2164 = vadd.f32 %v2162, %v2163
  %v2165 = vrot.slane %v2119, 4
  %v2166 = vadd.f32 %v2119, %v2165
  %v2167 = vrot.slane %v2166, 2
  %v2168 = vadd.f32 %v2166, %v2167
  %v2169 = vrot.slane %v2168, 1
  %v2170 = vadd.f32 %v2168, %v2169
  %v2171 = vrot.slane %v2122, 4
  %v2172 = vadd.f32 %v2122, %v2171
  %v2173 = vrot.slane %v2172, 2
  %v2174 = vadd.f32 %v2172, %v2173
  %v2175 = vrot.slane %v2174, 1
  %v2176 = vadd.f32 %v2174, %v2175
  %v2177 = vrot.slane %v2125, 4
  %v2178 = vadd.f32 %v2125, %v2177
  %v2179 = vrot.slane %v2178, 2
  %v2180 = vadd.f32 %v2178, %v2179
  %v2181 = vrot.slane %v2180, 1
  %v2182 = vadd.f32 %v2180, %v2181
  %v2183 = vrot.slane %v2128, 4
  %v2184 = vadd.f32 %v2128, %v2183
  %v2185 = vrot.slane %v2184, 2
  %v2186 = vadd.f32 %v2184, %v2185
  %v2187 = vrot.slane %v2186, 1
  %v2188 = vadd.f32 %v2186, %v2187
  %v2189 = vrot.slane %v2131, 4
  %v2190 = vadd.f32 %v2131, %v2189
  %v2191 = vrot.slane %v2190, 2
  %v2192 = vadd.f32 %v2190, %v2191
  %v2193 = vrot.slane %v2192, 1
  %v2194 = vadd.f32 %v2192, %v2193
  %v2195 = vrot.slane %v2134, 4
  %v2196 = vadd.f32 %v2134, %v2195
  %v2197 = vrot.slane %v2196, 2
  %v2198 = vadd.f32 %v2196, %v2197
  %v2199 = vrot.slane %v2198, 1
  %v2200 = vadd.f32 %v2198, %v2199
  %v2201 = vrot.slane %v2137, 4
  %v2202 = vadd.f32 %v2137, %v2201
  %v2203 = vrot.slane %v2202, 2
  %v2204 = vadd.f32 %v2202, %v2203
  %v2205 = vrot.slane %v2204, 1
  %v2206 = vadd.f32 %v2204, %v2205
  %v2207 = vrot.slane %v2140, 4
  %v2208 = vadd.f32 %v2140, %v2207
  %v2209 = vrot.slane %v2208, 2
  %v2210 = vadd.f32 %v2208, %v2209
  %v2211 = vrot.slane %v2210, 1
  %v2212 = vadd.f32 %v2210, %v2211
  %v2213 = vrot.slane %v2143, 4
  %v2214 = vadd.f32 %v2143, %v2213
  %v2215 = vrot.slane %v2214, 2
  %v2216 = vadd.f32 %v2214, %v2215
  %v2217 = vrot.slane %v2216, 1
  %v2218 = vadd.f32 %v2216, %v2217
  %v2219 = vrot.slane %v2146, 4
  %v2220 = vadd.f32 %v2146, %v2219
  %v2221 = vrot.slane %v2220, 2
  %v2222 = vadd.f32 %v2220, %v2221
  %v2223 = vrot.slane %v2222, 1
  %v2224 = vadd.f32 %v2222, %v2223
  %v2225 = vmul.f32 %v2022, 0.00125
  %v2226 = vmul.f32 %v2028, 0.00125
  %v2227 = vmul.f32 %v2034, 0.00125
  %v2228 = vmul.f32 %v2040, 0.00125
  %v2229 = vmul.f32 %v2046, 0.00125
  %v2230 = vmul.f32 %v2052, 0.00125
  %v2231 = vmul.f32 %v2058, 0.00125
  %v2232 = vmul.f32 %v2064, 0.00125
  %v2233 = vmul.f32 %v2070, 0.00125
  %v2234 = vmul.f32 %v2076, 0.00125
  %v2235 = vmul.f32 %v2082, 0.00125
  %v2236 = vmul.f32 %v2088, 0.00125
  %v2237 = vmul.f32 %v2094, 0.00125
  %v2238 = vmul.f32 %v2152, 0.00125
  %v2239 = vmul.f32 %v2158, 0.00125
  %v2240 = vmul.f32 %v2164, 0.00125
  %v2241 = vmul.f32 %v2170, 0.00125
  %v2242 = vmul.f32 %v2176, 0.00125
  %v2243 = vmul.f32 %v2182, 0.00125
  %v2244 = vmul.f32 %v2188, 0.00125
  %v2245 = vmul.f32 %v2194, 0.00125
  %v2246 = vmul.f32 %v2200, 0.00125
  %v2247 = vmul.f32 %v2206, 0.00125
  %v2248 = vmul.f32 %v2212, 0.00125
  %v2249 = vmul.f32 %v2218, 0.00125
  %v2250 = vmul.f32 %v2224, 0.00125
  %v2251 = vmul.f32 %v2225, %v2225
  %v2252 = vmul.f32 %v2226, %v2226
  %v2253 = vmul.f32 %v2227, %v2227
  %v2254 = vmul.f32 %v2228, %v2228
  %v2255 = vmul.f32 %v2229, %v2229
  %v2256 = vmul.f32 %v2230, %v2230
  %v2257 = vmul.f32 %v2231, %v2231
  %v2258 = vmul.f32 %v2232, %v2232
  %v2259 = vmul.f32 %v2233, %v2233
  %v2260 = vmul.f32 %v2234, %v2234
  %v2261 = vmul.f32 %v2235, %v2235
  %v2262 = vmul.f32 %v2236, %v2236
  %v2263 = vmul.f32 %v2237, %v2237
  %v2264 = vsub.f32 %v2238, %v2251
  %v2265 = vsub.f32 %v2239, %v2252
  %v2266 = vsub.f32 %v2240, %v2253
  %v2267 = vsub.f32 %v2241, %v2254
  %v2268 = vsub.f32 %v2242, %v2255
  %v2269 = vsub.f32 %v2243, %v2256
  %v2270 = vsub.f32 %v2244, %v2257
  %v2271 = vsub.f32 %v2245, %v2258
  %v2272 = vsub.f32 %v2246, %v2259
  %v2273 = vsub.f32 %v2247, %v2260
  %v2274 = vsub.f32 %v2248, %v2261
  %v2275 = vsub.f32 %v2249, %v2262
  %v2276 = vsub.f32 %v2250, %v2263
  %v2277 = vsub.f32 %v1964, %v2225
  %v2278 = vsub.f32 %v1965, %v2226
  %v2279 = vsub.f32 %v1966, %v2227
  %v2280 = vsub.f32 %v1967, %v2228
  %v2281 = vsub.f32 %v1968, %v2229
  %v2282 = vsub.f32 %v1969, %v2230
  %v2283 = vsub.f32 %v1970, %v2231
  %v2284 = vsub.f32 %v1971, %v2232
  %v2285 = vsub.f32 %v1972, %v2233
  %v2286 = vsub.f32 %v1973, %v2234
  %v2287 = vsub.f32 %v1974, %v2235
  %v2288 = vsub.f32 %v1975, %v2236
  %v2289 = vsub.f32 %v1976, %v2237
  %v2290 = vadd.f32 %v2264, 1e-05
  %v2291 = vadd.f32 %v2265, 1e-05
  %v2292 = vadd.f32 %v2266, 1e-05
  %v2293 = vadd.f32 %v2267, 1e-05
  %v2294 = vadd.f32 %v2268, 1e-05
  %v2295 = vadd.f32 %v2269, 1e-05
  %v2296 = vadd.f32 %v2270, 1e-05
  %v2297 = vadd.f32 %v2271, 1e-05
  %v2298 = vadd.f32 %v2272, 1e-05
  %v2299 = vadd.f32 %v2273, 1e-05
  %v2300 = vadd.f32 %v2274, 1e-05
  %v2301 = vadd.f32 %v2275, 1e-05
  %v2302 = vadd.f32 %v2276, 1e-05
  %v2303 = vrsqrt.pop %v2290
  %v2304 = vmul.f32 %v2303, %v2290
  %v2305 = vmul.f32 %v2304, %v2303
  %v2306 = vmul.f32 0.5, %v2305
  %v2307 = vsub.f32 1.5, %v2306
  %v2308 = vmul.f32 %v2303, %v2307
  %vm2309 = vweird.f32 %v2290
  %vm2310 = vweird.f32 %v2303
  %vm2311 = vmor %vm2309, %vm2310
  %v2312 = vsel %vm2311, %v2303, %v2308
  %v2313 = vrsqrt.pop %v2291
  %v2314 = vmul.f32 %v2313, %v2291
  %v2315 = vmul.f32 %v2314, %v2313
  %v2316 = vmul.f32 0.5, %v2315
  %v2317 = vsub.f32 1.5, %v2316
  %v2318 = vmul.f32 %v2313, %v2317
  %vm2319 = vweird.f32 %v2291
  %vm2320 = vweird.f32 %v2313
  %vm2321 = vmor %vm2319, %vm2320
  %v2322 = vsel %vm2321, %v2313, %v2318
  %v2323 = vrsqrt.pop %v2292
  %v2324 = vmul.f32 %v2323, %v2292
  %v2325 = vmul.f32 %v2324, %v2323
  %v2326 = vmul.f32 0.5, %v2325
  %v2327 = vsub.f32 1.5, %v2326
  %v2328 = vmul.f32 %v2323, %v2327
  %vm2329 = vweird.f32 %v2292
  %vm2330 = vweird.f32 %v2323
  %vm2331 = vmor %vm2329, %vm2330
  %v2332 = vsel %vm2331, %v2323, %v2328
  %v2333 = vrsqrt.pop %v2293
  %v2334 = vmul.f32 %v2333, %v2293
  %v2335 = vmul.f32 %v2334, %v2333
  %v2336 = vmul.f32 0.5, %v2335
  %v2337 = vsub.f32 1.5, %v2336
  %v2338 = vmul.f32 %v2333, %v2337
  %vm2339 = vweird.f32 %v2293
  %vm2340 = vweird.f32 %v2333
  %vm2341 = vmor %vm2339, %vm2340
  %v2342 = vsel %vm2341, %v2333, %v2338
  %v2343 = vrsqrt.pop %v2294
  %v2344 = vmul.f32 %v2343, %v2294
  %v2345 = vmul.f32 %v2344, %v2343
  %v2346 = vmul.f32 0.5, %v2345
  %v2347 = vsub.f32 1.5, %v2346
  %v2348 = vmul.f32 %v2343, %v2347
  %vm2349 = vweird.f32 %v2294
  %vm2350 = vweird.f32 %v2343
  %vm2351 = vmor %vm2349, %vm2350
  %v2352 = vsel %vm2351, %v2343, %v2348
  %v2353 = vrsqrt.pop %v2295
  %v2354 = vmul.f32 %v2353, %v2295
  %v2355 = vmul.f32 %v2354, %v2353
  %v2356 = vmul.f32 0.5, %v2355
  %v2357 = vsub.f32 1.5, %v2356
  %v2358 = vmul.f32 %v2353, %v2357
  %vm2359 = vweird.f32 %v2295
  %vm2360 = vweird.f32 %v2353
  %vm2361 = vmor %vm2359, %vm2360
  %v2362 = vsel %vm2361, %v2353, %v2358
  %v2363 = vrsqrt.pop %v2296
  %v2364 = vmul.f32 %v2363, %v2296
  %v2365 = vmul.f32 %v2364, %v2363
  %v2366 = vmul.f32 0.5, %v2365
  %v2367 = vsub.f32 1.5, %v2366
  %v2368 = vmul.f32 %v2363, %v2367
  %vm2369 = vweird.f32 %v2296
  %vm2370 = vweird.f32 %v2363
  %vm2371 = vmor %vm2369, %vm2370
  %v2372 = vsel %vm2371, %v2363, %v2368
  %v2373 = vrsqrt.pop %v2297
  %v2374 = vmul.f32 %v2373, %v2297
  %v2375 = vmul.f32 %v2374, %v2373
  %v2376 = vmul.f32 0.5, %v2375
  %v2377 = vsub.f32 1.5, %v2376
  %v2378 = vmul.f32 %v2373, %v2377
  %vm2379 = vweird.f32 %v2297
  %vm2380 = vweird.f32 %v2373
  %vm2381 = vmor %vm2379, %vm2380
  %v2382 = vsel %vm2381, %v2373, %v2378
  %v2383 = vrsqrt.pop %v2298
  %v2384 = vmul.f32 %v2383, %v2298
  %v2385 = vmul.f32 %v2384, %v2383
  %v2386 = vmul.f32 0.5, %v2385
  %v2387 = vsub.f32 1.5, %v2386
  %v2388 = vmul.f32 %v2383, %v2387
  %vm2389 = vweird.f32 %v2298
  %vm2390 = vweird.f32 %v2383
  %vm2391 = vmor %vm2389, %vm2390
  %v2392 = vsel %vm2391, %v2383, %v2388
  %v2393 = vrsqrt.pop %v2299
  %v2394 = vmul.f32 %v2393, %v2299
  %v2395 = vmul.f32 %v2394, %v2393
  %v2396 = vmul.f32 0.5, %v2395
  %v2397 = vsub.f32 1.5, %v2396
  %v2398 = vmul.f32 %v2393, %v2397
  %vm2399 = vweird.f32 %v2299
  %vm2400 = vweird.f32 %v2393
  %vm2401 = vmor %vm2399, %vm2400
  %v2402 = vsel %vm2401, %v2393, %v2398
  %v2403 = vrsqrt.pop %v2300
  %v2404 = vmul.f32 %v2403, %v2300
  %v2405 = vmul.f32 %v2404, %v2403
  %v2406 = vmul.f32 0.5, %v2405
  %v2407 = vsub.f32 1.5, %v2406
  %v2408 = vmul.f32 %v2403, %v2407
  %vm2409 = vweird.f32 %v2300
  %vm2410 = vweird.f32 %v2403
  %vm2411 = vmor %vm2409, %vm2410
  %v2412 = vsel %vm2411, %v2403, %v2408
  %v2413 = vrsqrt.pop %v2301
  %v2414 = vmul.f32 %v2413, %v2301
  %v2415 = vmul.f32 %v2414, %v2413
  %v2416 = vmul.f32 0.5, %v2415
  %v2417 = vsub.f32 1.5, %v2416
  %v2418 = vmul.f32 %v2413, %v2417
  %vm2419 = vweird.f32 %v2301
  %vm2420 = vweird.f32 %v2413
  %vm2421 = vmor %vm2419, %vm2420
  %v2422 = vsel %vm2421, %v2413, %v2418
  %v2423 = vrsqrt.pop %v2302
  %v2424 = vmul.f32 %v2423, %v2302
  %v2425 = vmul.f32 %v2424, %v2423
  %v2426 = vmul.f32 0.5, %v2425
  %v2427 = vsub.f32 1.5, %v2426
  %v2428 = vmul.f32 %v2423, %v2427
  %vm2429 = vweird.f32 %v2302
  %vm2430 = vweird.f32 %v2423
  %vm2431 = vmor %vm2429, %vm2430
  %v2432 = vsel %vm2431, %v2423, %v2428
  %v2433 = vmul.f32 %v2277, %v2312
  %v2434 = vmul.f32 %v2278, %v2322
  %v2435 = vmul.f32 %v2279, %v2332
  %v2436 = vmul.f32 %v2280, %v2342
  %v2437 = vmul.f32 %v2281, %v2352
  %v2438 = vmul.f32 %v2282, %v2362
  %v2439 = vmul.f32 %v2283, %v2372
  %v2440 = vmul.f32 %v2284, %v2382
  %v2441 = vmul.f32 %v2285, %v2392
  %v2442 = vmul.f32 %v2286, %v2402
  %v2443 = vmul.f32 %v2287, %v2412
  %v2444 = vmul.f32 %v2288, %v2422
  %v2445 = vmul.f32 %v2289, %v2432
  %v2446 = vld [vmem:[%s5] sm:$0xff]
  %v2447 = vld [vmem:[%s5 + $0x8] sm:$0xff]
  %v2448 = vld [vmem:[%s5 + $0x10] sm:$0xff]
  %v2449 = vld [vmem:[%s5 + $0x18] sm:$0xff]
  %v2450 = vld [vmem:[%s5 + $0x20] sm:$0xff]
  %v2451 = vld [vmem:[%s5 + $0x28] sm:$0xff]
  %v2452 = vld [vmem:[%s5 + $0x30] sm:$0xff]
  %v2453 = vld [vmem:[%s5 + $0x38] sm:$0xff]
  %v2454 = vld [vmem:[%s5 + $0x40] sm:$0xff]
  %v2455 = vld [vmem:[%s5 + $0x48] sm:$0xff]
  %v2456 = vld [vmem:[%s5 + $0x50] sm:$0xff]
  %v2457 = vld [vmem:[%s5 + $0x58] sm:$0xff]
  %v2458 = vld [vmem:[%s5 + $0x60] sm:$0xf]
  %v2460 = vsel %vm1977, %v2433, 0
  %v2463 = vsel %vm1977, %v2434, 0
  %v2466 = vsel %vm1977, %v2435, 0
  %v2469 = vsel %vm1977, %v2436, 0
  %v2472 = vsel %vm1977, %v2437, 0
  %v2475 = vsel %vm1977, %v2438, 0
  %v2478 = vsel %vm1977, %v2439, 0
  %v2481 = vsel %vm1977, %v2440, 0
  %v2484 = vsel %vm1977, %v2441, 0
  %v2487 = vsel %vm1977, %v2442, 0
  %v2490 = vsel %vm1977, %v2443, 0
  %v2493 = vsel %vm1977, %v2444, 0
  %v2496 = vsel %vm1977, %v2445, 0
  %v2499 = vsel %vm137, %v2458, 0
  %2501 = vmatpush.msra.mxu0 0.0
  %2502 = vmatpush.msra.mxu0 0.0
  %2503 = vmatpush.msra.mxu0 0.0
  %2504 = vmatpush.msra.mxu0 %v2499
  %2505 = vmatpush.msra.mxu0 %v2457
  %2506 = vmatpush.msra.mxu0 %v2456
  %2507 = vmatpush.msra.mxu0 %v2455
  %2508 = vmatpush.msra.mxu0 %v2454
  %2509 = vmatpush.msra.mxu0 %v2453
  %2510 = vmatpush.msra.mxu0 %v2452
  %2511 = vmatpush.msra.mxu0 %v2451
  %2512 = vmatpush.msra.mxu0 %v2450
  %2513 = vmatpush.msra.mxu0 %v2449
  %2514 = vmatpush.msra.mxu0 %v2448
  %2515 = vmatpush.msra.mxu0 %v2447
  %2516 = vmatpush.msra.mxu0 %v2446
  %2517 = vmatmul.f32.gmra.mxu0 %v2460
  %v2518 = vpop.f32.mrf.mxu0
  %v2519 = vadd.f32 0.0, %v2518
  %2520 = vmatmul.f32.gmra.mxu0 %v2463
  %v2521 = vpop.f32.mrf.mxu0
  %v2522 = vadd.f32 0.0, %v2521
  %2523 = vmatmul.f32.gmra.mxu0 %v2466
  %v2524 = vpop.f32.mrf.mxu0
  %v2525 = vadd.f32 0.0, %v2524
  %2526 = vmatmul.f32.gmra.mxu0 %v2469
  %v2527 = vpop.f32.mrf.mxu0
  %v2528 = vadd.f32 0.0, %v2527
  %2529 = vmatmul.f32.gmra.mxu0 %v2472
  %v2530 = vpop.f32.mrf.mxu0
  %v2531 = vadd.f32 0.0, %v2530
  %2532 = vmatmul.f32.gmra.mxu0 %v2475
  %v2533 = vpop.f32.mrf.mxu0
  %v2534 = vadd.f32 0.0, %v2533
  %2535 = vmatmul.f32.gmra.mxu0 %v2478
  %v2536 = vpop.f32.mrf.mxu0
  %v2537 = vadd.f32 0.0, %v2536
  %2538 = vmatmul.f32.gmra.mxu0 %v2481
  %v2539 = vpop.f32.mrf.mxu0
  %v2540 = vadd.f32 0.0, %v2539
  %2541 = vmatmul.f32.gmra.mxu0 %v2484
  %v2542 = vpop.f32.mrf.mxu0
  %v2543 = vadd.f32 0.0, %v2542
  %2544 = vmatmul.f32.gmra.mxu0 %v2487
  %v2545 = vpop.f32.mrf.mxu0
  %v2546 = vadd.f32 0.0, %v2545
  %2547 = vmatmul.f32.gmra.mxu0 %v2490
  %v2548 = vpop.f32.mrf.mxu0
  %v2549 = vadd.f32 0.0, %v2548
  %2550 = vmatmul.f32.gmra.mxu0 %v2493
  %v2551 = vpop.f32.mrf.mxu0
  %v2552 = vadd.f32 0.0, %v2551
  %2553 = vmatmul.f32.gmra.mxu0 %v2496
  %v2554 = vpop.f32.mrf.mxu0
  %v2555 = vadd.f32 0.0, %v2554
  %2556 = vdwg.mxu0
  %v2557 = vmax.f32 %v2519, 0.0
  %v2558 = vmax.f32 %v2522, 0.0
  %v2559 = vmax.f32 %v2525, 0.0
  %v2560 = vmax.f32 %v2528, 0.0
  %v2561 = vmax.f32 %v2531, 0.0
  %v2562 = vmax.f32 %v2534, 0.0
  %v2563 = vmax.f32 %v2537, 0.0
  %v2564 = vmax.f32 %v2540, 0.0
  %v2565 = vmax.f32 %v2543, 0.0
  %v2566 = vmax.f32 %v2546, 0.0
  %v2567 = vmax.f32 %v2549, 0.0
  %v2568 = vmax.f32 %v2552, 0.0
  %v2569 = vmax.f32 %v2555, 0.0
  %v2570 = vsel %vm210, %v2557, 0.0
  %2571 = vadd.xlane.f32.xlu0 %v2570
  %v2572 = vpop.xlane.xlu0 %2571
  %v2573 = vsel %vm210, %v2558, 0.0
  %2574 = vadd.xlane.f32.xlu0 %v2573
  %v2575 = vpop.xlane.xlu0 %2574
  %v2576 = vsel %vm210, %v2559, 0.0
  %2577 = vadd.xlane.f32.xlu0 %v2576
  %v2578 = vpop.xlane.xlu0 %2577
  %v2579 = vsel %vm210, %v2560, 0.0
  %2580 = vadd.xlane.f32.xlu0 %v2579
  %v2581 = vpop.xlane.xlu0 %2580
  %v2582 = vsel %vm210, %v2561, 0.0
  %2583 = vadd.xlane.f32.xlu0 %v2582
  %v2584 = vpop.xlane.xlu0 %2583
  %v2585 = vsel %vm210, %v2562, 0.0
  %2586 = vadd.xlane.f32.xlu0 %v2585
  %v2587 = vpop.xlane.xlu0 %2586
  %v2588 = vsel %vm210, %v2563, 0.0
  %2589 = vadd.xlane.f32.xlu0 %v2588
  %v2590 = vpop.xlane.xlu0 %2589
  %v2591 = vsel %vm210, %v2564, 0.0
  %2592 = vadd.xlane.f32.xlu0 %v2591
  %v2593 = vpop.xlane.xlu0 %2592
  %v2594 = vsel %vm210, %v2565, 0.0
  %2595 = vadd.xlane.f32.xlu0 %v2594
  %v2596 = vpop.xlane.xlu0 %2595
  %v2597 = vsel %vm210, %v2566, 0.0
  %2598 = vadd.xlane.f32.xlu0 %v2597
  %v2599 = vpop.xlane.xlu0 %2598
  %v2600 = vsel %vm210, %v2567, 0.0
  %2601 = vadd.xlane.f32.xlu0 %v2600
  %v2602 = vpop.xlane.xlu0 %2601
  %v2603 = vsel %vm210, %v2568, 0.0
  %2604 = vadd.xlane.f32.xlu0 %v2603
  %v2605 = vpop.xlane.xlu0 %2604
  %v2606 = vsel %vm210, %v2569, 0.0
  %2607 = vadd.xlane.f32.xlu0 %v2606
  %v2608 = vpop.xlane.xlu0 %2607
  %v2609 = vrot.slane %v2572, 4
  %v2610 = vadd.f32 %v2572, %v2609
  %v2611 = vrot.slane %v2610, 2
  %v2612 = vadd.f32 %v2610, %v2611
  %v2613 = vrot.slane %v2612, 1
  %v2614 = vadd.f32 %v2612, %v2613
  %v2615 = vrot.slane %v2575, 4
  %v2616 = vadd.f32 %v2575, %v2615
  %v2617 = vrot.slane %v2616, 2
  %v2618 = vadd.f32 %v2616, %v2617
  %v2619 = vrot.slane %v2618, 1
  %v2620 = vadd.f32 %v2618, %v2619
  %v2621 = vrot.slane %v2578, 4
  %v2622 = vadd.f32 %v2578, %v2621
  %v2623 = vrot.slane %v2622, 2
  %v2624 = vadd.f32 %v2622, %v2623
  %v2625 = vrot.slane %v2624, 1
  %v2626 = vadd.f32 %v2624, %v2625
  %v2627 = vrot.slane %v2581, 4
  %v2628 = vadd.f32 %v2581, %v2627
  %v2629 = vrot.slane %v2628, 2
  %v2630 = vadd.f32 %v2628, %v2629
  %v2631 = vrot.slane %v2630, 1
  %v2632 = vadd.f32 %v2630, %v2631
  %v2633 = vrot.slane %v2584, 4
  %v2634 = vadd.f32 %v2584, %v2633
  %v2635 = vrot.slane %v2634, 2
  %v2636 = vadd.f32 %v2634, %v2635
  %v2637 = vrot.slane %v2636, 1
  %v2638 = vadd.f32 %v2636, %v2637
  %v2639 = vrot.slane %v2587, 4
  %v2640 = vadd.f32 %v2587, %v2639
  %v2641 = vrot.slane %v2640, 2
  %v2642 = vadd.f32 %v2640, %v2641
  %v2643 = vrot.slane %v2642, 1
  %v2644 = vadd.f32 %v2642, %v2643
  %v2645 = vrot.slane %v2590, 4
  %v2646 = vadd.f32 %v2590, %v2645
  %v2647 = vrot.slane %v2646, 2
  %v2648 = vadd.f32 %v2646, %v2647
  %v2649 = vrot.slane %v2648, 1
  %v2650 = vadd.f32 %v2648, %v2649
  %v2651 = vrot.slane %v2593, 4
  %v2652 = vadd.f32 %v2593, %v2651
  %v2653 = vrot.slane %v2652, 2
  %v2654 = vadd.f32 %v2652, %v2653
  %v2655 = vrot.slane %v2654, 1
  %v2656 = vadd.f32 %v2654, %v2655
  %v2657 = vrot.slane %v2596, 4
  %v2658 = vadd.f32 %v2596, %v2657
  %v2659 = vrot.slane %v2658, 2
  %v2660 = vadd.f32 %v2658, %v2659
  %v2661 = vrot.slane %v2660, 1
  %v2662 = vadd.f32 %v2660, %v2661
  %v2663 = vrot.slane %v2599, 4
  %v2664 = vadd.f32 %v2599, %v2663
  %v2665 = vrot.slane %v2664, 2
  %v2666 = vadd.f32 %v2664, %v2665
  %v2667 = vrot.slane %v2666, 1
  %v2668 = vadd.f32 %v2666, %v2667
  %v2669 = vrot.slane %v2602, 4
  %v2670 = vadd.f32 %v2602, %v2669
  %v2671 = vrot.slane %v2670, 2
  %v2672 = vadd.f32 %v2670, %v2671
  %v2673 = vrot.slane %v2672, 1
  %v2674 = vadd.f32 %v2672, %v2673
  %v2675 = vrot.slane %v2605, 4
  %v2676 = vadd.f32 %v2605, %v2675
  %v2677 = vrot.slane %v2676, 2
  %v2678 = vadd.f32 %v2676, %v2677
  %v2679 = vrot.slane %v2678, 1
  %v2680 = vadd.f32 %v2678, %v2679
  %v2681 = vrot.slane %v2608, 4
  %v2682 = vadd.f32 %v2608, %v2681
  %v2683 = vrot.slane %v2682, 2
  %v2684 = vadd.f32 %v2682, %v2683
  %v2685 = vrot.slane %v2684, 1
  %v2686 = vadd.f32 %v2684, %v2685
  %v2687 = vmul.f32 %v2557, %v2557
  %v2688 = vmul.f32 %v2558, %v2558
  %v2689 = vmul.f32 %v2559, %v2559
  %v2690 = vmul.f32 %v2560, %v2560
  %v2691 = vmul.f32 %v2561, %v2561
  %v2692 = vmul.f32 %v2562, %v2562
  %v2693 = vmul.f32 %v2563, %v2563
  %v2694 = vmul.f32 %v2564, %v2564
  %v2695 = vmul.f32 %v2565, %v2565
  %v2696 = vmul.f32 %v2566, %v2566
  %v2697 = vmul.f32 %v2567, %v2567
  %v2698 = vmul.f32 %v2568, %v2568
  %v2699 = vmul.f32 %v2569, %v2569
  %v2700 = vsel %vm210, %v2687, 0.0
  %2701 = vadd.xlane.f32.xlu0 %v2700
  %v2702 = vpop.xlane.xlu0 %2701
  %v2703 = vsel %vm210, %v2688, 0.0
  %2704 = vadd.xlane.f32.xlu0 %v2703
  %v2705 = vpop.xlane.xlu0 %2704
  %v2706 = vsel %vm210, %v2689, 0.0
  %2707 = vadd.xlane.f32.xlu0 %v2706
  %v2708 = vpop.xlane.xlu0 %2707
  %v2709 = vsel %vm210, %v2690, 0.0
  %2710 = vadd.xlane.f32.xlu0 %v2709
  %v2711 = vpop.xlane.xlu0 %2710
  %v2712 = vsel %vm210, %v2691, 0.0
  %2713 = vadd.xlane.f32.xlu0 %v2712
  %v2714 = vpop.xlane.xlu0 %2713
  %v2715 = vsel %vm210, %v2692, 0.0
  %2716 = vadd.xlane.f32.xlu0 %v2715
  %v2717 = vpop.xlane.xlu0 %2716
  %v2718 = vsel %vm210, %v2693, 0.0
  %2719 = vadd.xlane.f32.xlu0 %v2718
  %v2720 = vpop.xlane.xlu0 %2719
  %v2721 = vsel %vm210, %v2694, 0.0
  %2722 = vadd.xlane.f32.xlu0 %v2721
  %v2723 = vpop.xlane.xlu0 %2722
  %v2724 = vsel %vm210, %v2695, 0.0
  %2725 = vadd.xlane.f32.xlu0 %v2724
  %v2726 = vpop.xlane.xlu0 %2725
  %v2727 = vsel %vm210, %v2696, 0.0
  %2728 = vadd.xlane.f32.xlu0 %v2727
  %v2729 = vpop.xlane.xlu0 %2728
  %v2730 = vsel %vm210, %v2697, 0.0
  %2731 = vadd.xlane.f32.xlu0 %v2730
  %v2732 = vpop.xlane.xlu0 %2731
  %v2733 = vsel %vm210, %v2698, 0.0
  %2734 = vadd.xlane.f32.xlu0 %v2733
  %v2735 = vpop.xlane.xlu0 %2734
  %v2736 = vsel %vm210, %v2699, 0.0
  %2737 = vadd.xlane.f32.xlu0 %v2736
  %v2738 = vpop.xlane.xlu0 %2737
  %v2739 = vrot.slane %v2702, 4
  %v2740 = vadd.f32 %v2702, %v2739
  %v2741 = vrot.slane %v2740, 2
  %v2742 = vadd.f32 %v2740, %v2741
  %v2743 = vrot.slane %v2742, 1
  %v2744 = vadd.f32 %v2742, %v2743
  %v2745 = vrot.slane %v2705, 4
  %v2746 = vadd.f32 %v2705, %v2745
  %v2747 = vrot.slane %v2746, 2
  %v2748 = vadd.f32 %v2746, %v2747
  %v2749 = vrot.slane %v2748, 1
  %v2750 = vadd.f32 %v2748, %v2749
  %v2751 = vrot.slane %v2708, 4
  %v2752 = vadd.f32 %v2708, %v2751
  %v2753 = vrot.slane %v2752, 2
  %v2754 = vadd.f32 %v2752, %v2753
  %v2755 = vrot.slane %v2754, 1
  %v2756 = vadd.f32 %v2754, %v2755
  %v2757 = vrot.slane %v2711, 4
  %v2758 = vadd.f32 %v2711, %v2757
  %v2759 = vrot.slane %v2758, 2
  %v2760 = vadd.f32 %v2758, %v2759
  %v2761 = vrot.slane %v2760, 1
  %v2762 = vadd.f32 %v2760, %v2761
  %v2763 = vrot.slane %v2714, 4
  %v2764 = vadd.f32 %v2714, %v2763
  %v2765 = vrot.slane %v2764, 2
  %v2766 = vadd.f32 %v2764, %v2765
  %v2767 = vrot.slane %v2766, 1
  %v2768 = vadd.f32 %v2766, %v2767
  %v2769 = vrot.slane %v2717, 4
  %v2770 = vadd.f32 %v2717, %v2769
  %v2771 = vrot.slane %v2770, 2
  %v2772 = vadd.f32 %v2770, %v2771
  %v2773 = vrot.slane %v2772, 1
  %v2774 = vadd.f32 %v2772, %v2773
  %v2775 = vrot.slane %v2720, 4
  %v2776 = vadd.f32 %v2720, %v2775
  %v2777 = vrot.slane %v2776, 2
  %v2778 = vadd.f32 %v2776, %v2777
  %v2779 = vrot.slane %v2778, 1
  %v2780 = vadd.f32 %v2778, %v2779
  %v2781 = vrot.slane %v2723, 4
  %v2782 = vadd.f32 %v2723, %v2781
  %v2783 = vrot.slane %v2782, 2
  %v2784 = vadd.f32 %v2782, %v2783
  %v2785 = vrot.slane %v2784, 1
  %v2786 = vadd.f32 %v2784, %v2785
  %v2787 = vrot.slane %v2726, 4
  %v2788 = vadd.f32 %v2726, %v2787
  %v2789 = vrot.slane %v2788, 2
  %v2790 = vadd.f32 %v2788, %v2789
  %v2791 = vrot.slane %v2790, 1
  %v2792 = vadd.f32 %v2790, %v2791
  %v2793 = vrot.slane %v2729, 4
  %v2794 = vadd.f32 %v2729, %v2793
  %v2795 = vrot.slane %v2794, 2
  %v2796 = vadd.f32 %v2794, %v2795
  %v2797 = vrot.slane %v2796, 1
  %v2798 = vadd.f32 %v2796, %v2797
  %v2799 = vrot.slane %v2732, 4
  %v2800 = vadd.f32 %v2732, %v2799
  %v2801 = vrot.slane %v2800, 2
  %v2802 = vadd.f32 %v2800, %v2801
  %v2803 = vrot.slane %v2802, 1
  %v2804 = vadd.f32 %v2802, %v2803
  %v2805 = vrot.slane %v2735, 4
  %v2806 = vadd.f32 %v2735, %v2805
  %v2807 = vrot.slane %v2806, 2
  %v2808 = vadd.f32 %v2806, %v2807
  %v2809 = vrot.slane %v2808, 1
  %v2810 = vadd.f32 %v2808, %v2809
  %v2811 = vrot.slane %v2738, 4
  %v2812 = vadd.f32 %v2738, %v2811
  %v2813 = vrot.slane %v2812, 2
  %v2814 = vadd.f32 %v2812, %v2813
  %v2815 = vrot.slane %v2814, 1
  %v2816 = vadd.f32 %v2814, %v2815
  %v2817 = vmul.f32 %v2614, 0.0025
  %v2818 = vmul.f32 %v2620, 0.0025
  %v2819 = vmul.f32 %v2626, 0.0025
  %v2820 = vmul.f32 %v2632, 0.0025
  %v2821 = vmul.f32 %v2638, 0.0025
  %v2822 = vmul.f32 %v2644, 0.0025
  %v2823 = vmul.f32 %v2650, 0.0025
  %v2824 = vmul.f32 %v2656, 0.0025
  %v2825 = vmul.f32 %v2662, 0.0025
  %v2826 = vmul.f32 %v2668, 0.0025
  %v2827 = vmul.f32 %v2674, 0.0025
  %v2828 = vmul.f32 %v2680, 0.0025
  %v2829 = vmul.f32 %v2686, 0.0025
  %v2830 = vmul.f32 %v2744, 0.0025
  %v2831 = vmul.f32 %v2750, 0.0025
  %v2832 = vmul.f32 %v2756, 0.0025
  %v2833 = vmul.f32 %v2762, 0.0025
  %v2834 = vmul.f32 %v2768, 0.0025
  %v2835 = vmul.f32 %v2774, 0.0025
  %v2836 = vmul.f32 %v2780, 0.0025
  %v2837 = vmul.f32 %v2786, 0.0025
  %v2838 = vmul.f32 %v2792, 0.0025
  %v2839 = vmul.f32 %v2798, 0.0025
  %v2840 = vmul.f32 %v2804, 0.0025
  %v2841 = vmul.f32 %v2810, 0.0025
  %v2842 = vmul.f32 %v2816, 0.0025
  %v2843 = vmul.f32 %v2817, %v2817
  %v2844 = vmul.f32 %v2818, %v2818
  %v2845 = vmul.f32 %v2819, %v2819
  %v2846 = vmul.f32 %v2820, %v2820
  %v2847 = vmul.f32 %v2821, %v2821
  %v2848 = vmul.f32 %v2822, %v2822
  %v2849 = vmul.f32 %v2823, %v2823
  %v2850 = vmul.f32 %v2824, %v2824
  %v2851 = vmul.f32 %v2825, %v2825
  %v2852 = vmul.f32 %v2826, %v2826
  %v2853 = vmul.f32 %v2827, %v2827
  %v2854 = vmul.f32 %v2828, %v2828
  %v2855 = vmul.f32 %v2829, %v2829
  %v2856 = vsub.f32 %v2830, %v2843
  %v2857 = vsub.f32 %v2831, %v2844
  %v2858 = vsub.f32 %v2832, %v2845
  %v2859 = vsub.f32 %v2833, %v2846
  %v2860 = vsub.f32 %v2834, %v2847
  %v2861 = vsub.f32 %v2835, %v2848
  %v2862 = vsub.f32 %v2836, %v2849
  %v2863 = vsub.f32 %v2837, %v2850
  %v2864 = vsub.f32 %v2838, %v2851
  %v2865 = vsub.f32 %v2839, %v2852
  %v2866 = vsub.f32 %v2840, %v2853
  %v2867 = vsub.f32 %v2841, %v2854
  %v2868 = vsub.f32 %v2842, %v2855
  %v2869 = vsub.f32 %v2557, %v2817
  %v2870 = vsub.f32 %v2558, %v2818
  %v2871 = vsub.f32 %v2559, %v2819
  %v2872 = vsub.f32 %v2560, %v2820
  %v2873 = vsub.f32 %v2561, %v2821
  %v2874 = vsub.f32 %v2562, %v2822
  %v2875 = vsub.f32 %v2563, %v2823
  %v2876 = vsub.f32 %v2564, %v2824
  %v2877 = vsub.f32 %v2565, %v2825
  %v2878 = vsub.f32 %v2566, %v2826
  %v2879 = vsub.f32 %v2567, %v2827
  %v2880 = vsub.f32 %v2568, %v2828
  %v2881 = vsub.f32 %v2569, %v2829
  %v2882 = vadd.f32 %v2856, 1e-05
  %v2883 = vadd.f32 %v2857, 1e-05
  %v2884 = vadd.f32 %v2858, 1e-05
  %v2885 = vadd.f32 %v2859, 1e-05
  %v2886 = vadd.f32 %v2860, 1e-05
  %v2887 = vadd.f32 %v2861, 1e-05
  %v2888 = vadd.f32 %v2862, 1e-05
  %v2889 = vadd.f32 %v2863, 1e-05
  %v2890 = vadd.f32 %v2864, 1e-05
  %v2891 = vadd.f32 %v2865, 1e-05
  %v2892 = vadd.f32 %v2866, 1e-05
  %v2893 = vadd.f32 %v2867, 1e-05
  %v2894 = vadd.f32 %v2868, 1e-05
  %v2895 = vrsqrt.pop %v2882
  %v2896 = vmul.f32 %v2895, %v2882
  %v2897 = vmul.f32 %v2896, %v2895
  %v2898 = vmul.f32 0.5, %v2897
  %v2899 = vsub.f32 1.5, %v2898
  %v2900 = vmul.f32 %v2895, %v2899
  %vm2901 = vweird.f32 %v2882
  %vm2902 = vweird.f32 %v2895
  %vm2903 = vmor %vm2901, %vm2902
  %v2904 = vsel %vm2903, %v2895, %v2900
  %v2905 = vrsqrt.pop %v2883
  %v2906 = vmul.f32 %v2905, %v2883
  %v2907 = vmul.f32 %v2906, %v2905
  %v2908 = vmul.f32 0.5, %v2907
  %v2909 = vsub.f32 1.5, %v2908
  %v2910 = vmul.f32 %v2905, %v2909
  %vm2911 = vweird.f32 %v2883
  %vm2912 = vweird.f32 %v2905
  %vm2913 = vmor %vm2911, %vm2912
  %v2914 = vsel %vm2913, %v2905, %v2910
  %v2915 = vrsqrt.pop %v2884
  %v2916 = vmul.f32 %v2915, %v2884
  %v2917 = vmul.f32 %v2916, %v2915
  %v2918 = vmul.f32 0.5, %v2917
  %v2919 = vsub.f32 1.5, %v2918
  %v2920 = vmul.f32 %v2915, %v2919
  %vm2921 = vweird.f32 %v2884
  %vm2922 = vweird.f32 %v2915
  %vm2923 = vmor %vm2921, %vm2922
  %v2924 = vsel %vm2923, %v2915, %v2920
  %v2925 = vrsqrt.pop %v2885
  %v2926 = vmul.f32 %v2925, %v2885
  %v2927 = vmul.f32 %v2926, %v2925
  %v2928 = vmul.f32 0.5, %v2927
  %v2929 = vsub.f32 1.5, %v2928
  %v2930 = vmul.f32 %v2925, %v2929
  %vm2931 = vweird.f32 %v2885
  %vm2932 = vweird.f32 %v2925
  %vm2933 = vmor %vm2931, %vm2932
  %v2934 = vsel %vm2933, %v2925, %v2930
  %v2935 = vrsqrt.pop %v2886
  %v2936 = vmul.f32 %v2935, %v2886
  %v2937 = vmul.f32 %v2936, %v2935
  %v2938 = vmul.f32 0.5, %v2937
  %v2939 = vsub.f32 1.5, %v2938
  %v2940 = vmul.f32 %v2935, %v2939
  %vm2941 = vweird.f32 %v2886
  %vm2942 = vweird.f32 %v2935
  %vm2943 = vmor %vm2941, %vm2942
  %v2944 = vsel %vm2943, %v2935, %v2940
  %v2945 = vrsqrt.pop %v2887
  %v2946 = vmul.f32 %v2945, %v2887
  %v2947 = vmul.f32 %v2946, %v2945
  %v2948 = vmul.f32 0.5, %v2947
  %v2949 = vsub.f32 1.5, %v2948
  %v2950 = vmul.f32 %v2945, %v2949
  %vm2951 = vweird.f32 %v2887
  %vm2952 = vweird.f32 %v2945
  %vm2953 = vmor %vm2951, %vm2952
  %v2954 = vsel %vm2953, %v2945, %v2950
  %v2955 = vrsqrt.pop %v2888
  %v2956 = vmul.f32 %v2955, %v2888
  %v2957 = vmul.f32 %v2956, %v2955
  %v2958 = vmul.f32 0.5, %v2957
  %v2959 = vsub.f32 1.5, %v2958
  %v2960 = vmul.f32 %v2955, %v2959
  %vm2961 = vweird.f32 %v2888
  %vm2962 = vweird.f32 %v2955
  %vm2963 = vmor %vm2961, %vm2962
  %v2964 = vsel %vm2963, %v2955, %v2960
  %v2965 = vrsqrt.pop %v2889
  %v2966 = vmul.f32 %v2965, %v2889
  %v2967 = vmul.f32 %v2966, %v2965
  %v2968 = vmul.f32 0.5, %v2967
  %v2969 = vsub.f32 1.5, %v2968
  %v2970 = vmul.f32 %v2965, %v2969
  %vm2971 = vweird.f32 %v2889
  %vm2972 = vweird.f32 %v2965
  %vm2973 = vmor %vm2971, %vm2972
  %v2974 = vsel %vm2973, %v2965, %v2970
  %v2975 = vrsqrt.pop %v2890
  %v2976 = vmul.f32 %v2975, %v2890
  %v2977 = vmul.f32 %v2976, %v2975
  %v2978 = vmul.f32 0.5, %v2977
  %v2979 = vsub.f32 1.5, %v2978
  %v2980 = vmul.f32 %v2975, %v2979
  %vm2981 = vweird.f32 %v2890
  %vm2982 = vweird.f32 %v2975
  %vm2983 = vmor %vm2981, %vm2982
  %v2984 = vsel %vm2983, %v2975, %v2980
  %v2985 = vrsqrt.pop %v2891
  %v2986 = vmul.f32 %v2985, %v2891
  %v2987 = vmul.f32 %v2986, %v2985
  %v2988 = vmul.f32 0.5, %v2987
  %v2989 = vsub.f32 1.5, %v2988
  %v2990 = vmul.f32 %v2985, %v2989
  %vm2991 = vweird.f32 %v2891
  %vm2992 = vweird.f32 %v2985
  %vm2993 = vmor %vm2991, %vm2992
  %v2994 = vsel %vm2993, %v2985, %v2990
  %v2995 = vrsqrt.pop %v2892
  %v2996 = vmul.f32 %v2995, %v2892
  %v2997 = vmul.f32 %v2996, %v2995
  %v2998 = vmul.f32 0.5, %v2997
  %v2999 = vsub.f32 1.5, %v2998
  %v3000 = vmul.f32 %v2995, %v2999
  %vm3001 = vweird.f32 %v2892
  %vm3002 = vweird.f32 %v2995
  %vm3003 = vmor %vm3001, %vm3002
  %v3004 = vsel %vm3003, %v2995, %v3000
  %v3005 = vrsqrt.pop %v2893
  %v3006 = vmul.f32 %v3005, %v2893
  %v3007 = vmul.f32 %v3006, %v3005
  %v3008 = vmul.f32 0.5, %v3007
  %v3009 = vsub.f32 1.5, %v3008
  %v3010 = vmul.f32 %v3005, %v3009
  %vm3011 = vweird.f32 %v2893
  %vm3012 = vweird.f32 %v3005
  %vm3013 = vmor %vm3011, %vm3012
  %v3014 = vsel %vm3013, %v3005, %v3010
  %v3015 = vrsqrt.pop %v2894
  %v3016 = vmul.f32 %v3015, %v2894
  %v3017 = vmul.f32 %v3016, %v3015
  %v3018 = vmul.f32 0.5, %v3017
  %v3019 = vsub.f32 1.5, %v3018
  %v3020 = vmul.f32 %v3015, %v3019
  %vm3021 = vweird.f32 %v2894
  %vm3022 = vweird.f32 %v3015
  %vm3023 = vmor %vm3021, %vm3022
  %v3024 = vsel %vm3023, %v3015, %v3020
  %v3025 = vmul.f32 %v2869, %v2904
  %v3026 = vmul.f32 %v2870, %v2914
  %v3027 = vmul.f32 %v2871, %v2924
  %v3028 = vmul.f32 %v2872, %v2934
  %v3029 = vmul.f32 %v2873, %v2944
  %v3030 = vmul.f32 %v2874, %v2954
  %v3031 = vmul.f32 %v2875, %v2964
  %v3032 = vmul.f32 %v2876, %v2974
  %v3033 = vmul.f32 %v2877, %v2984
  %v3034 = vmul.f32 %v2878, %v2994
  %v3035 = vmul.f32 %v2879, %v3004
  %v3036 = vmul.f32 %v2880, %v3014
  %v3037 = vmul.f32 %v2881, %v3024
  %v3038 = vld [vmem:[%s6] sm:$0xff]
  %v3039 = vld [vmem:[%s6 + $0x8] sm:$0xff]
  %v3040 = vld [vmem:[%s6 + $0x10] sm:$0xff]
  %v3041 = vld [vmem:[%s6 + $0x18] sm:$0xff]
  %v3042 = vld [vmem:[%s6 + $0x20] sm:$0xff]
  %v3043 = vld [vmem:[%s6 + $0x28] sm:$0xff]
  %v3044 = vld [vmem:[%s6 + $0x30] sm:$0x3]
  %v3046 = vsel %vm210, %v3025, 0
  %v3049 = vsel %vm210, %v3026, 0
  %v3052 = vsel %vm210, %v3027, 0
  %v3055 = vsel %vm210, %v3028, 0
  %v3058 = vsel %vm210, %v3029, 0
  %v3061 = vsel %vm210, %v3030, 0
  %v3064 = vsel %vm210, %v3031, 0
  %v3067 = vsel %vm210, %v3032, 0
  %v3070 = vsel %vm210, %v3033, 0
  %v3073 = vsel %vm210, %v3034, 0
  %v3076 = vsel %vm210, %v3035, 0
  %v3079 = vsel %vm210, %v3036, 0
  %v3082 = vsel %vm210, %v3037, 0
  %v3085 = vsel %vm725, %v3044, 0
  %3087 = vmatpush.msra.mxu0 0.0
  %3088 = vmatpush.msra.mxu0 0.0
  %3089 = vmatpush.msra.mxu0 0.0
  %3090 = vmatpush.msra.mxu0 0.0
  %3091 = vmatpush.msra.mxu0 0.0
  %3092 = vmatpush.msra.mxu0 0.0
  %3093 = vmatpush.msra.mxu0 0.0
  %3094 = vmatpush.msra.mxu0 0.0
  %3095 = vmatpush.msra.mxu0 0.0
  %3096 = vmatpush.msra.mxu0 %v3085
  %3097 = vmatpush.msra.mxu0 %v3043
  %3098 = vmatpush.msra.mxu0 %v3042
  %3099 = vmatpush.msra.mxu0 %v3041
  %3100 = vmatpush.msra.mxu0 %v3040
  %3101 = vmatpush.msra.mxu0 %v3039
  %3102 = vmatpush.msra.mxu0 %v3038
  %3103 = vmatmul.f32.gmra.mxu0 %v3046
  %v3104 = vpop.f32.mrf.mxu0
  %v3105 = vadd.f32 0.0, %v3104
  %3106 = vmatmul.f32.gmra.mxu0 %v3049
  %v3107 = vpop.f32.mrf.mxu0
  %v3108 = vadd.f32 0.0, %v3107
  %3109 = vmatmul.f32.gmra.mxu0 %v3052
  %v3110 = vpop.f32.mrf.mxu0
  %v3111 = vadd.f32 0.0, %v3110
  %3112 = vmatmul.f32.gmra.mxu0 %v3055
  %v3113 = vpop.f32.mrf.mxu0
  %v3114 = vadd.f32 0.0, %v3113
  %3115 = vmatmul.f32.gmra.mxu0 %v3058
  %v3116 = vpop.f32.mrf.mxu0
  %v3117 = vadd.f32 0.0, %v3116
  %3118 = vmatmul.f32.gmra.mxu0 %v3061
  %v3119 = vpop.f32.mrf.mxu0
  %v3120 = vadd.f32 0.0, %v3119
  %3121 = vmatmul.f32.gmra.mxu0 %v3064
  %v3122 = vpop.f32.mrf.mxu0
  %v3123 = vadd.f32 0.0, %v3122
  %3124 = vmatmul.f32.gmra.mxu0 %v3067
  %v3125 = vpop.f32.mrf.mxu0
  %v3126 = vadd.f32 0.0, %v3125
  %3127 = vmatmul.f32.gmra.mxu0 %v3070
  %v3128 = vpop.f32.mrf.mxu0
  %v3129 = vadd.f32 0.0, %v3128
  %3130 = vmatmul.f32.gmra.mxu0 %v3073
  %v3131 = vpop.f32.mrf.mxu0
  %v3132 = vadd.f32 0.0, %v3131
  %3133 = vmatmul.f32.gmra.mxu0 %v3076
  %v3134 = vpop.f32.mrf.mxu0
  %v3135 = vadd.f32 0.0, %v3134
  %3136 = vmatmul.f32.gmra.mxu0 %v3079
  %v3137 = vpop.f32.mrf.mxu0
  %v3138 = vadd.f32 0.0, %v3137
  %3139 = vmatmul.f32.gmra.mxu0 %v3082
  %v3140 = vpop.f32.mrf.mxu0
  %v3141 = vadd.f32 0.0, %v3140
  %3142 = vdwg.mxu0
  %v3143 = vmax.f32 %v3105, 0.0
  %v3144 = vmax.f32 %v3108, 0.0
  %v3145 = vmax.f32 %v3111, 0.0
  %v3146 = vmax.f32 %v3114, 0.0
  %v3147 = vmax.f32 %v3117, 0.0
  %v3148 = vmax.f32 %v3120, 0.0
  %v3149 = vmax.f32 %v3123, 0.0
  %v3150 = vmax.f32 %v3126, 0.0
  %v3151 = vmax.f32 %v3129, 0.0
  %v3152 = vmax.f32 %v3132, 0.0
  %v3153 = vmax.f32 %v3135, 0.0
  %v3154 = vmax.f32 %v3138, 0.0
  %v3155 = vmax.f32 %v3141, 0.0
  %v3156 = vsel %vm1383, %v3143, 0.0
  %3157 = vadd.xlane.f32.xlu0 %v3156
  %v3158 = vpop.xlane.xlu0 %3157
  %v3159 = vsel %vm1383, %v3144, 0.0
  %3160 = vadd.xlane.f32.xlu0 %v3159
  %v3161 = vpop.xlane.xlu0 %3160
  %v3162 = vsel %vm1383, %v3145, 0.0
  %3163 = vadd.xlane.f32.xlu0 %v3162
  %v3164 = vpop.xlane.xlu0 %3163
  %v3165 = vsel %vm1383, %v3146, 0.0
  %3166 = vadd.xlane.f32.xlu0 %v3165
  %v3167 = vpop.xlane.xlu0 %3166
  %v3168 = vsel %vm1383, %v3147, 0.0
  %3169 = vadd.xlane.f32.xlu0 %v3168
  %v3170 = vpop.xlane.xlu0 %3169
  %v3171 = vsel %vm1383, %v3148, 0.0
  %3172 = vadd.xlane.f32.xlu0 %v3171
  %v3173 = vpop.xlane.xlu0 %3172
  %v3174 = vsel %vm1383, %v3149, 0.0
  %3175 = vadd.xlane.f32.xlu0 %v3174
  %v3176 = vpop.xlane.xlu0 %3175
  %v3177 = vsel %vm1383, %v3150, 0.0
  %3178 = vadd.xlane.f32.xlu0 %v3177
  %v3179 = vpop.xlane.xlu0 %3178
  %v3180 = vsel %vm1383, %v3151, 0.0
  %3181 = vadd.xlane.f32.xlu0 %v3180
  %v3182 = vpop.xlane.xlu0 %3181
  %v3183 = vsel %vm1383, %v3152, 0.0
  %3184 = vadd.xlane.f32.xlu0 %v3183
  %v3185 = vpop.xlane.xlu0 %3184
  %v3186 = vsel %vm1383, %v3153, 0.0
  %3187 = vadd.xlane.f32.xlu0 %v3186
  %v3188 = vpop.xlane.xlu0 %3187
  %v3189 = vsel %vm1383, %v3154, 0.0
  %3190 = vadd.xlane.f32.xlu0 %v3189
  %v3191 = vpop.xlane.xlu0 %3190
  %v3192 = vsel %vm1383, %v3155, 0.0
  %3193 = vadd.xlane.f32.xlu0 %v3192
  %v3194 = vpop.xlane.xlu0 %3193
  %v3195 = vrot.slane %v3158, 4
  %v3196 = vadd.f32 %v3158, %v3195
  %v3197 = vrot.slane %v3196, 2
  %v3198 = vadd.f32 %v3196, %v3197
  %v3199 = vrot.slane %v3198, 1
  %v3200 = vadd.f32 %v3198, %v3199
  %v3201 = vrot.slane %v3161, 4
  %v3202 = vadd.f32 %v3161, %v3201
  %v3203 = vrot.slane %v3202, 2
  %v3204 = vadd.f32 %v3202, %v3203
  %v3205 = vrot.slane %v3204, 1
  %v3206 = vadd.f32 %v3204, %v3205
  %v3207 = vrot.slane %v3164, 4
  %v3208 = vadd.f32 %v3164, %v3207
  %v3209 = vrot.slane %v3208, 2
  %v3210 = vadd.f32 %v3208, %v3209
  %v3211 = vrot.slane %v3210, 1
  %v3212 = vadd.f32 %v3210, %v3211
  %v3213 = vrot.slane %v3167, 4
  %v3214 = vadd.f32 %v3167, %v3213
  %v3215 = vrot.slane %v3214, 2
  %v3216 = vadd.f32 %v3214, %v3215
  %v3217 = vrot.slane %v3216, 1
  %v3218 = vadd.f32 %v3216, %v3217
  %v3219 = vrot.slane %v3170, 4
  %v3220 = vadd.f32 %v3170, %v3219
  %v3221 = vrot.slane %v3220, 2
  %v3222 = vadd.f32 %v3220, %v3221
  %v3223 = vrot.slane %v3222, 1
  %v3224 = vadd.f32 %v3222, %v3223
  %v3225 = vrot.slane %v3173, 4
  %v3226 = vadd.f32 %v3173, %v3225
  %v3227 = vrot.slane %v3226, 2
  %v3228 = vadd.f32 %v3226, %v3227
  %v3229 = vrot.slane %v3228, 1
  %v3230 = vadd.f32 %v3228, %v3229
  %v3231 = vrot.slane %v3176, 4
  %v3232 = vadd.f32 %v3176, %v3231
  %v3233 = vrot.slane %v3232, 2
  %v3234 = vadd.f32 %v3232, %v3233
  %v3235 = vrot.slane %v3234, 1
  %v3236 = vadd.f32 %v3234, %v3235
  %v3237 = vrot.slane %v3179, 4
  %v3238 = vadd.f32 %v3179, %v3237
  %v3239 = vrot.slane %v3238, 2
  %v3240 = vadd.f32 %v3238, %v3239
  %v3241 = vrot.slane %v3240, 1
  %v3242 = vadd.f32 %v3240, %v3241
  %v3243 = vrot.slane %v3182, 4
  %v3244 = vadd.f32 %v3182, %v3243
  %v3245 = vrot.slane %v3244, 2
  %v3246 = vadd.f32 %v3244, %v3245
  %v3247 = vrot.slane %v3246, 1
  %v3248 = vadd.f32 %v3246, %v3247
  %v3249 = vrot.slane %v3185, 4
  %v3250 = vadd.f32 %v3185, %v3249
  %v3251 = vrot.slane %v3250, 2
  %v3252 = vadd.f32 %v3250, %v3251
  %v3253 = vrot.slane %v3252, 1
  %v3254 = vadd.f32 %v3252, %v3253
  %v3255 = vrot.slane %v3188, 4
  %v3256 = vadd.f32 %v3188, %v3255
  %v3257 = vrot.slane %v3256, 2
  %v3258 = vadd.f32 %v3256, %v3257
  %v3259 = vrot.slane %v3258, 1
  %v3260 = vadd.f32 %v3258, %v3259
  %v3261 = vrot.slane %v3191, 4
  %v3262 = vadd.f32 %v3191, %v3261
  %v3263 = vrot.slane %v3262, 2
  %v3264 = vadd.f32 %v3262, %v3263
  %v3265 = vrot.slane %v3264, 1
  %v3266 = vadd.f32 %v3264, %v3265
  %v3267 = vrot.slane %v3194, 4
  %v3268 = vadd.f32 %v3194, %v3267
  %v3269 = vrot.slane %v3268, 2
  %v3270 = vadd.f32 %v3268, %v3269
  %v3271 = vrot.slane %v3270, 1
  %v3272 = vadd.f32 %v3270, %v3271
  %v3273 = vmul.f32 %v3143, %v3143
  %v3274 = vmul.f32 %v3144, %v3144
  %v3275 = vmul.f32 %v3145, %v3145
  %v3276 = vmul.f32 %v3146, %v3146
  %v3277 = vmul.f32 %v3147, %v3147
  %v3278 = vmul.f32 %v3148, %v3148
  %v3279 = vmul.f32 %v3149, %v3149
  %v3280 = vmul.f32 %v3150, %v3150
  %v3281 = vmul.f32 %v3151, %v3151
  %v3282 = vmul.f32 %v3152, %v3152
  %v3283 = vmul.f32 %v3153, %v3153
  %v3284 = vmul.f32 %v3154, %v3154
  %v3285 = vmul.f32 %v3155, %v3155
  %v3286 = vsel %vm1383, %v3273, 0.0
  %3287 = vadd.xlane.f32.xlu0 %v3286
  %v3288 = vpop.xlane.xlu0 %3287
  %v3289 = vsel %vm1383, %v3274, 0.0
  %3290 = vadd.xlane.f32.xlu0 %v3289
  %v3291 = vpop.xlane.xlu0 %3290
  %v3292 = vsel %vm1383, %v3275, 0.0
  %3293 = vadd.xlane.f32.xlu0 %v3292
  %v3294 = vpop.xlane.xlu0 %3293
  %v3295 = vsel %vm1383, %v3276, 0.0
  %3296 = vadd.xlane.f32.xlu0 %v3295
  %v3297 = vpop.xlane.xlu0 %3296
  %v3298 = vsel %vm1383, %v3277, 0.0
  %3299 = vadd.xlane.f32.xlu0 %v3298
  %v3300 = vpop.xlane.xlu0 %3299
  %v3301 = vsel %vm1383, %v3278, 0.0
  %3302 = vadd.xlane.f32.xlu0 %v3301
  %v3303 = vpop.xlane.xlu0 %3302
  %v3304 = vsel %vm1383, %v3279, 0.0
  %3305 = vadd.xlane.f32.xlu0 %v3304
  %v3306 = vpop.xlane.xlu0 %3305
  %v3307 = vsel %vm1383, %v3280, 0.0
  %3308 = vadd.xlane.f32.xlu0 %v3307
  %v3309 = vpop.xlane.xlu0 %3308
  %v3310 = vsel %vm1383, %v3281, 0.0
  %3311 = vadd.xlane.f32.xlu0 %v3310
  %v3312 = vpop.xlane.xlu0 %3311
  %v3313 = vsel %vm1383, %v3282, 0.0
  %3314 = vadd.xlane.f32.xlu0 %v3313
  %v3315 = vpop.xlane.xlu0 %3314
  %v3316 = vsel %vm1383, %v3283, 0.0
  %3317 = vadd.xlane.f32.xlu0 %v3316
  %v3318 = vpop.xlane.xlu0 %3317
  %v3319 = vsel %vm1383, %v3284, 0.0
  %3320 = vadd.xlane.f32.xlu0 %v3319
  %v3321 = vpop.xlane.xlu0 %3320
  %v3322 = vsel %vm1383, %v3285, 0.0
  %3323 = vadd.xlane.f32.xlu0 %v3322
  %v3324 = vpop.xlane.xlu0 %3323
  %v3325 = vrot.slane %v3288, 4
  %v3326 = vadd.f32 %v3288, %v3325
  %v3327 = vrot.slane %v3326, 2
  %v3328 = vadd.f32 %v3326, %v3327
  %v3329 = vrot.slane %v3328, 1
  %v3330 = vadd.f32 %v3328, %v3329
  %v3331 = vrot.slane %v3291, 4
  %v3332 = vadd.f32 %v3291, %v3331
  %v3333 = vrot.slane %v3332, 2
  %v3334 = vadd.f32 %v3332, %v3333
  %v3335 = vrot.slane %v3334, 1
  %v3336 = vadd.f32 %v3334, %v3335
  %v3337 = vrot.slane %v3294, 4
  %v3338 = vadd.f32 %v3294, %v3337
  %v3339 = vrot.slane %v3338, 2
  %v3340 = vadd.f32 %v3338, %v3339
  %v3341 = vrot.slane %v3340, 1
  %v3342 = vadd.f32 %v3340, %v3341
  %v3343 = vrot.slane %v3297, 4
  %v3344 = vadd.f32 %v3297, %v3343
  %v3345 = vrot.slane %v3344, 2
  %v3346 = vadd.f32 %v3344, %v3345
  %v3347 = vrot.slane %v3346, 1
  %v3348 = vadd.f32 %v3346, %v3347
  %v3349 = vrot.slane %v3300, 4
  %v3350 = vadd.f32 %v3300, %v3349
  %v3351 = vrot.slane %v3350, 2
  %v3352 = vadd.f32 %v3350, %v3351
  %v3353 = vrot.slane %v3352, 1
  %v3354 = vadd.f32 %v3352, %v3353
  %v3355 = vrot.slane %v3303, 4
  %v3356 = vadd.f32 %v3303, %v3355
  %v3357 = vrot.slane %v3356, 2
  %v3358 = vadd.f32 %v3356, %v3357
  %v3359 = vrot.slane %v3358, 1
  %v3360 = vadd.f32 %v3358, %v3359
  %v3361 = vrot.slane %v3306, 4
  %v3362 = vadd.f32 %v3306, %v3361
  %v3363 = vrot.slane %v3362, 2
  %v3364 = vadd.f32 %v3362, %v3363
  %v3365 = vrot.slane %v3364, 1
  %v3366 = vadd.f32 %v3364, %v3365
  %v3367 = vrot.slane %v3309, 4
  %v3368 = vadd.f32 %v3309, %v3367
  %v3369 = vrot.slane %v3368, 2
  %v3370 = vadd.f32 %v3368, %v3369
  %v3371 = vrot.slane %v3370, 1
  %v3372 = vadd.f32 %v3370, %v3371
  %v3373 = vrot.slane %v3312, 4
  %v3374 = vadd.f32 %v3312, %v3373
  %v3375 = vrot.slane %v3374, 2
  %v3376 = vadd.f32 %v3374, %v3375
  %v3377 = vrot.slane %v3376, 1
  %v3378 = vadd.f32 %v3376, %v3377
  %v3379 = vrot.slane %v3315, 4
  %v3380 = vadd.f32 %v3315, %v3379
  %v3381 = vrot.slane %v3380, 2
  %v3382 = vadd.f32 %v3380, %v3381
  %v3383 = vrot.slane %v3382, 1
  %v3384 = vadd.f32 %v3382, %v3383
  %v3385 = vrot.slane %v3318, 4
  %v3386 = vadd.f32 %v3318, %v3385
  %v3387 = vrot.slane %v3386, 2
  %v3388 = vadd.f32 %v3386, %v3387
  %v3389 = vrot.slane %v3388, 1
  %v3390 = vadd.f32 %v3388, %v3389
  %v3391 = vrot.slane %v3321, 4
  %v3392 = vadd.f32 %v3321, %v3391
  %v3393 = vrot.slane %v3392, 2
  %v3394 = vadd.f32 %v3392, %v3393
  %v3395 = vrot.slane %v3394, 1
  %v3396 = vadd.f32 %v3394, %v3395
  %v3397 = vrot.slane %v3324, 4
  %v3398 = vadd.f32 %v3324, %v3397
  %v3399 = vrot.slane %v3398, 2
  %v3400 = vadd.f32 %v3398, %v3399
  %v3401 = vrot.slane %v3400, 1
  %v3402 = vadd.f32 %v3400, %v3401
  %v3403 = vmul.f32 %v3200, 0.001953125
  %v3404 = vmul.f32 %v3206, 0.001953125
  %v3405 = vmul.f32 %v3212, 0.001953125
  %v3406 = vmul.f32 %v3218, 0.001953125
  %v3407 = vmul.f32 %v3224, 0.001953125
  %v3408 = vmul.f32 %v3230, 0.001953125
  %v3409 = vmul.f32 %v3236, 0.001953125
  %v3410 = vmul.f32 %v3242, 0.001953125
  %v3411 = vmul.f32 %v3248, 0.001953125
  %v3412 = vmul.f32 %v3254, 0.001953125
  %v3413 = vmul.f32 %v3260, 0.001953125
  %v3414 = vmul.f32 %v3266, 0.001953125
  %v3415 = vmul.f32 %v3272, 0.001953125
  %v3416 = vmul.f32 %v3330, 0.001953125
  %v3417 = vmul.f32 %v3336, 0.001953125
  %v3418 = vmul.f32 %v3342, 0.001953125
  %v3419 = vmul.f32 %v3348, 0.001953125
  %v3420 = vmul.f32 %v3354, 0.001953125
  %v3421 = vmul.f32 %v3360, 0.001953125
  %v3422 = vmul.f32 %v3366, 0.001953125
  %v3423 = vmul.f32 %v3372, 0.001953125
  %v3424 = vmul.f32 %v3378, 0.001953125
  %v3425 = vmul.f32 %v3384, 0.001953125
  %v3426 = vmul.f32 %v3390, 0.001953125
  %v3427 = vmul.f32 %v3396, 0.001953125
  %v3428 = vmul.f32 %v3402, 0.001953125
  %v3429 = vmul.f32 %v3403, %v3403
  %v3430 = vmul.f32 %v3404, %v3404
  %v3431 = vmul.f32 %v3405, %v3405
  %v3432 = vmul.f32 %v3406, %v3406
  %v3433 = vmul.f32 %v3407, %v3407
  %v3434 = vmul.f32 %v3408, %v3408
  %v3435 = vmul.f32 %v3409, %v3409
  %v3436 = vmul.f32 %v3410, %v3410
  %v3437 = vmul.f32 %v3411, %v3411
  %v3438 = vmul.f32 %v3412, %v3412
  %v3439 = vmul.f32 %v3413, %v3413
  %v3440 = vmul.f32 %v3414, %v3414
  %v3441 = vmul.f32 %v3415, %v3415
  %v3442 = vsub.f32 %v3416, %v3429
  %v3443 = vsub.f32 %v3417, %v3430
  %v3444 = vsub.f32 %v3418, %v3431
  %v3445 = vsub.f32 %v3419, %v3432
  %v3446 = vsub.f32 %v3420, %v3433
  %v3447 = vsub.f32 %v3421, %v3434
  %v3448 = vsub.f32 %v3422, %v3435
  %v3449 = vsub.f32 %v3423, %v3436
  %v3450 = vsub.f32 %v3424, %v3437
  %v3451 = vsub.f32 %v3425, %v3438
  %v3452 = vsub.f32 %v3426, %v3439
  %v3453 = vsub.f32 %v3427, %v3440
  %v3454 = vsub.f32 %v3428, %v3441
  %v3455 = vsub.f32 %v3143, %v3403
  %v3456 = vsub.f32 %v3144, %v3404
  %v3457 = vsub.f32 %v3145, %v3405
  %v3458 = vsub.f32 %v3146, %v3406
  %v3459 = vsub.f32 %v3147, %v3407
  %v3460 = vsub.f32 %v3148, %v3408
  %v3461 = vsub.f32 %v3149, %v3409
  %v3462 = vsub.f32 %v3150, %v3410
  %v3463 = vsub.f32 %v3151, %v3411
  %v3464 = vsub.f32 %v3152, %v3412
  %v3465 = vsub.f32 %v3153, %v3413
  %v3466 = vsub.f32 %v3154, %v3414
  %v3467 = vsub.f32 %v3155, %v3415
  %v3468 = vadd.f32 %v3442, 1e-05
  %v3469 = vadd.f32 %v3443, 1e-05
  %v3470 = vadd.f32 %v3444, 1e-05
  %v3471 = vadd.f32 %v3445, 1e-05
  %v3472 = vadd.f32 %v3446, 1e-05
  %v3473 = vadd.f32 %v3447, 1e-05
  %v3474 = vadd.f32 %v3448, 1e-05
  %v3475 = vadd.f32 %v3449, 1e-05
  %v3476 = vadd.f32 %v3450, 1e-05
  %v3477 = vadd.f32 %v3451, 1e-05
  %v3478 = vadd.f32 %v3452, 1e-05
  %v3479 = vadd.f32 %v3453, 1e-05
  %v3480 = vadd.f32 %v3454, 1e-05
  %v3481 = vrsqrt.pop %v3468
  %v3482 = vmul.f32 %v3481, %v3468
  %v3483 = vmul.f32 %v3482, %v3481
  %v3484 = vmul.f32 0.5, %v3483
  %v3485 = vsub.f32 1.5, %v3484
  %v3486 = vmul.f32 %v3481, %v3485
  %vm3487 = vweird.f32 %v3468
  %vm3488 = vweird.f32 %v3481
  %vm3489 = vmor %vm3487, %vm3488
  %v3490 = vsel %vm3489, %v3481, %v3486
  %v3491 = vrsqrt.pop %v3469
  %v3492 = vmul.f32 %v3491, %v3469
  %v3493 = vmul.f32 %v3492, %v3491
  %v3494 = vmul.f32 0.5, %v3493
  %v3495 = vsub.f32 1.5, %v3494
  %v3496 = vmul.f32 %v3491, %v3495
  %vm3497 = vweird.f32 %v3469
  %vm3498 = vweird.f32 %v3491
  %vm3499 = vmor %vm3497, %vm3498
  %v3500 = vsel %vm3499, %v3491, %v3496
  %v3501 = vrsqrt.pop %v3470
  %v3502 = vmul.f32 %v3501, %v3470
  %v3503 = vmul.f32 %v3502, %v3501
  %v3504 = vmul.f32 0.5, %v3503
  %v3505 = vsub.f32 1.5, %v3504
  %v3506 = vmul.f32 %v3501, %v3505
  %vm3507 = vweird.f32 %v3470
  %vm3508 = vweird.f32 %v3501
  %vm3509 = vmor %vm3507, %vm3508
  %v3510 = vsel %vm3509, %v3501, %v3506
  %v3511 = vrsqrt.pop %v3471
  %v3512 = vmul.f32 %v3511, %v3471
  %v3513 = vmul.f32 %v3512, %v3511
  %v3514 = vmul.f32 0.5, %v3513
  %v3515 = vsub.f32 1.5, %v3514
  %v3516 = vmul.f32 %v3511, %v3515
  %vm3517 = vweird.f32 %v3471
  %vm3518 = vweird.f32 %v3511
  %vm3519 = vmor %vm3517, %vm3518
  %v3520 = vsel %vm3519, %v3511, %v3516
  %v3521 = vrsqrt.pop %v3472
  %v3522 = vmul.f32 %v3521, %v3472
  %v3523 = vmul.f32 %v3522, %v3521
  %v3524 = vmul.f32 0.5, %v3523
  %v3525 = vsub.f32 1.5, %v3524
  %v3526 = vmul.f32 %v3521, %v3525
  %vm3527 = vweird.f32 %v3472
  %vm3528 = vweird.f32 %v3521
  %vm3529 = vmor %vm3527, %vm3528
  %v3530 = vsel %vm3529, %v3521, %v3526
  %v3531 = vrsqrt.pop %v3473
  %v3532 = vmul.f32 %v3531, %v3473
  %v3533 = vmul.f32 %v3532, %v3531
  %v3534 = vmul.f32 0.5, %v3533
  %v3535 = vsub.f32 1.5, %v3534
  %v3536 = vmul.f32 %v3531, %v3535
  %vm3537 = vweird.f32 %v3473
  %vm3538 = vweird.f32 %v3531
  %vm3539 = vmor %vm3537, %vm3538
  %v3540 = vsel %vm3539, %v3531, %v3536
  %v3541 = vrsqrt.pop %v3474
  %v3542 = vmul.f32 %v3541, %v3474
  %v3543 = vmul.f32 %v3542, %v3541
  %v3544 = vmul.f32 0.5, %v3543
  %v3545 = vsub.f32 1.5, %v3544
  %v3546 = vmul.f32 %v3541, %v3545
  %vm3547 = vweird.f32 %v3474
  %vm3548 = vweird.f32 %v3541
  %vm3549 = vmor %vm3547, %vm3548
  %v3550 = vsel %vm3549, %v3541, %v3546
  %v3551 = vrsqrt.pop %v3475
  %v3552 = vmul.f32 %v3551, %v3475
  %v3553 = vmul.f32 %v3552, %v3551
  %v3554 = vmul.f32 0.5, %v3553
  %v3555 = vsub.f32 1.5, %v3554
  %v3556 = vmul.f32 %v3551, %v3555
  %vm3557 = vweird.f32 %v3475
  %vm3558 = vweird.f32 %v3551
  %vm3559 = vmor %vm3557, %vm3558
  %v3560 = vsel %vm3559, %v3551, %v3556
  %v3561 = vrsqrt.pop %v3476
  %v3562 = vmul.f32 %v3561, %v3476
  %v3563 = vmul.f32 %v3562, %v3561
  %v3564 = vmul.f32 0.5, %v3563
  %v3565 = vsub.f32 1.5, %v3564
  %v3566 = vmul.f32 %v3561, %v3565
  %vm3567 = vweird.f32 %v3476
  %vm3568 = vweird.f32 %v3561
  %vm3569 = vmor %vm3567, %vm3568
  %v3570 = vsel %vm3569, %v3561, %v3566
  %v3571 = vrsqrt.pop %v3477
  %v3572 = vmul.f32 %v3571, %v3477
  %v3573 = vmul.f32 %v3572, %v3571
  %v3574 = vmul.f32 0.5, %v3573
  %v3575 = vsub.f32 1.5, %v3574
  %v3576 = vmul.f32 %v3571, %v3575
  %vm3577 = vweird.f32 %v3477
  %vm3578 = vweird.f32 %v3571
  %vm3579 = vmor %vm3577, %vm3578
  %v3580 = vsel %vm3579, %v3571, %v3576
  %v3581 = vrsqrt.pop %v3478
  %v3582 = vmul.f32 %v3581, %v3478
  %v3583 = vmul.f32 %v3582, %v3581
  %v3584 = vmul.f32 0.5, %v3583
  %v3585 = vsub.f32 1.5, %v3584
  %v3586 = vmul.f32 %v3581, %v3585
  %vm3587 = vweird.f32 %v3478
  %vm3588 = vweird.f32 %v3581
  %vm3589 = vmor %vm3587, %vm3588
  %v3590 = vsel %vm3589, %v3581, %v3586
  %v3591 = vrsqrt.pop %v3479
  %v3592 = vmul.f32 %v3591, %v3479
  %v3593 = vmul.f32 %v3592, %v3591
  %v3594 = vmul.f32 0.5, %v3593
  %v3595 = vsub.f32 1.5, %v3594
  %v3596 = vmul.f32 %v3591, %v3595
  %vm3597 = vweird.f32 %v3479
  %vm3598 = vweird.f32 %v3591
  %vm3599 = vmor %vm3597, %vm3598
  %v3600 = vsel %vm3599, %v3591, %v3596
  %v3601 = vrsqrt.pop %v3480
  %v3602 = vmul.f32 %v3601, %v3480
  %v3603 = vmul.f32 %v3602, %v3601
  %v3604 = vmul.f32 0.5, %v3603
  %v3605 = vsub.f32 1.5, %v3604
  %v3606 = vmul.f32 %v3601, %v3605
  %vm3607 = vweird.f32 %v3480
  %vm3608 = vweird.f32 %v3601
  %vm3609 = vmor %vm3607, %vm3608
  %v3610 = vsel %vm3609, %v3601, %v3606
  %v3611 = vmul.f32 %v3455, %v3490
  %v3612 = vmul.f32 %v3456, %v3500
  %v3613 = vmul.f32 %v3457, %v3510
  %v3614 = vmul.f32 %v3458, %v3520
  %v3615 = vmul.f32 %v3459, %v3530
  %v3616 = vmul.f32 %v3460, %v3540
  %v3617 = vmul.f32 %v3461, %v3550
  %v3618 = vmul.f32 %v3462, %v3560
  %v3619 = vmul.f32 %v3463, %v3570
  %v3620 = vmul.f32 %v3464, %v3580
  %v3621 = vmul.f32 %v3465, %v3590
  %v3622 = vmul.f32 %v3466, %v3600
  %v3623 = vmul.f32 %v3467, %v3610
  %3637 = vrot.lane.b32.xlu0 %v3611, 64
  %v3638 = vpop.permute.xlu0 %3637
  %3639 = vrot.lane.b32.xlu0 %v3612, 64
  %v3640 = vpop.permute.xlu0 %3639
  %3641 = vrot.lane.b32.xlu0 %v3613, 64
  %v3642 = vpop.permute.xlu0 %3641
  %3643 = vrot.lane.b32.xlu0 %v3614, 64
  %v3644 = vpop.permute.xlu0 %3643
  %3645 = vrot.lane.b32.xlu0 %v3615, 64
  %v3646 = vpop.permute.xlu0 %3645
  %3647 = vrot.lane.b32.xlu0 %v3616, 64
  %v3648 = vpop.permute.xlu0 %3647
  %3649 = vrot.lane.b32.xlu0 %v3617, 64
  %v3650 = vpop.permute.xlu0 %3649
  %3651 = vrot.lane.b32.xlu0 %v3618, 64
  %v3652 = vpop.permute.xlu0 %3651
  %3653 = vrot.lane.b32.xlu0 %v3619, 64
  %v3654 = vpop.permute.xlu0 %3653
  %3655 = vrot.lane.b32.xlu0 %v3620, 64
  %v3656 = vpop.permute.xlu0 %3655
  %3657 = vrot.lane.b32.xlu0 %v3621, 64
  %v3658 = vpop.permute.xlu0 %3657
  %3659 = vrot.lane.b32.xlu0 %v3622, 64
  %v3660 = vpop.permute.xlu0 %3659
  %3661 = vrot.lane.b32.xlu0 %v3623, 64
  %v3662 = vpop.permute.xlu0 %3661
  %v3676 = vsel %vm1383, %v1839, %v3638
  %v3677 = vsel %vm1383, %v1840, %v3640
  %v3678 = vsel %vm1383, %v1841, %v3642
  %v3679 = vsel %vm1383, %v1842, %v3644
  %v3680 = vsel %vm1383, %v1843, %v3646
  %v3681 = vsel %vm1383, %v1844, %v3648
  %v3682 = vsel %vm1383, %v1845, %v3650
  %v3683 = vsel %vm1383, %v1846, %v3652
  %v3684 = vsel %vm1383, %v1847, %v3654
  %v3685 = vsel %vm1383, %v1848, %v3656
  %v3686 = vsel %vm1383, %v1849, %v3658
  %v3687 = vsel %vm1383, %v1850, %v3660
  %v3688 = vsel %vm1383, %v1851, %v3662
  %v3689 = vmul.f32 %v3676, %v3676
  %v3690 = vmul.f32 %v3677, %v3677
  %v3691 = vmul.f32 %v3678, %v3678
  %v3692 = vmul.f32 %v3679, %v3679
  %v3693 = vmul.f32 %v3680, %v3680
  %v3694 = vmul.f32 %v3681, %v3681
  %v3695 = vmul.f32 %v3682, %v3682
  %v3696 = vmul.f32 %v3683, %v3683
  %v3697 = vmul.f32 %v3684, %v3684
  %v3698 = vmul.f32 %v3685, %v3685
  %v3699 = vmul.f32 %v3686, %v3686
  %v3700 = vmul.f32 %v3687, %v3687
  %v3701 = vmul.f32 %v3688, %v3688
  %v3702 = vadd.f32 %v3689, %v3690
  %v3703 = vadd.f32 %v3702, %v3691
  %v3704 = vadd.f32 %v3703, %v3692
  %v3705 = vadd.f32 %v3704, %v3693
  %v3706 = vadd.f32 %v3705, %v3694
  %v3707 = vadd.f32 %v3706, %v3695
  %v3708 = vadd.f32 %v3707, %v3696
  %v3709 = vadd.f32 %v3708, %v3697
  %v3710 = vadd.f32 %v3709, %v3698
  %v3711 = vadd.f32 %v3710, %v3699
  %v3712 = vadd.f32 %v3711, %v3700
  %v3713 = vadd.f32 %v3712, %v3701
  %v3714 = vmax.f32 %v3713, 1e-24
  %v3715 = vrsqrt.pop %v3714
  %v3716 = vmul.f32 %v3715, %v3714
  %v3717 = vmul.f32 %v3716, %v3715
  %v3718 = vmul.f32 0.5, %v3717
  %v3719 = vsub.f32 1.5, %v3718
  %v3720 = vmul.f32 %v3715, %v3719
  %vm3721 = vweird.f32 %v3714
  %vm3722 = vweird.f32 %v3715
  %vm3723 = vmor %vm3721, %vm3722
  %v3724 = vsel %vm3723, %v3715, %v3720
  %v3725 = vmul.f32 %v3676, %v3724
  %v3726 = vmul.f32 %v3677, %v3724
  %v3727 = vmul.f32 %v3678, %v3724
  %v3728 = vmul.f32 %v3679, %v3724
  %v3729 = vmul.f32 %v3680, %v3724
  %v3730 = vmul.f32 %v3681, %v3724
  %v3731 = vmul.f32 %v3682, %v3724
  %v3732 = vmul.f32 %v3683, %v3724
  %v3733 = vmul.f32 %v3684, %v3724
  %v3734 = vmul.f32 %v3685, %v3724
  %v3735 = vmul.f32 %v3686, %v3724
  %v3736 = vmul.f32 %v3687, %v3724
  %v3737 = vmul.f32 %v3688, %v3724
  %3738 = vst [vmem:[%s7] sm:$0xff] %v3725
  %3739 = vst [vmem:[%s7 + $0x8] sm:$0xff] %v3726
  %3740 = vst [vmem:[%s7 + $0x10] sm:$0xff] %v3727
  %3741 = vst [vmem:[%s7 + $0x18] sm:$0xff] %v3728
  %3742 = vst [vmem:[%s7 + $0x20] sm:$0xff] %v3729
  %3743 = vst [vmem:[%s7 + $0x28] sm:$0xff] %v3730
  %3744 = vst [vmem:[%s7 + $0x30] sm:$0xff] %v3731
  %3745 = vst [vmem:[%s7 + $0x38] sm:$0xff] %v3732
  %3746 = vst [vmem:[%s7 + $0x40] sm:$0xff] %v3733
  %3747 = vst [vmem:[%s7 + $0x48] sm:$0xff] %v3734
  %3748 = vst [vmem:[%s7 + $0x50] sm:$0xff] %v3735
  %3749 = vst [vmem:[%s7 + $0x58] sm:$0xff] %v3736
  %3750 = vst [vmem:[%s7 + $0x60] sm:$0xff] %v3737
  // Predicated region
  $region30: #{icl_net_forward.1} parent=0 // pred_check
    _
  $region31: #{icl_net_forward.1} parent=0 // pred_check_branch
    %3752 = sbr.rel (0) target = $region33
  $region32: #{icl_net_forward.1} parent=0 // pred_region
    _
  $region33: #{icl_net_forward.1} parent=0 // pred_fallthru
    _
  // Predicated region
  $region34: #{icl_net_forward.1} parent=0 // pred_check
    _
  $region35: #{icl_net_forward.1} parent=0 // pred_check_branch
    %3754 = sbr.rel (0) target = $region37
  $region36: #{icl_net_forward.1} parent=0 // pred_region
    _
  $region37: #{icl_net_forward.1} parent=0 // pred_fallthru
    _

</llo_original>
